<compile_context>
chip_gen: v7x
topology: tpu7x:2x2x1
jax: 0.10.0
libtpu: 0.0.40
codegen_flags: <defaults>
</compile_context>

<pallas_src>
import jax
import jax.numpy as jnp
import numpy as np
from jax.experimental import pallas as pl
from jax.experimental.pallas import tpu as pltpu

FEATURE_DIM = 17 * 4   # 68
HIDDEN_DIM = 128
HP = 128               # lane-dense head width


def _bilstm_head_kernel(xf_ref,     # (TC*B_pad, D_pad) bf16: forward time chunk i, time-major rows
                        xb_ref,     # (TC*B_pad, D_pad) bf16: chunk nc-1-i (backward direction source)
                        wif_ref,    # (D_pad, 4H) bf16  forward  input weights, gate order [i f g o]
                        wib_ref,    # (D_pad, 4H) bf16  backward input weights
                        whh_ref,    # (2H, 8H)   bf16  block-diag recurrent weights [fwd 4H | bwd 4H]
                        bf_ref,     # (1, 4H)    f32   b_ih_f + b_hh_f
                        bb_ref,     # (1, 4H)    f32   b_ih_b + b_hh_b
                        w1_ref,     # (2H, 128)  bf16  head layer 1 (32 real columns)
                        b1_ref,     # (1, 128)   f32
                        w2_ref,     # (128, 128) bf16  head layer 2 (32 real rows, 1 real column)
                        b2_ref,     # (1, 128)   f32
                        out_ref,    # (B_pad, 128) f32, logit in column 0
                        h_ref,      # scratch (B_pad, 2H) bf16: [h_fwd | h_bwd], persists across grid
                        c_ref):     # scratch (B_pad, 2H) f32:  [c_fwd | c_bwd], persists across grid
    H = whh_ref.shape[0] // 2
    B_pad = out_ref.shape[0]
    TC = xf_ref.shape[0] // B_pad

    @pl.when(pl.program_id(0) == 0)
    def _():
        h_ref[...] = jnp.zeros_like(h_ref)
        c_ref[...] = jnp.zeros_like(c_ref)

    # Input-gate contributions for the whole chunk, both directions: two dense MXU
    # matmuls, f32 accumulation.  (Backward chunk is in forward time order; its
    # within-chunk reversal happens in the per-step slice below.)
    gx_f = jnp.dot(xf_ref[...], wif_ref[...],
                   preferred_element_type=jnp.float32) + bf_ref[...]   # (TC*B_pad, 4H)
    gx_b = jnp.dot(xb_ref[...], wib_ref[...],
                   preferred_element_type=jnp.float32) + bb_ref[...]   # (TC*B_pad, 4H)

    whh = whh_ref[...]                                                 # (2H, 8H) bf16
    h = h_ref[...]                                                     # bf16 carry
    c_f = c_ref[:, 0:H]
    c_b = c_ref[:, H:2 * H]

    # TC is a small static constant (<= time_chunk) -> full unroll per chunk keeps
    # LLO visibility with bounded code size; long sequences just add grid steps.
    for t in range(TC):
        rec = jnp.dot(h, whh, preferred_element_type=jnp.float32)      # (B_pad, 8H)
        gf = rec[:, 0:4 * H] + gx_f[t * B_pad:(t + 1) * B_pad, :]
        gb = rec[:, 4 * H:8 * H] + gx_b[(TC - 1 - t) * B_pad:(TC - t) * B_pad, :]
        # Gate order per direction: [ i | f | g | o ], each H lanes.
        if_f = jax.nn.sigmoid(gf[:, 0:2 * H])      # i_f, f_f grouped
        g_f = jnp.tanh(gf[:, 2 * H:3 * H])
        o_f = jax.nn.sigmoid(gf[:, 3 * H:4 * H])
        if_b = jax.nn.sigmoid(gb[:, 0:2 * H])      # i_b, f_b grouped
        g_b = jnp.tanh(gb[:, 2 * H:3 * H])
        o_b = jax.nn.sigmoid(gb[:, 3 * H:4 * H])
        c_f = if_f[:, H:2 * H] * c_f + if_f[:, 0:H] * g_f
        c_b = if_b[:, H:2 * H] * c_b + if_b[:, 0:H] * g_b
        # bf16 h carry: the only consumers (recurrent matmul, head matmul) take bf16.
        h = jnp.concatenate([o_f * jnp.tanh(c_f), o_b * jnp.tanh(c_b)],
                            axis=1).astype(jnp.bfloat16)

    h_ref[...] = h
    c_ref[:, 0:H] = c_f
    c_ref[:, H:2 * H] = c_b

    @pl.when(pl.program_id(0) == pl.num_programs(0) - 1)
    def _():
        # h already equals torch.cat([h_n[-2], h_n[-1]], dim=1).
        z = jnp.dot(h, w1_ref[...], preferred_element_type=jnp.float32) + b1_ref[...]
        z = jnp.maximum(z, 0.0)
        # Dropout(0.3): identity at inference time.
        y = jnp.dot(z.astype(jnp.bfloat16), w2_ref[...],
                    preferred_element_type=jnp.float32) + b2_ref[...]
        out_ref[...] = y                            # lane-dense (B_pad, 128) store


def init_params(key, input_dim=FEATURE_DIM, hidden_dim=HIDDEN_DIM):
    """Deterministic parameter init matching the PyTorch module's shapes."""
    ks = jax.random.split(key, 12)
    k_lstm = 1.0 / float(np.sqrt(hidden_dim))
    k_l1 = 1.0 / float(np.sqrt(2 * hidden_dim))
    k_l2 = 1.0 / float(np.sqrt(32))

    def u(k, shape, bound):
        return jax.random.uniform(k, shape, jnp.float32, -bound, bound)

    return dict(
        w_ih_f=u(ks[0], (4 * hidden_dim, input_dim), k_lstm),
        w_hh_f=u(ks[1], (4 * hidden_dim, hidden_dim), k_lstm),
        b_ih_f=u(ks[2], (4 * hidden_dim,), k_lstm),
        b_hh_f=u(ks[3], (4 * hidden_dim,), k_lstm),
        w_ih_b=u(ks[4], (4 * hidden_dim, input_dim), k_lstm),
        w_hh_b=u(ks[5], (4 * hidden_dim, hidden_dim), k_lstm),
        b_ih_b=u(ks[6], (4 * hidden_dim,), k_lstm),
        b_hh_b=u(ks[7], (4 * hidden_dim,), k_lstm),
        w1=u(ks[8], (32, 2 * hidden_dim), k_l1),
        b1=u(ks[9], (32,), k_l1),
        w2=u(ks[10], (1, 32), k_l2),
        b2=u(ks[11], (1,), k_l2),
    )


def bilstm_classifier(x, params, *, time_chunk=8):
    """x: (B, T, FEATURE_DIM) float32 -> (B,) float32 (matches .view(-1))."""
    B, T, D = x.shape
    H = params["w_hh_f"].shape[1]
    B_pad = ((B + 7) // 8) * 8                 # sublane-aligned batch
    D_pad = ((D + 127) // 128) * 128           # lane-aligned feature dim

    # Time chunk must divide T exactly (zero-padding time would corrupt the state).
    tc = min(time_chunk, T)
    while T % tc != 0:
        tc -= 1
    nc = T // tc

    # Time-major x, batch padded to sublanes, features padded to lanes, flattened to
    # 2-D in XLA (no in-kernel reshape).  Fed ONCE; the backward direction reads the
    # same slab through a reversed-chunk index_map.
    x_tm = jnp.transpose(x, (1, 0, 2)).astype(jnp.float32)              # (T, B, D)
    x_tm = jnp.pad(x_tm, ((0, 0), (0, B_pad - B), (0, D_pad - D)))
    x_flat = x_tm.reshape(T * B_pad, D_pad).astype(jnp.bfloat16)        # (T*B_pad, D_pad)

    # Per-direction input weights (dense, no zero block): (D_pad, 4H), gate order [i f g o].
    def ih(w):
        return jnp.pad(w.T, ((0, D_pad - D), (0, 0))).astype(jnp.bfloat16)

    w_ih_f = ih(params["w_ih_f"])
    w_ih_b = ih(params["w_ih_b"])

    # Block-diagonal recurrent weights: rows [h_fwd | h_bwd], columns [fwd 4H | bwd 4H].
    zH = jnp.zeros((H, 4 * H), jnp.float32)
    w_hh_blk = jnp.concatenate(
        [jnp.concatenate([params["w_hh_f"].T, zH], axis=1),
         jnp.concatenate([zH, params["w_hh_b"].T], axis=1)], axis=0).astype(jnp.bfloat16)

    b_f = (params["b_ih_f"] + params["b_hh_f"]).reshape(1, 4 * H).astype(jnp.float32)
    b_b = (params["b_ih_b"] + params["b_hh_b"]).reshape(1, 4 * H).astype(jnp.float32)

    # Head weights padded lane-dense, bf16 (native MXU path), f32 biases.
    w1 = jnp.zeros((2 * H, HP), jnp.float32).at[:, :32].set(params["w1"].T).astype(jnp.bfloat16)
    b1 = jnp.zeros((1, HP), jnp.float32).at[:, :32].set(params["b1"])
    w2 = jnp.zeros((HP, HP), jnp.float32).at[:32, :1].set(params["w2"].T).astype(jnp.bfloat16)
    b2 = jnp.zeros((1, HP), jnp.float32).at[:, :1].set(params["b2"])

    args = (x_flat, x_flat, w_ih_f, w_ih_b, w_hh_blk, b_f, b_b, w1, b1, w2, b2)

    rows = tc * B_pad
    x_fwd_spec = pl.BlockSpec((rows, D_pad), lambda i: (i, 0),
                              pipeline_mode=pl.Buffered(2))
    x_bwd_spec = pl.BlockSpec((rows, D_pad), lambda i: (nc - 1 - i, 0),
                              pipeline_mode=pl.Buffered(2))

    def const(shape):
        return pl.BlockSpec(shape, lambda i: tuple(0 for _ in shape))

    grid_spec = pltpu.PrefetchScalarGridSpec(
        num_scalar_prefetch=0,
        grid=(nc,),
        in_specs=[
            x_fwd_spec,
            x_bwd_spec,
            const((D_pad, 4 * H)),
            const((D_pad, 4 * H)),
            const((2 * H, 8 * H)),
            const((1, 4 * H)),
            const((1, 4 * H)),
            const((2 * H, HP)),
            const((1, HP)),
            const((HP, HP)),
            const((1, HP)),
        ],
        out_specs=pl.BlockSpec((B_pad, HP), lambda i: (0, 0)),
        scratch_shapes=[
            pltpu.VMEM((B_pad, 2 * H), jnp.bfloat16),   # h carry (bf16)
            pltpu.VMEM((B_pad, 2 * H), jnp.float32),    # c carry (f32)
        ],
    )

    flops = int(2 * T * B_pad * D_pad * 4 * H * 2        # two dense input matmuls
                + 2 * T * B_pad * 2 * H * 8 * H          # fused recurrence matmuls
                + 2 * B_pad * 2 * H * HP                 # head layer 1
                + 2 * B_pad * HP * HP)                   # head layer 2
    transcendentals = int(T * B_pad * (8 * H + 2 * H))   # gate sigmoid/tanh + tanh(c)
    bytes_accessed = int(2 * x_flat.size * 2             # x read once per direction
                         + sum(int(np.prod(a.shape)) * a.dtype.itemsize for a in args[2:])
                         + B_pad * HP * 4)

    out = pl.pallas_call(
        _bilstm_head_kernel,
        out_shape=jax.ShapeDtypeStruct((B_pad, HP), jnp.float32),
        grid_spec=grid_spec,
        cost_estimate=pl.CostEstimate(flops=flops,
                                      transcendentals=transcendentals,
                                      bytes_accessed=bytes_accessed),
        compiler_params=pltpu.CompilerParams(
            dimension_semantics=("arbitrary",)),        # serial recurrence over time chunks
    )(*args)
    return out[:B, 0]


def _reference_forward(x, params):
    """Pure-JAX reference of the PyTorch forward (eval mode).

    Mirrors the kernel's bf16 rounding of x, the LSTM/head weights and the hidden
    state fed to the matmuls (bf16 x bf16 products are exact in f32; accumulation,
    state and gate math are f32 in both), so the comparison holds at tight tolerance.
    Note the bf16 rounding accumulates per-step drift vs a pure-f32 PyTorch
    reference for long sequences.
    """
    B, T, D = x.shape
    H = params["w_hh_f"].shape[1]

    def rb(a):  # round-trip through bfloat16
        return a.astype(jnp.bfloat16).astype(jnp.float32)

    def run_dir(seq, w_ih, w_hh, b_ih, b_hh):
        w_ih = rb(w_ih)
        w_hh = rb(w_hh)
        b = b_ih + b_hh
        h = jnp.zeros((B, H), jnp.float32)
        c = jnp.zeros((B, H), jnp.float32)
        for t in range(seq.shape[1]):
            g = rb(seq[:, t, :]) @ w_ih.T + b + rb(h) @ w_hh.T
            i = jax.nn.sigmoid(g[:, 0 * H:1 * H])
            f = jax.nn.sigmoid(g[:, 1 * H:2 * H])
            gg = jnp.tanh(g[:, 2 * H:3 * H])
            o = jax.nn.sigmoid(g[:, 3 * H:4 * H])
            c = f * c + i * gg
            h = o * jnp.tanh(c)
        return h

    h_fwd = run_dir(x, params["w_ih_f"], params["w_hh_f"], params["b_ih_f"], params["b_hh_f"])
    h_bwd = run_dir(x[:, ::-1, :], params["w_ih_b"], params["w_hh_b"],
                    params["b_ih_b"], params["b_hh_b"])
    h_cat = jnp.concatenate([h_fwd, h_bwd], axis=1)
    z = jnp.maximum(rb(h_cat) @ rb(params["w1"]).T + params["b1"], 0.0)
    return (rb(z) @ rb(params["w2"]).T + params["b2"]).reshape(-1)


if __name__ == "__main__":
    key = jax.random.PRNGKey(0)
    k_x, k_p = jax.random.split(key)

    B, T = 2, 8
    x = jax.random.normal(k_x, (B, T, FEATURE_DIM), jnp.float32)
    params = init_params(k_p)

    # time_chunk=4 -> a 2-step grid, exercising the persistent h/c scratch carry and
    # the reversed-chunk index_map.
    out = bilstm_classifier(x, params, time_chunk=4)
    out = jax.block_until_ready(out)

    ref = jax.block_until_ready(_reference_forward(x, params))
    assert out.shape == (B,)
    np.testing.assert_allclose(np.asarray(out), np.asarray(ref), rtol=1e-3, atol=1e-3)

    print("KERNEL_OK")
</pallas_src>

<mosaic_0001>
module attributes {stable_mosaic.version = 11 : i64} {
  func.func @_bilstm_head_kernel(%arg0: i32, %arg1: memref<32x128xbf16, #tpu.memory_space<vmem>>, %arg2: memref<32x128xbf16, #tpu.memory_space<vmem>>, %arg3: memref<128x512xbf16, #tpu.memory_space<vmem>>, %arg4: memref<128x512xbf16, #tpu.memory_space<vmem>>, %arg5: memref<256x1024xbf16, #tpu.memory_space<vmem>>, %arg6: memref<1x512xf32, #tpu.memory_space<vmem>>, %arg7: memref<1x512xf32, #tpu.memory_space<vmem>>, %arg8: memref<256x128xbf16, #tpu.memory_space<vmem>>, %arg9: memref<1x128xf32, #tpu.memory_space<vmem>>, %arg10: memref<128x128xbf16, #tpu.memory_space<vmem>>, %arg11: memref<1x128xf32, #tpu.memory_space<vmem>>, %arg12: memref<8x128xf32, #tpu.memory_space<vmem>>, %arg13: memref<8x256xbf16, #tpu.memory_space<vmem>>, %arg14: memref<8x256xf32, #tpu.memory_space<vmem>>) attributes {dimension_semantics = [#tpu.dimension_semantics<arbitrary>], iteration_bounds = array<i64: 2>, scalar_prefetch = 0 : i64, scratch_operands = 2 : i64, tpu.core_type = #tpu.core_type<tc>, window_params = [{pipeline_mode = #tpu.pipeline_mode<double_buffered>, transform_indices = @transform_0, window_bounds = array<i64: 32, 128>}, {pipeline_mode = #tpu.pipeline_mode<double_buffered>, transform_indices = @transform_1, window_bounds = array<i64: 32, 128>}, {pipeline_mode = #tpu.pipeline_mode<synchronous>, transform_indices = @transform_2, window_bounds = array<i64: 128, 512>}, {pipeline_mode = #tpu.pipeline_mode<synchronous>, transform_indices = @transform_3, window_bounds = array<i64: 128, 512>}, {pipeline_mode = #tpu.pipeline_mode<synchronous>, transform_indices = @transform_4, window_bounds = array<i64: 256, 1024>}, {pipeline_mode = #tpu.pipeline_mode<synchronous>, transform_indices = @transform_5, window_bounds = array<i64: 1, 512>}, {pipeline_mode = #tpu.pipeline_mode<synchronous>, transform_indices = @transform_6, window_bounds = array<i64: 1, 512>}, {pipeline_mode = #tpu.pipeline_mode<synchronous>, transform_indices = @transform_7, window_bounds = array<i64: 256, 128>}, {pipeline_mode = #tpu.pipeline_mode<synchronous>, transform_indices = @transform_8, window_bounds = array<i64: 1, 128>}, {pipeline_mode = #tpu.pipeline_mode<synchronous>, transform_indices = @transform_9, window_bounds = array<i64: 128, 128>}, {pipeline_mode = #tpu.pipeline_mode<synchronous>, transform_indices = @transform_10, window_bounds = array<i64: 1, 128>}, {pipeline_mode = #tpu.pipeline_mode<synchronous>, transform_indices = @transform_11, window_bounds = array<i64: 8, 128>}]} {
    %c0_i32 = arith.constant 0 : i32
    %0 = arith.cmpi eq, %arg0, %c0_i32 : i32
    %1 = arith.extui %0 : i1 to i32
    %c0_i32_0 = arith.constant 0 : i32
    %2 = arith.cmpi ne, %1, %c0_i32_0 : i32
    scf.if %2 {
      %cst_47 = arith.constant 0.000000e+00 : bf16
      %229 = vector.broadcast %cst_47 : bf16 to vector<8x256xbf16>
      %c0_48 = arith.constant 0 : index
      %c0_49 = arith.constant 0 : index
      %230 = vector.load %arg13[%c0_48, %c0_49] : memref<8x256xbf16, #tpu.memory_space<vmem>>, vector<8x256xbf16>
      tpu.vector_store %arg13[%c0_48, %c0_49], %229 {strides = array<i32>} : memref<8x256xbf16, #tpu.memory_space<vmem>>, vector<8x256xbf16>,
      %cst_50 = arith.constant 0.000000e+00 : f32
      %231 = vector.broadcast %cst_50 : f32 to vector<8x256xf32>
      %c0_51 = arith.constant 0 : index
      %c0_52 = arith.constant 0 : index
      %232 = vector.load %arg14[%c0_51, %c0_52] : memref<8x256xf32, #tpu.memory_space<vmem>>, vector<8x256xf32>
      tpu.vector_store %arg14[%c0_51, %c0_52], %231 {strides = array<i32>} : memref<8x256xf32, #tpu.memory_space<vmem>>, vector<8x256xf32>,
    } else {
    }
    %c0 = arith.constant 0 : index
    %c0_1 = arith.constant 0 : index
    %3 = vector.load %arg1[%c0, %c0_1] : memref<32x128xbf16, #tpu.memory_space<vmem>>, vector<32x128xbf16>
    %c0_2 = arith.constant 0 : index
    %c0_3 = arith.constant 0 : index
    %4 = vector.load %arg3[%c0_2, %c0_3] : memref<128x512xbf16, #tpu.memory_space<vmem>>, vector<128x512xbf16>
    %cst = arith.constant dense<0.000000e+00> : vector<32x512xf32>
    %5 = tpu.matmul %3, %4, %cst {dimension_numbers = #tpu.dot_dimension_numbers<[1], [0], [0], [1], [0, 0, 1, 1], [], []>} : vector<32x128xbf16>, vector<128x512xbf16>, vector<32x512xf32> -> vector<32x512xf32>
    %c0_4 = arith.constant 0 : index
    %c0_5 = arith.constant 0 : index
    %6 = vector.load %arg6[%c0_4, %c0_5] : memref<1x512xf32, #tpu.memory_space<vmem>>, vector<1x512xf32>
    %7 = vector.broadcast %6 : vector<1x512xf32> to vector<32x512xf32>
    %8 = arith.addf %5, %7 : vector<32x512xf32>
    %c0_6 = arith.constant 0 : index
    %c0_7 = arith.constant 0 : index
    %9 = vector.load %arg2[%c0_6, %c0_7] : memref<32x128xbf16, #tpu.memory_space<vmem>>, vector<32x128xbf16>
    %c0_8 = arith.constant 0 : index
    %c0_9 = arith.constant 0 : index
    %10 = vector.load %arg4[%c0_8, %c0_9] : memref<128x512xbf16, #tpu.memory_space<vmem>>, vector<128x512xbf16>
    %cst_10 = arith.constant dense<0.000000e+00> : vector<32x512xf32>
    %11 = tpu.matmul %9, %10, %cst_10 {dimension_numbers = #tpu.dot_dimension_numbers<[1], [0], [0], [1], [0, 0, 1, 1], [], []>} : vector<32x128xbf16>, vector<128x512xbf16>, vector<32x512xf32> -> vector<32x512xf32>
    %c0_11 = arith.constant 0 : index
    %c0_12 = arith.constant 0 : index
    %12 = vector.load %arg7[%c0_11, %c0_12] : memref<1x512xf32, #tpu.memory_space<vmem>>, vector<1x512xf32>
    %13 = vector.broadcast %12 : vector<1x512xf32> to vector<32x512xf32>
    %14 = arith.addf %11, %13 : vector<32x512xf32>
    %c0_13 = arith.constant 0 : index
    %c0_14 = arith.constant 0 : index
    %15 = vector.load %arg5[%c0_13, %c0_14] : memref<256x1024xbf16, #tpu.memory_space<vmem>>, vector<256x1024xbf16>
    %c0_15 = arith.constant 0 : index
    %c0_16 = arith.constant 0 : index
    %16 = vector.load %arg13[%c0_15, %c0_16] : memref<8x256xbf16, #tpu.memory_space<vmem>>, vector<8x256xbf16>
    %c0_17 = arith.constant 0 : index
    %c0_18 = arith.constant 0 : index
    %17 = vector.load %arg14[%c0_17, %c0_18] : memref<8x256xf32, #tpu.memory_space<vmem>>, vector<8x128xf32>
    %c0_19 = arith.constant 0 : index
    %c128 = arith.constant 128 : index
    %18 = vector.load %arg14[%c0_19, %c128] : memref<8x256xf32, #tpu.memory_space<vmem>>, vector<8x128xf32>
    %cst_20 = arith.constant dense<0.000000e+00> : vector<8x1024xf32>
    %19 = tpu.matmul %16, %15, %cst_20 {dimension_numbers = #tpu.dot_dimension_numbers<[1], [0], [0], [1], [0, 0, 1, 1], [], []>} : vector<8x256xbf16>, vector<256x1024xbf16>, vector<8x1024xf32> -> vector<8x1024xf32>
    %20 = vector.extract_strided_slice %19 {offsets = [0, 0], sizes = [8, 512], strides = [1, 1]} : vector<8x1024xf32> to vector<8x512xf32>
    %21 = vector.extract_strided_slice %8 {offsets = [0, 0], sizes = [8, 512], strides = [1, 1]} : vector<32x512xf32> to vector<8x512xf32>
    %22 = arith.addf %20, %21 : vector<8x512xf32>
    %23 = vector.extract_strided_slice %19 {offsets = [0, 512], sizes = [8, 512], strides = [1, 1]} : vector<8x1024xf32> to vector<8x512xf32>
    %24 = vector.extract_strided_slice %14 {offsets = [24, 0], sizes = [8, 512], strides = [1, 1]} : vector<32x512xf32> to vector<8x512xf32>
    %25 = arith.addf %23, %24 : vector<8x512xf32>
    %26 = vector.extract_strided_slice %22 {offsets = [0, 0], sizes = [8, 256], strides = [1, 1]} : vector<8x512xf32> to vector<8x256xf32>
    %27 = arith.negf %26 : vector<8x256xf32>
    %28 = math.exp %27 : vector<8x256xf32>
    %cst_21 = arith.constant 1.000000e+00 : f32
    %29 = vector.broadcast %cst_21 : f32 to vector<8x256xf32>
    %30 = arith.addf %29, %28 : vector<8x256xf32>
    %31 = arith.divf %29, %30 : vector<8x256xf32>
    %32 = vector.extract_strided_slice %22 {offsets = [0, 256], sizes = [8, 128], strides = [1, 1]} : vector<8x512xf32> to vector<8x128xf32>
    %33 = math.tanh %32 : vector<8x128xf32>
    %34 = vector.extract_strided_slice %22 {offsets = [0, 384], sizes = [8, 128], strides = [1, 1]} : vector<8x512xf32> to vector<8x128xf32>
    %35 = arith.negf %34 : vector<8x128xf32>
    %36 = math.exp %35 : vector<8x128xf32>
    %cst_22 = arith.constant 1.000000e+00 : f32
    %37 = vector.broadcast %cst_22 : f32 to vector<8x128xf32>
    %38 = arith.addf %37, %36 : vector<8x128xf32>
    %39 = arith.divf %37, %38 : vector<8x128xf32>
    %40 = vector.extract_strided_slice %25 {offsets = [0, 0], sizes = [8, 256], strides = [1, 1]} : vector<8x512xf32> to vector<8x256xf32>
    %41 = arith.negf %40 : vector<8x256xf32>
    %42 = math.exp %41 : vector<8x256xf32>
    %cst_23 = arith.constant 1.000000e+00 : f32
    %43 = vector.broadcast %cst_23 : f32 to vector<8x256xf32>
    %44 = arith.addf %43, %42 : vector<8x256xf32>
    %45 = arith.divf %43, %44 : vector<8x256xf32>
    %46 = vector.extract_strided_slice %25 {offsets = [0, 256], sizes = [8, 128], strides = [1, 1]} : vector<8x512xf32> to vector<8x128xf32>
    %47 = math.tanh %46 : vector<8x128xf32>
    %48 = vector.extract_strided_slice %25 {offsets = [0, 384], sizes = [8, 128], strides = [1, 1]} : vector<8x512xf32> to vector<8x128xf32>
    %49 = arith.negf %48 : vector<8x128xf32>
    %50 = math.exp %49 : vector<8x128xf32>
    %cst_24 = arith.constant 1.000000e+00 : f32
    %51 = vector.broadcast %cst_24 : f32 to vector<8x128xf32>
    %52 = arith.addf %51, %50 : vector<8x128xf32>
    %53 = arith.divf %51, %52 : vector<8x128xf32>
    %54 = vector.extract_strided_slice %31 {offsets = [0, 128], sizes = [8, 128], strides = [1, 1]} : vector<8x256xf32> to vector<8x128xf32>
    %55 = arith.mulf %54, %17 : vector<8x128xf32>
    %56 = vector.extract_strided_slice %31 {offsets = [0, 0], sizes = [8, 128], strides = [1, 1]} : vector<8x256xf32> to vector<8x128xf32>
    %57 = arith.mulf %56, %33 : vector<8x128xf32>
    %58 = arith.addf %55, %57 : vector<8x128xf32>
    %59 = vector.extract_strided_slice %45 {offsets = [0, 128], sizes = [8, 128], strides = [1, 1]} : vector<8x256xf32> to vector<8x128xf32>
    %60 = arith.mulf %59, %18 : vector<8x128xf32>
    %61 = vector.extract_strided_slice %45 {offsets = [0, 0], sizes = [8, 128], strides = [1, 1]} : vector<8x256xf32> to vector<8x128xf32>
    %62 = arith.mulf %61, %47 : vector<8x128xf32>
    %63 = arith.addf %60, %62 : vector<8x128xf32>
    %64 = math.tanh %58 : vector<8x128xf32>
    %65 = arith.mulf %39, %64 : vector<8x128xf32>
    %66 = math.tanh %63 : vector<8x128xf32>
    %67 = arith.mulf %53, %66 : vector<8x128xf32>
    %68 = tpu.concatenate %65, %67 in 1 : vector<8x128xf32>, vector<8x128xf32> -> vector<8x256xf32>
    %69 = arith.truncf %68 : vector<8x256xf32> to vector<8x256xbf16>
    %cst_25 = arith.constant dense<0.000000e+00> : vector<8x1024xf32>
    %70 = tpu.matmul %69, %15, %cst_25 {dimension_numbers = #tpu.dot_dimension_numbers<[1], [0], [0], [1], [0, 0, 1, 1], [], []>} : vector<8x256xbf16>, vector<256x1024xbf16>, vector<8x1024xf32> -> vector<8x1024xf32>
    %71 = vector.extract_strided_slice %70 {offsets = [0, 0], sizes = [8, 512], strides = [1, 1]} : vector<8x1024xf32> to vector<8x512xf32>
    %72 = vector.extract_strided_slice %8 {offsets = [8, 0], sizes = [8, 512], strides = [1, 1]} : vector<32x512xf32> to vector<8x512xf32>
    %73 = arith.addf %71, %72 : vector<8x512xf32>
    %74 = vector.extract_strided_slice %70 {offsets = [0, 512], sizes = [8, 512], strides = [1, 1]} : vector<8x1024xf32> to vector<8x512xf32>
    %75 = vector.extract_strided_slice %14 {offsets = [16, 0], sizes = [8, 512], strides = [1, 1]} : vector<32x512xf32> to vector<8x512xf32>
    %76 = arith.addf %74, %75 : vector<8x512xf32>
    %77 = vector.extract_strided_slice %73 {offsets = [0, 0], sizes = [8, 256], strides = [1, 1]} : vector<8x512xf32> to vector<8x256xf32>
    %78 = arith.negf %77 : vector<8x256xf32>
    %79 = math.exp %78 : vector<8x256xf32>
    %cst_26 = arith.constant 1.000000e+00 : f32
    %80 = vector.broadcast %cst_26 : f32 to vector<8x256xf32>
    %81 = arith.addf %80, %79 : vector<8x256xf32>
    %82 = arith.divf %80, %81 : vector<8x256xf32>
    %83 = vector.extract_strided_slice %73 {offsets = [0, 256], sizes = [8, 128], strides = [1, 1]} : vector<8x512xf32> to vector<8x128xf32>
    %84 = math.tanh %83 : vector<8x128xf32>
    %85 = vector.extract_strided_slice %73 {offsets = [0, 384], sizes = [8, 128], strides = [1, 1]} : vector<8x512xf32> to vector<8x128xf32>
    %86 = arith.negf %85 : vector<8x128xf32>
    %87 = math.exp %86 : vector<8x128xf32>
    %cst_27 = arith.constant 1.000000e+00 : f32
    %88 = vector.broadcast %cst_27 : f32 to vector<8x128xf32>
    %89 = arith.addf %88, %87 : vector<8x128xf32>
    %90 = arith.divf %88, %89 : vector<8x128xf32>
    %91 = vector.extract_strided_slice %76 {offsets = [0, 0], sizes = [8, 256], strides = [1, 1]} : vector<8x512xf32> to vector<8x256xf32>
    %92 = arith.negf %91 : vector<8x256xf32>
    %93 = math.exp %92 : vector<8x256xf32>
    %cst_28 = arith.constant 1.000000e+00 : f32
    %94 = vector.broadcast %cst_28 : f32 to vector<8x256xf32>
    %95 = arith.addf %94, %93 : vector<8x256xf32>
    %96 = arith.divf %94, %95 : vector<8x256xf32>
    %97 = vector.extract_strided_slice %76 {offsets = [0, 256], sizes = [8, 128], strides = [1, 1]} : vector<8x512xf32> to vector<8x128xf32>
    %98 = math.tanh %97 : vector<8x128xf32>
    %99 = vector.extract_strided_slice %76 {offsets = [0, 384], sizes = [8, 128], strides = [1, 1]} : vector<8x512xf32> to vector<8x128xf32>
    %100 = arith.negf %99 : vector<8x128xf32>
    %101 = math.exp %100 : vector<8x128xf32>
    %cst_29 = arith.constant 1.000000e+00 : f32
    %102 = vector.broadcast %cst_29 : f32 to vector<8x128xf32>
    %103 = arith.addf %102, %101 : vector<8x128xf32>
    %104 = arith.divf %102, %103 : vector<8x128xf32>
    %105 = vector.extract_strided_slice %82 {offsets = [0, 128], sizes = [8, 128], strides = [1, 1]} : vector<8x256xf32> to vector<8x128xf32>
    %106 = arith.mulf %105, %58 : vector<8x128xf32>
    %107 = vector.extract_strided_slice %82 {offsets = [0, 0], sizes = [8, 128], strides = [1, 1]} : vector<8x256xf32> to vector<8x128xf32>
    %108 = arith.mulf %107, %84 : vector<8x128xf32>
    %109 = arith.addf %106, %108 : vector<8x128xf32>
    %110 = vector.extract_strided_slice %96 {offsets = [0, 128], sizes = [8, 128], strides = [1, 1]} : vector<8x256xf32> to vector<8x128xf32>
    %111 = arith.mulf %110, %63 : vector<8x128xf32>
    %112 = vector.extract_strided_slice %96 {offsets = [0, 0], sizes = [8, 128], strides = [1, 1]} : vector<8x256xf32> to vector<8x128xf32>
    %113 = arith.mulf %112, %98 : vector<8x128xf32>
    %114 = arith.addf %111, %113 : vector<8x128xf32>
    %115 = math.tanh %109 : vector<8x128xf32>
    %116 = arith.mulf %90, %115 : vector<8x128xf32>
    %117 = math.tanh %114 : vector<8x128xf32>
    %118 = arith.mulf %104, %117 : vector<8x128xf32>
    %119 = tpu.concatenate %116, %118 in 1 : vector<8x128xf32>, vector<8x128xf32> -> vector<8x256xf32>
    %120 = arith.truncf %119 : vector<8x256xf32> to vector<8x256xbf16>
    %cst_30 = arith.constant dense<0.000000e+00> : vector<8x1024xf32>
    %121 = tpu.matmul %120, %15, %cst_30 {dimension_numbers = #tpu.dot_dimension_numbers<[1], [0], [0], [1], [0, 0, 1, 1], [], []>} : vector<8x256xbf16>, vector<256x1024xbf16>, vector<8x1024xf32> -> vector<8x1024xf32>
    %122 = vector.extract_strided_slice %121 {offsets = [0, 0], sizes = [8, 512], strides = [1, 1]} : vector<8x1024xf32> to vector<8x512xf32>
    %123 = vector.extract_strided_slice %8 {offsets = [16, 0], sizes = [8, 512], strides = [1, 1]} : vector<32x512xf32> to vector<8x512xf32>
    %124 = arith.addf %122, %123 : vector<8x512xf32>
    %125 = vector.extract_strided_slice %121 {offsets = [0, 512], sizes = [8, 512], strides = [1, 1]} : vector<8x1024xf32> to vector<8x512xf32>
    %126 = vector.extract_strided_slice %14 {offsets = [8, 0], sizes = [8, 512], strides = [1, 1]} : vector<32x512xf32> to vector<8x512xf32>
    %127 = arith.addf %125, %126 : vector<8x512xf32>
    %128 = vector.extract_strided_slice %124 {offsets = [0, 0], sizes = [8, 256], strides = [1, 1]} : vector<8x512xf32> to vector<8x256xf32>
    %129 = arith.negf %128 : vector<8x256xf32>
    %130 = math.exp %129 : vector<8x256xf32>
    %cst_31 = arith.constant 1.000000e+00 : f32
    %131 = vector.broadcast %cst_31 : f32 to vector<8x256xf32>
    %132 = arith.addf %131, %130 : vector<8x256xf32>
    %133 = arith.divf %131, %132 : vector<8x256xf32>
    %134 = vector.extract_strided_slice %124 {offsets = [0, 256], sizes = [8, 128], strides = [1, 1]} : vector<8x512xf32> to vector<8x128xf32>
    %135 = math.tanh %134 : vector<8x128xf32>
    %136 = vector.extract_strided_slice %124 {offsets = [0, 384], sizes = [8, 128], strides = [1, 1]} : vector<8x512xf32> to vector<8x128xf32>
    %137 = arith.negf %136 : vector<8x128xf32>
    %138 = math.exp %137 : vector<8x128xf32>
    %cst_32 = arith.constant 1.000000e+00 : f32
    %139 = vector.broadcast %cst_32 : f32 to vector<8x128xf32>
    %140 = arith.addf %139, %138 : vector<8x128xf32>
    %141 = arith.divf %139, %140 : vector<8x128xf32>
    %142 = vector.extract_strided_slice %127 {offsets = [0, 0], sizes = [8, 256], strides = [1, 1]} : vector<8x512xf32> to vector<8x256xf32>
    %143 = arith.negf %142 : vector<8x256xf32>
    %144 = math.exp %143 : vector<8x256xf32>
    %cst_33 = arith.constant 1.000000e+00 : f32
    %145 = vector.broadcast %cst_33 : f32 to vector<8x256xf32>
    %146 = arith.addf %145, %144 : vector<8x256xf32>
    %147 = arith.divf %145, %146 : vector<8x256xf32>
    %148 = vector.extract_strided_slice %127 {offsets = [0, 256], sizes = [8, 128], strides = [1, 1]} : vector<8x512xf32> to vector<8x128xf32>
    %149 = math.tanh %148 : vector<8x128xf32>
    %150 = vector.extract_strided_slice %127 {offsets = [0, 384], sizes = [8, 128], strides = [1, 1]} : vector<8x512xf32> to vector<8x128xf32>
    %151 = arith.negf %150 : vector<8x128xf32>
    %152 = math.exp %151 : vector<8x128xf32>
    %cst_34 = arith.constant 1.000000e+00 : f32
    %153 = vector.broadcast %cst_34 : f32 to vector<8x128xf32>
    %154 = arith.addf %153, %152 : vector<8x128xf32>
    %155 = arith.divf %153, %154 : vector<8x128xf32>
    %156 = vector.extract_strided_slice %133 {offsets = [0, 128], sizes = [8, 128], strides = [1, 1]} : vector<8x256xf32> to vector<8x128xf32>
    %157 = arith.mulf %156, %109 : vector<8x128xf32>
    %158 = vector.extract_strided_slice %133 {offsets = [0, 0], sizes = [8, 128], strides = [1, 1]} : vector<8x256xf32> to vector<8x128xf32>
    %159 = arith.mulf %158, %135 : vector<8x128xf32>
    %160 = arith.addf %157, %159 : vector<8x128xf32>
    %161 = vector.extract_strided_slice %147 {offsets = [0, 128], sizes = [8, 128], strides = [1, 1]} : vector<8x256xf32> to vector<8x128xf32>
    %162 = arith.mulf %161, %114 : vector<8x128xf32>
    %163 = vector.extract_strided_slice %147 {offsets = [0, 0], sizes = [8, 128], strides = [1, 1]} : vector<8x256xf32> to vector<8x128xf32>
    %164 = arith.mulf %163, %149 : vector<8x128xf32>
    %165 = arith.addf %162, %164 : vector<8x128xf32>
    %166 = math.tanh %160 : vector<8x128xf32>
    %167 = arith.mulf %141, %166 : vector<8x128xf32>
    %168 = math.tanh %165 : vector<8x128xf32>
    %169 = arith.mulf %155, %168 : vector<8x128xf32>
    %170 = tpu.concatenate %167, %169 in 1 : vector<8x128xf32>, vector<8x128xf32> -> vector<8x256xf32>
    %171 = arith.truncf %170 : vector<8x256xf32> to vector<8x256xbf16>
    %cst_35 = arith.constant dense<0.000000e+00> : vector<8x1024xf32>
    %172 = tpu.matmul %171, %15, %cst_35 {dimension_numbers = #tpu.dot_dimension_numbers<[1], [0], [0], [1], [0, 0, 1, 1], [], []>} : vector<8x256xbf16>, vector<256x1024xbf16>, vector<8x1024xf32> -> vector<8x1024xf32>
    %173 = vector.extract_strided_slice %172 {offsets = [0, 0], sizes = [8, 512], strides = [1, 1]} : vector<8x1024xf32> to vector<8x512xf32>
    %174 = vector.extract_strided_slice %8 {offsets = [24, 0], sizes = [8, 512], strides = [1, 1]} : vector<32x512xf32> to vector<8x512xf32>
    %175 = arith.addf %173, %174 : vector<8x512xf32>
    %176 = vector.extract_strided_slice %172 {offsets = [0, 512], sizes = [8, 512], strides = [1, 1]} : vector<8x1024xf32> to vector<8x512xf32>
    %177 = vector.extract_strided_slice %14 {offsets = [0, 0], sizes = [8, 512], strides = [1, 1]} : vector<32x512xf32> to vector<8x512xf32>
    %178 = arith.addf %176, %177 : vector<8x512xf32>
    %179 = vector.extract_strided_slice %175 {offsets = [0, 0], sizes = [8, 256], strides = [1, 1]} : vector<8x512xf32> to vector<8x256xf32>
    %180 = arith.negf %179 : vector<8x256xf32>
    %181 = math.exp %180 : vector<8x256xf32>
    %cst_36 = arith.constant 1.000000e+00 : f32
    %182 = vector.broadcast %cst_36 : f32 to vector<8x256xf32>
    %183 = arith.addf %182, %181 : vector<8x256xf32>
    %184 = arith.divf %182, %183 : vector<8x256xf32>
    %185 = vector.extract_strided_slice %175 {offsets = [0, 256], sizes = [8, 128], strides = [1, 1]} : vector<8x512xf32> to vector<8x128xf32>
    %186 = math.tanh %185 : vector<8x128xf32>
    %187 = vector.extract_strided_slice %175 {offsets = [0, 384], sizes = [8, 128], strides = [1, 1]} : vector<8x512xf32> to vector<8x128xf32>
    %188 = arith.negf %187 : vector<8x128xf32>
    %189 = math.exp %188 : vector<8x128xf32>
    %cst_37 = arith.constant 1.000000e+00 : f32
    %190 = vector.broadcast %cst_37 : f32 to vector<8x128xf32>
    %191 = arith.addf %190, %189 : vector<8x128xf32>
    %192 = arith.divf %190, %191 : vector<8x128xf32>
    %193 = vector.extract_strided_slice %178 {offsets = [0, 0], sizes = [8, 256], strides = [1, 1]} : vector<8x512xf32> to vector<8x256xf32>
    %194 = arith.negf %193 : vector<8x256xf32>
    %195 = math.exp %194 : vector<8x256xf32>
    %cst_38 = arith.constant 1.000000e+00 : f32
    %196 = vector.broadcast %cst_38 : f32 to vector<8x256xf32>
    %197 = arith.addf %196, %195 : vector<8x256xf32>
    %198 = arith.divf %196, %197 : vector<8x256xf32>
    %199 = vector.extract_strided_slice %178 {offsets = [0, 256], sizes = [8, 128], strides = [1, 1]} : vector<8x512xf32> to vector<8x128xf32>
    %200 = math.tanh %199 : vector<8x128xf32>
    %201 = vector.extract_strided_slice %178 {offsets = [0, 384], sizes = [8, 128], strides = [1, 1]} : vector<8x512xf32> to vector<8x128xf32>
    %202 = arith.negf %201 : vector<8x128xf32>
    %203 = math.exp %202 : vector<8x128xf32>
    %cst_39 = arith.constant 1.000000e+00 : f32
    %204 = vector.broadcast %cst_39 : f32 to vector<8x128xf32>
    %205 = arith.addf %204, %203 : vector<8x128xf32>
    %206 = arith.divf %204, %205 : vector<8x128xf32>
    %207 = vector.extract_strided_slice %184 {offsets = [0, 128], sizes = [8, 128], strides = [1, 1]} : vector<8x256xf32> to vector<8x128xf32>
    %208 = arith.mulf %207, %160 : vector<8x128xf32>
    %209 = vector.extract_strided_slice %184 {offsets = [0, 0], sizes = [8, 128], strides = [1, 1]} : vector<8x256xf32> to vector<8x128xf32>
    %210 = arith.mulf %209, %186 : vector<8x128xf32>
    %211 = arith.addf %208, %210 : vector<8x128xf32>
    %212 = vector.extract_strided_slice %198 {offsets = [0, 128], sizes = [8, 128], strides = [1, 1]} : vector<8x256xf32> to vector<8x128xf32>
    %213 = arith.mulf %212, %165 : vector<8x128xf32>
    %214 = vector.extract_strided_slice %198 {offsets = [0, 0], sizes = [8, 128], strides = [1, 1]} : vector<8x256xf32> to vector<8x128xf32>
    %215 = arith.mulf %214, %200 : vector<8x128xf32>
    %216 = arith.addf %213, %215 : vector<8x128xf32>
    %217 = math.tanh %211 : vector<8x128xf32>
    %218 = arith.mulf %192, %217 : vector<8x128xf32>
    %219 = math.tanh %216 : vector<8x128xf32>
    %220 = arith.mulf %206, %219 : vector<8x128xf32>
    %221 = tpu.concatenate %218, %220 in 1 : vector<8x128xf32>, vector<8x128xf32> -> vector<8x256xf32>
    %222 = arith.truncf %221 : vector<8x256xf32> to vector<8x256xbf16>
    %c0_40 = arith.constant 0 : index
    %c0_41 = arith.constant 0 : index
    %223 = vector.load %arg13[%c0_40, %c0_41] : memref<8x256xbf16, #tpu.memory_space<vmem>>, vector<8x256xbf16>
    tpu.vector_store %arg13[%c0_40, %c0_41], %222 {strides = array<i32>} : memref<8x256xbf16, #tpu.memory_space<vmem>>, vector<8x256xbf16>,
    %c0_42 = arith.constant 0 : index
    %c0_43 = arith.constant 0 : index
    %224 = vector.load %arg14[%c0_42, %c0_43] : memref<8x256xf32, #tpu.memory_space<vmem>>, vector<8x128xf32>
    tpu.vector_store %arg14[%c0_42, %c0_43], %211 {strides = array<i32>} : memref<8x256xf32, #tpu.memory_space<vmem>>, vector<8x128xf32>,
    %c0_44 = arith.constant 0 : index
    %c128_45 = arith.constant 128 : index
    %225 = vector.load %arg14[%c0_44, %c128_45] : memref<8x256xf32, #tpu.memory_space<vmem>>, vector<8x128xf32>
    tpu.vector_store %arg14[%c0_44, %c128_45], %216 {strides = array<i32>} : memref<8x256xf32, #tpu.memory_space<vmem>>, vector<8x128xf32>,
    %c1_i32 = arith.constant 1 : i32
    %226 = arith.cmpi eq, %arg0, %c1_i32 : i32
    %227 = arith.extui %226 : i1 to i32
    %c0_i32_46 = arith.constant 0 : i32
    %228 = arith.cmpi ne, %227, %c0_i32_46 : i32
    scf.if %228 {
      %c0_47 = arith.constant 0 : index
      %c0_48 = arith.constant 0 : index
      %229 = vector.load %arg8[%c0_47, %c0_48] : memref<256x128xbf16, #tpu.memory_space<vmem>>, vector<256x128xbf16>
      %cst_49 = arith.constant dense<0.000000e+00> : vector<8x128xf32>
      %230 = tpu.matmul %222, %229, %cst_49 {dimension_numbers = #tpu.dot_dimension_numbers<[1], [0], [0], [1], [0, 0, 1, 1], [], []>} : vector<8x256xbf16>, vector<256x128xbf16>, vector<8x128xf32> -> vector<8x128xf32>
      %c0_50 = arith.constant 0 : index
      %c0_51 = arith.constant 0 : index
      %231 = vector.load %arg9[%c0_50, %c0_51] : memref<1x128xf32, #tpu.memory_space<vmem>>, vector<1x128xf32>
      %232 = vector.broadcast %231 : vector<1x128xf32> to vector<8x128xf32>
      %233 = arith.addf %230, %232 : vector<8x128xf32>
      %cst_52 = arith.constant 0.000000e+00 : f32
      %234 = vector.broadcast %cst_52 : f32 to vector<8x128xf32>
      %235 = arith.maximumf %233, %234 : vector<8x128xf32>
      %236 = arith.truncf %235 : vector<8x128xf32> to vector<8x128xbf16>
      %c0_53 = arith.constant 0 : index
      %c0_54 = arith.constant 0 : index
      %237 = vector.load %arg10[%c0_53, %c0_54] : memref<128x128xbf16, #tpu.memory_space<vmem>>, vector<128x128xbf16>
      %cst_55 = arith.constant dense<0.000000e+00> : vector<8x128xf32>
      %238 = tpu.matmul %236, %237, %cst_55 {dimension_numbers = #tpu.dot_dimension_numbers<[1], [0], [0], [1], [0, 0, 1, 1], [], []>} : vector<8x128xbf16>, vector<128x128xbf16>, vector<8x128xf32> -> vector<8x128xf32>
      %c0_56 = arith.constant 0 : index
      %c0_57 = arith.constant 0 : index
      %239 = vector.load %arg11[%c0_56, %c0_57] : memref<1x128xf32, #tpu.memory_space<vmem>>, vector<1x128xf32>
      %240 = vector.broadcast %239 : vector<1x128xf32> to vector<8x128xf32>
      %241 = arith.addf %238, %240 : vector<8x128xf32>
      %c0_58 = arith.constant 0 : index
      %c0_59 = arith.constant 0 : index
      %242 = vector.load %arg12[%c0_58, %c0_59] : memref<8x128xf32, #tpu.memory_space<vmem>>, vector<8x128xf32>
      tpu.vector_store %arg12[%c0_58, %c0_59], %241 {strides = array<i32>} : memref<8x128xf32, #tpu.memory_space<vmem>>, vector<8x128xf32>,
    } else {
    }
    return
  }
  func.func @transform_0(%arg0: i32) -> (i32, i32) {
    %c0_i32 = arith.constant 0 : i32
    %c0_i32_0 = arith.constant 0 : i32
    return %arg0, %c0_i32 : i32, i32
  }
  func.func @transform_1(%arg0: i32) -> (i32, i32) {
    %c1_i32 = arith.constant 1 : i32
    %0 = arith.subi %c1_i32, %arg0 : i32
    %c0_i32 = arith.constant 0 : i32
    %c0_i32_0 = arith.constant 0 : i32
    return %0, %c0_i32 : i32, i32
  }
  func.func @transform_2(%arg0: i32) -> (i32, i32) {
    %c0_i32 = arith.constant 0 : i32
    %c0_i32_0 = arith.constant 0 : i32
    %c0_i32_1 = arith.constant 0 : i32
    return %c0_i32, %c0_i32_0 : i32, i32
  }
  func.func @transform_3(%arg0: i32) -> (i32, i32) {
    %c0_i32 = arith.constant 0 : i32
    %c0_i32_0 = arith.constant 0 : i32
    %c0_i32_1 = arith.constant 0 : i32
    return %c0_i32, %c0_i32_0 : i32, i32
  }
  func.func @transform_4(%arg0: i32) -> (i32, i32) {
    %c0_i32 = arith.constant 0 : i32
    %c0_i32_0 = arith.constant 0 : i32
    %c0_i32_1 = arith.constant 0 : i32
    return %c0_i32, %c0_i32_0 : i32, i32
  }
  func.func @transform_5(%arg0: i32) -> (i32, i32) {
    %c0_i32 = arith.constant 0 : i32
    %c0_i32_0 = arith.constant 0 : i32
    %c0_i32_1 = arith.constant 0 : i32
    return %c0_i32, %c0_i32_0 : i32, i32
  }
  func.func @transform_6(%arg0: i32) -> (i32, i32) {
    %c0_i32 = arith.constant 0 : i32
    %c0_i32_0 = arith.constant 0 : i32
    %c0_i32_1 = arith.constant 0 : i32
    return %c0_i32, %c0_i32_0 : i32, i32
  }
  func.func @transform_7(%arg0: i32) -> (i32, i32) {
    %c0_i32 = arith.constant 0 : i32
    %c0_i32_0 = arith.constant 0 : i32
    %c0_i32_1 = arith.constant 0 : i32
    return %c0_i32, %c0_i32_0 : i32, i32
  }
  func.func @transform_8(%arg0: i32) -> (i32, i32) {
    %c0_i32 = arith.constant 0 : i32
    %c0_i32_0 = arith.constant 0 : i32
    %c0_i32_1 = arith.constant 0 : i32
    return %c0_i32, %c0_i32_0 : i32, i32
  }
  func.func @transform_9(%arg0: i32) -> (i32, i32) {
    %c0_i32 = arith.constant 0 : i32
    %c0_i32_0 = arith.constant 0 : i32
    %c0_i32_1 = arith.constant 0 : i32
    return %c0_i32, %c0_i32_0 : i32, i32
  }
  func.func @transform_10(%arg0: i32) -> (i32, i32) {
    %c0_i32 = arith.constant 0 : i32
    %c0_i32_0 = arith.constant 0 : i32
    %c0_i32_1 = arith.constant 0 : i32
    return %c0_i32, %c0_i32_0 : i32, i32
  }
  func.func @transform_11(%arg0: i32) -> (i32, i32) {
    %c0_i32 = arith.constant 0 : i32
    %c0_i32_0 = arith.constant 0 : i32
    %c0_i32_1 = arith.constant 0 : i32
    return %c0_i32, %c0_i32_0 : i32, i32
  }
}

</mosaic_0001>

<llo_original>
// kernel: tpu_custom_call.1
$region0: #{tpu_custom_call.1}
  #allocation0 [shape = 'u32[]', space=smem, size = 0x4, offset = 0x4, fixed_abs, tag = 'smem constant byte address 0x4 - core index']
  #allocation1 [shape = 'u32[144,128]{1,0:T(1,128)}', space=vmem, size = 0x12000, scoped, tag = 'internal scratch']
  #allocation2 [shape = 'bf16[8,256]{1,0:T(8,128)(2,1)}', space=vmem, size = 0x1000, scoped, tag = 'scratch operand']
  #allocation3 [shape = 'f32[8,256]{1,0:T(8,128)}', space=vmem, size = 0x2000, scoped, tag = 'scratch operand']
  %s0 = inlined_call_operand.hbm [shape: bf16[64,128], index: 0, kind: input, shape index: {}]
  %s1 = inlined_call_operand.hbm [shape: bf16[64,128], index: 1, kind: input, shape index: {}]
  %s2 = inlined_call_operand.hbm [shape: bf16[128,512], index: 2, kind: input, shape index: {}]
  %s3 = inlined_call_operand.hbm [shape: bf16[128,512], index: 3, kind: input, shape index: {}]
  %s4 = inlined_call_operand.hbm [shape: bf16[256,1024], index: 4, kind: input, shape index: {}]
  %s5 = inlined_call_operand.vmem [shape: f32[1,512], index: 5, kind: input, shape index: {}]
  %s6 = inlined_call_operand.vmem [shape: f32[1,512], index: 6, kind: input, shape index: {}]
  %s7 = inlined_call_operand.hbm [shape: bf16[256,128], index: 7, kind: input, shape index: {}]
  %s8 = inlined_call_operand.vmem [shape: f32[1,128], index: 8, kind: input, shape index: {}]
  %s9 = inlined_call_operand.hbm [shape: bf16[128,128], index: 9, kind: input, shape index: {}]
  %s10 = inlined_call_operand.vmem [shape: f32[1,128], index: 10, kind: input, shape index: {}]
  %s11 = inlined_call_operand.hbm [shape: f32[8,128], index: 11, kind: output, shape index: {}]
  %s12 = sld [smem:[#allocation0]]
  $region113: #{tpu_custom_call.1} parent=0
    _
  %s14 = ssub.s32 1, %s12
  %s15 = scalar_select 0, %s14, %s12
  $region1: #{tpu_custom_call.1} parent=0
    #allocation4 [shape = 'u8[16384]{0}', space=vmem, size = 0x4000, scoped, tag = 'input window, operand 0']
    #allocation5 [shape = 's32[2]{0}', space=sflag, size = 0x8, scoped, tag = 'scoped memory for tpu_custom_call.1']
    #allocation6 [shape = 's32[2]{0}', space=sflag, size = 0x8, scoped, tag = 'scoped memory for tpu_custom_call.1']
    #allocation7 [shape = 'u8[16384]{0}', space=vmem, size = 0x4000, scoped, tag = 'input window, operand 1']
    #allocation8 [shape = 's32[2]{0}', space=sflag, size = 0x8, scoped, tag = 'scoped memory for tpu_custom_call.1']
    #allocation9 [shape = 'u8[131072]{0}', space=vmem, size = 0x20000, scoped, tag = 'input window, operand 2, single buffered']
    #allocation10 [shape = 'u8[131072]{0}', space=vmem, size = 0x20000, scoped, tag = 'input window, operand 3, single buffered']
    #allocation11 [shape = 's32[1]{0}', space=sflag, size = 0x4, scoped, tag = 'scoped memory for tpu_custom_call.1']
    #allocation12 [shape = 'u8[524288]{0}', space=vmem, size = 0x80000, scoped, tag = 'input window, operand 4, single buffered']
    #allocation13 [shape = 'u8[65536]{0}', space=vmem, size = 0x10000, scoped, tag = 'input window, operand 7, single buffered']
    #allocation14 [shape = 's32[1]{0}', space=sflag, size = 0x4, scoped, tag = 'scoped memory for tpu_custom_call.1']
    #allocation15 [shape = 'u8[32768]{0}', space=vmem, size = 0x8000, scoped, tag = 'input window, operand 9, single buffered']
    #allocation16 [shape = 'u8[4096]{0}', space=vmem, size = 0x1000, scoped, tag = 'output window, operand 0, single buffered']
    %16 = vsyncpa [#allocation5], 0
    %s17 = scalar_lea.sflag [#allocation5], 1
    %18 = vsyncpa %s17, 0
    %19 = vsyncpa [#allocation8], 0
    %s20 = scalar_lea.sflag [#allocation8], 1
    %21 = vsyncpa %s20, 0
    %22 = vsyncpa [#allocation11], 0
    %23 = vsyncpa [#allocation14], 0
    %24 = vsyncpa [#allocation6], 0
    loop: start=0, step=1, limit=4
    $region2: #{tpu_custom_call.1} parent=1 // loop_pre_header
      _
    $region3: #{tpu_custom_call.1} parent=1 // loop_header
      %s26 = sphi 0, %s30
      %p27 = scmp.ge.s32.totalorder %s26, 4
      %s36 = sphi 0, %s38
      %s39 = sphi 0, %s36
      %s40 = sphi 0, %s39
      %s56 = sphi 0, %s40
      %s64 = sphi 0, %s66
      %s67 = sphi 0, %s64
      %s68 = sphi 0, %s67
      %s84 = sphi 0, %s68
      %s88 = sphi 0, %s88
      %s90 = sphi 0, %s88
      %s91 = sphi 0, %s90
      %s105 = sphi 0, %s91
      %s109 = sphi 0, %s109
      %s111 = sphi 0, %s109
      %s112 = sphi 0, %s111
      %s126 = sphi 0, %s112
      %s130 = sphi 0, %s130
      %s132 = sphi 0, %s130
      %s133 = sphi 0, %s132
      %s147 = sphi 0, %s133
      %s151 = sphi 0, %s151
      %s153 = sphi 0, %s151
      %s154 = sphi 0, %s153
      %s168 = sphi 0, %s154
      %s172 = sphi 0, %s172
      %s174 = sphi 0, %s172
      %s175 = sphi 0, %s174
      %s189 = sphi 0, %s175
      %s193 = sphi 0, %s193
      %s195 = sphi 0, %s193
      %s196 = sphi 0, %s195
      %s210 = sphi 0, %s196
      %s214 = sphi 0, %s214
      %s216 = sphi 0, %s214
      %s217 = sphi 0, %s216
      %s231 = sphi 0, %s217
      %s235 = sphi 0, %s235
      %s237 = sphi 0, %s235
      %s238 = sphi 0, %s237
      %s252 = sphi 0, %s238
      %s256 = sphi 0, %s256
      %s258 = sphi 0, %s256
      %s259 = sphi 0, %s258
      %s273 = sphi 0, %s259
      %s277 = sphi 0, %s277
      %s279 = sphi 0, %s277
      %s280 = sphi 0, %s279
      %s294 = sphi 0, %s280
    $region4: #{tpu_custom_call.1} parent=1 // loop_header_branch
      %29 = sbr.rel (%p27) target = $region8
    $region5: #{tpu_custom_call.1} parent=1 // loop_body
      %s31 = ssub.s32 %s26, 1
      %s32 = ssub.s32 %s26, 2
      %s33 = sadd.s32 %s26, 1
      %s34 = ssub.s32 %s26, %s33
      %p35 = scmp.eq.s32.totalorder %s34, 0
      %s37 = sadd.s32 %s36, 1
      %s38 = scalar_select %p35, %s36, %s37
      %p41 = pneg %p35
      %p42 = scmp.eq.s32.totalorder %s26, 1
      %p43 = por %p41, %p42
      %p44 = scmp.ne.s32.totalorder %s36, %s39
      %p45 = scmp.eq.s32.totalorder %s26, 0
      %p46 = por %p44, %p45
      %p47 = scmp.ne.s32.totalorder %s36, %s39
      %p48 = scmp.eq.s32.totalorder %s31, 1
      %p49 = por %p47, %p48
      %p50 = scmp.ne.s32.totalorder %s39, %s40
      %p51 = scmp.eq.s32.totalorder %s31, 0
      %p52 = por %p50, %p51
      %p53 = scmp.ne.s32.totalorder %s39, %s40
      %p54 = scmp.eq.s32.totalorder %s32, 1
      %p55 = por %p53, %p54
      %p57 = scmp.ne.s32.totalorder %s40, %s56
      %p58 = scmp.eq.s32.totalorder %s32, 0
      %p59 = por %p57, %p58
      %s60 = ssub.s32 1, %s26
      %s61 = ssub.s32 1, %s33
      %s62 = ssub.s32 %s60, %s61
      %p63 = scmp.eq.s32.totalorder %s62, 0
      %s65 = sadd.s32 %s64, 1
      %s66 = scalar_select %p63, %s64, %s65
      %p69 = pneg %p63
      %p70 = scmp.eq.s32.totalorder %s26, 1
      %p71 = por %p69, %p70
      %p72 = scmp.ne.s32.totalorder %s64, %s67
      %p73 = scmp.eq.s32.totalorder %s26, 0
      %p74 = por %p72, %p73
      %p75 = scmp.ne.s32.totalorder %s64, %s67
      %p76 = scmp.eq.s32.totalorder %s31, 1
      %p77 = por %p75, %p76
      %p78 = scmp.ne.s32.totalorder %s67, %s68
      %p79 = scmp.eq.s32.totalorder %s31, 0
      %p80 = por %p78, %p79
      %p81 = scmp.ne.s32.totalorder %s67, %s68
      %p82 = scmp.eq.s32.totalorder %s32, 1
      %p83 = por %p81, %p82
      %p85 = scmp.ne.s32.totalorder %s68, %s84
      %p86 = scmp.eq.s32.totalorder %s32, 0
      %p87 = por %p85, %p86
      %s89 = sadd.s32 %s88, 1
      %p92 = scmp.eq.s32.totalorder %s26, 1
      %p93 = scmp.ne.s32.totalorder %s88, %s90
      %p94 = scmp.eq.s32.totalorder %s26, 0
      %p95 = por %p93, %p94
      %p96 = scmp.ne.s32.totalorder %s88, %s90
      %p97 = scmp.eq.s32.totalorder %s31, 1
      %p98 = por %p96, %p97
      %p99 = scmp.ne.s32.totalorder %s90, %s91
      %p100 = scmp.eq.s32.totalorder %s31, 0
      %p101 = por %p99, %p100
      %p102 = scmp.ne.s32.totalorder %s90, %s91
      %p103 = scmp.eq.s32.totalorder %s32, 1
      %p104 = por %p102, %p103
      %p106 = scmp.ne.s32.totalorder %s91, %s105
      %p107 = scmp.eq.s32.totalorder %s32, 0
      %p108 = por %p106, %p107
      %s110 = sadd.s32 %s109, 1
      %p113 = scmp.eq.s32.totalorder %s26, 1
      %p114 = scmp.ne.s32.totalorder %s109, %s111
      %p115 = scmp.eq.s32.totalorder %s26, 0
      %p116 = por %p114, %p115
      %p117 = scmp.ne.s32.totalorder %s109, %s111
      %p118 = scmp.eq.s32.totalorder %s31, 1
      %p119 = por %p117, %p118
      %p120 = scmp.ne.s32.totalorder %s111, %s112
      %p121 = scmp.eq.s32.totalorder %s31, 0
      %p122 = por %p120, %p121
      %p123 = scmp.ne.s32.totalorder %s111, %s112
      %p124 = scmp.eq.s32.totalorder %s32, 1
      %p125 = por %p123, %p124
      %p127 = scmp.ne.s32.totalorder %s112, %s126
      %p128 = scmp.eq.s32.totalorder %s32, 0
      %p129 = por %p127, %p128
      %s131 = sadd.s32 %s130, 1
      %p134 = scmp.eq.s32.totalorder %s26, 1
      %p135 = scmp.ne.s32.totalorder %s130, %s132
      %p136 = scmp.eq.s32.totalorder %s26, 0
      %p137 = por %p135, %p136
      %p138 = scmp.ne.s32.totalorder %s130, %s132
      %p139 = scmp.eq.s32.totalorder %s31, 1
      %p140 = por %p138, %p139
      %p141 = scmp.ne.s32.totalorder %s132, %s133
      %p142 = scmp.eq.s32.totalorder %s31, 0
      %p143 = por %p141, %p142
      %p144 = scmp.ne.s32.totalorder %s132, %s133
      %p145 = scmp.eq.s32.totalorder %s32, 1
      %p146 = por %p144, %p145
      %p148 = scmp.ne.s32.totalorder %s133, %s147
      %p149 = scmp.eq.s32.totalorder %s32, 0
      %p150 = por %p148, %p149
      %s152 = sadd.s32 %s151, 1
      %p155 = scmp.eq.s32.totalorder %s26, 1
      %p156 = scmp.ne.s32.totalorder %s151, %s153
      %p157 = scmp.eq.s32.totalorder %s26, 0
      %p158 = por %p156, %p157
      %p159 = scmp.ne.s32.totalorder %s151, %s153
      %p160 = scmp.eq.s32.totalorder %s31, 1
      %p161 = por %p159, %p160
      %p162 = scmp.ne.s32.totalorder %s153, %s154
      %p163 = scmp.eq.s32.totalorder %s31, 0
      %p164 = por %p162, %p163
      %p165 = scmp.ne.s32.totalorder %s153, %s154
      %p166 = scmp.eq.s32.totalorder %s32, 1
      %p167 = por %p165, %p166
      %p169 = scmp.ne.s32.totalorder %s154, %s168
      %p170 = scmp.eq.s32.totalorder %s32, 0
      %p171 = por %p169, %p170
      %s173 = sadd.s32 %s172, 1
      %p176 = scmp.eq.s32.totalorder %s26, 1
      %p177 = scmp.ne.s32.totalorder %s172, %s174
      %p178 = scmp.eq.s32.totalorder %s26, 0
      %p179 = por %p177, %p178
      %p180 = scmp.ne.s32.totalorder %s172, %s174
      %p181 = scmp.eq.s32.totalorder %s31, 1
      %p182 = por %p180, %p181
      %p183 = scmp.ne.s32.totalorder %s174, %s175
      %p184 = scmp.eq.s32.totalorder %s31, 0
      %p185 = por %p183, %p184
      %p186 = scmp.ne.s32.totalorder %s174, %s175
      %p187 = scmp.eq.s32.totalorder %s32, 1
      %p188 = por %p186, %p187
      %p190 = scmp.ne.s32.totalorder %s175, %s189
      %p191 = scmp.eq.s32.totalorder %s32, 0
      %p192 = por %p190, %p191
      %s194 = sadd.s32 %s193, 1
      %p197 = scmp.eq.s32.totalorder %s26, 1
      %p198 = scmp.ne.s32.totalorder %s193, %s195
      %p199 = scmp.eq.s32.totalorder %s26, 0
      %p200 = por %p198, %p199
      %p201 = scmp.ne.s32.totalorder %s193, %s195
      %p202 = scmp.eq.s32.totalorder %s31, 1
      %p203 = por %p201, %p202
      %p204 = scmp.ne.s32.totalorder %s195, %s196
      %p205 = scmp.eq.s32.totalorder %s31, 0
      %p206 = por %p204, %p205
      %p207 = scmp.ne.s32.totalorder %s195, %s196
      %p208 = scmp.eq.s32.totalorder %s32, 1
      %p209 = por %p207, %p208
      %p211 = scmp.ne.s32.totalorder %s196, %s210
      %p212 = scmp.eq.s32.totalorder %s32, 0
      %p213 = por %p211, %p212
      %s215 = sadd.s32 %s214, 1
      %p218 = scmp.eq.s32.totalorder %s26, 1
      %p219 = scmp.ne.s32.totalorder %s214, %s216
      %p220 = scmp.eq.s32.totalorder %s26, 0
      %p221 = por %p219, %p220
      %p222 = scmp.ne.s32.totalorder %s214, %s216
      %p223 = scmp.eq.s32.totalorder %s31, 1
      %p224 = por %p222, %p223
      %p225 = scmp.ne.s32.totalorder %s216, %s217
      %p226 = scmp.eq.s32.totalorder %s31, 0
      %p227 = por %p225, %p226
      %p228 = scmp.ne.s32.totalorder %s216, %s217
      %p229 = scmp.eq.s32.totalorder %s32, 1
      %p230 = por %p228, %p229
      %p232 = scmp.ne.s32.totalorder %s217, %s231
      %p233 = scmp.eq.s32.totalorder %s32, 0
      %p234 = por %p232, %p233
      %s236 = sadd.s32 %s235, 1
      %p239 = scmp.eq.s32.totalorder %s26, 1
      %p240 = scmp.ne.s32.totalorder %s235, %s237
      %p241 = scmp.eq.s32.totalorder %s26, 0
      %p242 = por %p240, %p241
      %p243 = scmp.ne.s32.totalorder %s235, %s237
      %p244 = scmp.eq.s32.totalorder %s31, 1
      %p245 = por %p243, %p244
      %p246 = scmp.ne.s32.totalorder %s237, %s238
      %p247 = scmp.eq.s32.totalorder %s31, 0
      %p248 = por %p246, %p247
      %p249 = scmp.ne.s32.totalorder %s237, %s238
      %p250 = scmp.eq.s32.totalorder %s32, 1
      %p251 = por %p249, %p250
      %p253 = scmp.ne.s32.totalorder %s238, %s252
      %p254 = scmp.eq.s32.totalorder %s32, 0
      %p255 = por %p253, %p254
      %s257 = sadd.s32 %s256, 1
      %p260 = scmp.eq.s32.totalorder %s26, 1
      %p261 = scmp.ne.s32.totalorder %s256, %s258
      %p262 = scmp.eq.s32.totalorder %s26, 0
      %p263 = por %p261, %p262
      %p264 = scmp.ne.s32.totalorder %s256, %s258
      %p265 = scmp.eq.s32.totalorder %s31, 1
      %p266 = por %p264, %p265
      %p267 = scmp.ne.s32.totalorder %s258, %s259
      %p268 = scmp.eq.s32.totalorder %s31, 0
      %p269 = por %p267, %p268
      %p270 = scmp.ne.s32.totalorder %s258, %s259
      %p271 = scmp.eq.s32.totalorder %s32, 1
      %p272 = por %p270, %p271
      %p274 = scmp.ne.s32.totalorder %s259, %s273
      %p275 = scmp.eq.s32.totalorder %s32, 0
      %p276 = por %p274, %p275
      %s278 = sadd.s32 %s277, 1
      %p281 = scmp.eq.s32.totalorder %s26, 1
      %p282 = scmp.ne.s32.totalorder %s277, %s279
      %p283 = scmp.eq.s32.totalorder %s26, 0
      %p284 = por %p282, %p283
      %p285 = scmp.ne.s32.totalorder %s277, %s279
      %p286 = scmp.eq.s32.totalorder %s31, 1
      %p287 = por %p285, %p286
      %p288 = scmp.ne.s32.totalorder %s279, %s280
      %p289 = scmp.eq.s32.totalorder %s31, 0
      %p290 = por %p288, %p289
      %p291 = scmp.ne.s32.totalorder %s279, %s280
      %p292 = scmp.eq.s32.totalorder %s32, 1
      %p293 = por %p291, %p292
      %p295 = scmp.ne.s32.totalorder %s280, %s294
      %p296 = scmp.eq.s32.totalorder %s32, 0
      %p297 = por %p295, %p296
      %p298 = scmp.le.s32.totalorder 1, %s26
      %p299 = scmp.lt.s32.totalorder %s26, 3
      %p300 = pnand %p298, %p299
      %p301 = pneg %p300
      // Predicated region
      $region9: #{tpu_custom_call.1} parent=5 // pred_check
        _
      $region10: #{tpu_custom_call.1} parent=5 // pred_check_branch
        %303 = sbr.rel (%p300) target = $region12
      $region11: #{tpu_custom_call.1} parent=5 // pred_region
        %s304 = ssub.s32 %s26, 1
        // Predicated region
        $region13: #{tpu_custom_call.1} parent=11 // pred_check
          %p305 = pneg %p101
        $region14: #{tpu_custom_call.1} parent=11 // pred_check_branch
          %307 = sbr.rel (%p305) target = $region16
        $region15: #{tpu_custom_call.1} parent=11 // pred_region
          %s309 = ssub.s32 4096, 4096
          %310 = vsyncadd [#allocation8], %s309
          %s311 = sshll.u32 [#allocation9], 4
          %s312 = int_to_ptr.vmem [resolvable:$true] %s311
          %317 = dma.hbm_to_vmem [thread:$0]  %s2, 4096, %s312, [#allocation8], 256, 256, 16
        $region16: #{tpu_custom_call.1} parent=11 // pred_fallthru
          _
        // Predicated region
        $region17: #{tpu_custom_call.1} parent=11 // pred_check
          %p318 = pneg %p122
        $region18: #{tpu_custom_call.1} parent=11 // pred_check_branch
          %320 = sbr.rel (%p318) target = $region20
        $region19: #{tpu_custom_call.1} parent=11 // pred_region
          %s322 = ssub.s32 4096, 4096
          %323 = vsyncadd [#allocation11], %s322
          %s324 = sshll.u32 [#allocation10], 4
          %s325 = int_to_ptr.vmem [resolvable:$true] %s324
          %330 = dma.hbm_to_vmem [thread:$0]  %s3, 4096, %s325, [#allocation11], 256, 256, 16
        $region20: #{tpu_custom_call.1} parent=11 // pred_fallthru
          _
        // Predicated region
        $region21: #{tpu_custom_call.1} parent=11 // pred_check
          %p331 = pneg %p143
        $region22: #{tpu_custom_call.1} parent=11 // pred_check_branch
          %333 = sbr.rel (%p331) target = $region24
        $region23: #{tpu_custom_call.1} parent=11 // pred_region
          %s335 = ssub.s32 16384, 16384
          %336 = vsyncadd [#allocation11], %s335
          %s337 = sshll.u32 [#allocation12], 4
          %s338 = int_to_ptr.vmem [resolvable:$true] %s337
          %343 = dma.hbm_to_vmem [thread:$0]  %s4, 16384, %s338, [#allocation11], 512, 512, 32
        $region24: #{tpu_custom_call.1} parent=11 // pred_fallthru
          _
        // Predicated region
        $region25: #{tpu_custom_call.1} parent=11 // pred_check
          %p344 = pneg %p164
        $region26: #{tpu_custom_call.1} parent=11 // pred_check_branch
          %346 = sbr.rel (%p344) target = $region28
        $region27: #{tpu_custom_call.1} parent=11 // pred_region
          _
        $region28: #{tpu_custom_call.1} parent=11 // pred_fallthru
          _
        // Predicated region
        $region29: #{tpu_custom_call.1} parent=11 // pred_check
          %p347 = pneg %p185
        $region30: #{tpu_custom_call.1} parent=11 // pred_check_branch
          %349 = sbr.rel (%p347) target = $region32
        $region31: #{tpu_custom_call.1} parent=11 // pred_region
          _
        $region32: #{tpu_custom_call.1} parent=11 // pred_fallthru
          _
        // Predicated region
        $region33: #{tpu_custom_call.1} parent=11 // pred_check
          %p350 = pneg %p206
        $region34: #{tpu_custom_call.1} parent=11 // pred_check_branch
          %352 = sbr.rel (%p350) target = $region36
        $region35: #{tpu_custom_call.1} parent=11 // pred_region
          %s354 = ssub.s32 2048, 2048
          %355 = vsyncadd [#allocation14], %s354
          %s356 = sshll.u32 [#allocation13], 4
          %s357 = int_to_ptr.vmem [resolvable:$true] %s356
          %362 = dma.hbm_to_vmem [thread:$0]  %s7, 2048, %s357, [#allocation14], 64, 64, 4
        $region36: #{tpu_custom_call.1} parent=11 // pred_fallthru
          _
        // Predicated region
        $region37: #{tpu_custom_call.1} parent=11 // pred_check
          %p363 = pneg %p227
        $region38: #{tpu_custom_call.1} parent=11 // pred_check_branch
          %365 = sbr.rel (%p363) target = $region40
        $region39: #{tpu_custom_call.1} parent=11 // pred_region
          _
        $region40: #{tpu_custom_call.1} parent=11 // pred_fallthru
          _
        // Predicated region
        $region41: #{tpu_custom_call.1} parent=11 // pred_check
          %p366 = pneg %p248
        $region42: #{tpu_custom_call.1} parent=11 // pred_check_branch
          %368 = sbr.rel (%p366) target = $region44
        $region43: #{tpu_custom_call.1} parent=11 // pred_region
          %s370 = ssub.s32 1024, 1024
          %371 = vsyncadd [#allocation14], %s370
          %s372 = sshll.u32 [#allocation15], 4
          %s373 = int_to_ptr.vmem [resolvable:$true] %s372
          %378 = dma.hbm_to_vmem [thread:$0]  %s9, 1024, %s373, [#allocation14], 64, 64, 4
        $region44: #{tpu_custom_call.1} parent=11 // pred_fallthru
          _
        // Predicated region
        $region45: #{tpu_custom_call.1} parent=11 // pred_check
          %p379 = pneg %p269
        $region46: #{tpu_custom_call.1} parent=11 // pred_check_branch
          %381 = sbr.rel (%p379) target = $region48
        $region47: #{tpu_custom_call.1} parent=11 // pred_region
          _
        $region48: #{tpu_custom_call.1} parent=11 // pred_fallthru
          _
      $region12: #{tpu_custom_call.1} parent=5 // pred_fallthru
        _
      %p382 = scmp.lt.s32.totalorder %s26, 2
      // Predicated region
      $region49: #{tpu_custom_call.1} parent=5 // pred_check
        %p383 = pneg %p382
      $region50: #{tpu_custom_call.1} parent=5 // pred_check_branch
        %385 = sbr.rel (%p383) target = $region52
      $region51: #{tpu_custom_call.1} parent=5 // pred_region
        // Predicated region
        $region53: #{tpu_custom_call.1} parent=51 // pred_check
          %p386 = pneg %p46
        $region54: #{tpu_custom_call.1} parent=51 // pred_check_branch
          %388 = sbr.rel (%p386) target = $region56
        $region55: #{tpu_custom_call.1} parent=51 // pred_region
          %s389 = sand.u32 %s36, 1
          %s390 = scalar_lea.sflag [#allocation5], %s389
          %s391 = sand.u32 %s36, 1
          %s392 = smul.addr %s391, 16
          %s393 = scalar_lea.vmem [#allocation4], %s392
          %s394 = smul.u32 4, %s26
          %s396 = ssub.s32 256, 256
          %397 = vsyncadd %s390, %s396
          %s398 = smul.addr %s394, 64
          %s399 = scalar_lea.hbm %s0, %s398
          %s400 = sshll.u32 %s393, 4
          %s401 = int_to_ptr.vmem [resolvable:$true] %s400
          %406 = dma.hbm_to_vmem [thread:$0]  %s399, 256, %s401, %s390, 64, 64, 4
        $region56: #{tpu_custom_call.1} parent=51 // pred_fallthru
          _
        // Predicated region
        $region57: #{tpu_custom_call.1} parent=51 // pred_check
          %p407 = pneg %p74
        $region58: #{tpu_custom_call.1} parent=51 // pred_check_branch
          %409 = sbr.rel (%p407) target = $region60
        $region59: #{tpu_custom_call.1} parent=51 // pred_region
          %s410 = sand.u32 %s26, 1
          %s411 = scalar_lea.sflag [#allocation8], %s410
          %s412 = sand.u32 %s64, 1
          %s413 = smul.addr %s412, 16
          %s414 = scalar_lea.vmem [#allocation7], %s413
          %s415 = ssub.s32 1, %s26
          %s416 = smul.u32 4, %s415
          %s418 = ssub.s32 256, 256
          %419 = vsyncadd %s411, %s418
          %s420 = smul.addr %s416, 64
          %s421 = scalar_lea.hbm %s1, %s420
          %s422 = sshll.u32 %s414, 4
          %s423 = int_to_ptr.vmem [resolvable:$true] %s422
          %428 = dma.hbm_to_vmem [thread:$0]  %s421, 256, %s423, %s411, 64, 64, 4
        $region60: #{tpu_custom_call.1} parent=51 // pred_fallthru
          _
      $region52: #{tpu_custom_call.1} parent=5 // pred_fallthru
        _
      %p429 = scmp.le.s32.totalorder 1, %s26
      %p430 = scmp.lt.s32.totalorder %s26, 3
      %p431 = pnand %p429, %p430
      %p432 = pneg %p431
      // Predicated region
      $region61: #{tpu_custom_call.1} parent=5 // pred_check
        _
      $region62: #{tpu_custom_call.1} parent=5 // pred_check_branch
        %434 = sbr.rel (%p431) target = $region64
      $region63: #{tpu_custom_call.1} parent=5 // pred_region
        %s435 = ssub.s32 %s26, 1
        %s436 = sand.u32 %s39, 1
        %s437 = scalar_lea.sflag [#allocation5], %s436
        %s438 = sand.u32 %s39, 1
        %s439 = smul.addr %s438, 16
        %s440 = scalar_lea.vmem [#allocation4], %s439
        // Predicated region
        $region65: #{tpu_custom_call.1} parent=63 // pred_check
          %p441 = pneg %p52
        $region66: #{tpu_custom_call.1} parent=63 // pred_check_branch
          %443 = sbr.rel (%p441) target = $region68
        $region67: #{tpu_custom_call.1} parent=63 // pred_region
          %444 = dma.done %s437, 256
        $region68: #{tpu_custom_call.1} parent=63 // pred_fallthru
          _
        %s445 = sand.u32 %s31, 1
        %s446 = scalar_lea.sflag [#allocation8], %s445
        %s447 = sand.u32 %s67, 1
        %s448 = smul.addr %s447, 16
        %s449 = scalar_lea.vmem [#allocation7], %s448
        // Predicated region
        $region69: #{tpu_custom_call.1} parent=63 // pred_check
          %p450 = pneg %p80
        $region70: #{tpu_custom_call.1} parent=63 // pred_check_branch
          %452 = sbr.rel (%p450) target = $region72
        $region71: #{tpu_custom_call.1} parent=63 // pred_region
          %453 = dma.done %s446, 256
        $region72: #{tpu_custom_call.1} parent=63 // pred_fallthru
          _
        // Predicated region
        $region73: #{tpu_custom_call.1} parent=63 // pred_check
          %p454 = pneg %p101
        $region74: #{tpu_custom_call.1} parent=63 // pred_check_branch
          %456 = sbr.rel (%p454) target = $region76
        $region75: #{tpu_custom_call.1} parent=63 // pred_region
          %457 = dma.done [#allocation8], 4096
        $region76: #{tpu_custom_call.1} parent=63 // pred_fallthru
          _
        // Predicated region
        $region77: #{tpu_custom_call.1} parent=63 // pred_check
          %p458 = pneg %p122
        $region78: #{tpu_custom_call.1} parent=63 // pred_check_branch
          %460 = sbr.rel (%p458) target = $region80
        $region79: #{tpu_custom_call.1} parent=63 // pred_region
          %461 = dma.done [#allocation11], 4096
        $region80: #{tpu_custom_call.1} parent=63 // pred_fallthru
          _
        // Predicated region
        $region81: #{tpu_custom_call.1} parent=63 // pred_check
          %p462 = pneg %p143
        $region82: #{tpu_custom_call.1} parent=63 // pred_check_branch
          %464 = sbr.rel (%p462) target = $region84
        $region83: #{tpu_custom_call.1} parent=63 // pred_region
          %465 = dma.done [#allocation11], 16384
        $region84: #{tpu_custom_call.1} parent=63 // pred_fallthru
          _
        // Predicated region
        $region85: #{tpu_custom_call.1} parent=63 // pred_check
          %p466 = pneg %p206
        $region86: #{tpu_custom_call.1} parent=63 // pred_check_branch
          %468 = sbr.rel (%p466) target = $region88
        $region87: #{tpu_custom_call.1} parent=63 // pred_region
          %469 = dma.done [#allocation14], 2048
        $region88: #{tpu_custom_call.1} parent=63 // pred_fallthru
          _
        // Predicated region
        $region89: #{tpu_custom_call.1} parent=63 // pred_check
          %p470 = pneg %p248
        $region90: #{tpu_custom_call.1} parent=63 // pred_check_branch
          %472 = sbr.rel (%p470) target = $region92
        $region91: #{tpu_custom_call.1} parent=63 // pred_region
          %473 = dma.done [#allocation14], 1024
        $region92: #{tpu_custom_call.1} parent=63 // pred_fallthru
          _
        %s474 = sand.u32 %s39, 1
        %s475 = scalar_lea.sflag [#allocation5], %s474
        %s476 = sand.u32 %s39, 1
        %s477 = smul.addr %s476, 16
        %s478 = scalar_lea.vmem [#allocation4], %s477
        %p479 = pneg %p52
        %p480 = pneg %p49
        %s481 = sand.u32 %s31, 1
        %s482 = scalar_lea.sflag [#allocation8], %s481
        %s483 = sand.u32 %s67, 1
        %s484 = smul.addr %s483, 16
        %s485 = scalar_lea.vmem [#allocation7], %s484
        %p486 = pneg %p80
        %p487 = pneg %p77
        %p488 = pneg %p101
        %p489 = pneg %p98
        %p490 = pneg %p122
        %p491 = pneg %p119
        %p492 = pneg %p143
        %p493 = pneg %p140
        %p494 = pneg %p164
        %p495 = pneg %p161
        %p496 = pneg %p185
        %p497 = pneg %p182
        %p498 = pneg %p206
        %p499 = pneg %p203
        %p500 = pneg %p227
        %p501 = pneg %p224
        %p502 = pneg %p248
        %p503 = pneg %p245
        %p504 = pneg %p269
        %p505 = pneg %p266
        %p506 = pneg %p290
        %p507 = pneg %p287
        %s508 = smul.u32 4, %s31
        %s509 = ssub.s32 1, %s31
        %s510 = smul.u32 4, %s509
        %p512 = scmp.eq.s32.totalorder %s31, 0
        // Predicated region
        $region93: #{tpu_custom_call.1} parent=63 // pred_check
          %p513 = pneg %p512
        $region94: #{tpu_custom_call.1} parent=63 // pred_check_branch
          %515 = sbr.rel (%p513) target = $region96
        $region95: #{tpu_custom_call.1} parent=63 // pred_region
          %516 = vst [vmem:[#allocation2] sm:$0xff] 0
          %517 = vst [vmem:[#allocation3] sm:$0xff] 0.0
          %518 = vst [vmem:[#allocation3 + $0x8] sm:$0xff] 0.0
        $region96: #{tpu_custom_call.1} parent=63 // pred_fallthru
          _
        %v519 = vld [vmem:[%s440] sm:$0xf]
        %v520 = vld [vmem:[%s440 + $0x4] sm:$0xf]
        %v521 = vld [vmem:[%s440 + $0x8] sm:$0xf]
        %v522 = vld [vmem:[%s440 + $0xc] sm:$0xf]
        %v523 = vld [vmem:[#allocation9] sm:$0xff]
        %v524 = vld [vmem:[#allocation9 + $0x8] sm:$0xff]
        %v525 = vld [vmem:[#allocation9 + $0x10] sm:$0xff]
        %v526 = vld [vmem:[#allocation9 + $0x18] sm:$0xff]
        %v527 = vld [vmem:[#allocation9 + $0x20] sm:$0xff]
        %v528 = vld [vmem:[#allocation9 + $0x28] sm:$0xff]
        %v529 = vld [vmem:[#allocation9 + $0x30] sm:$0xff]
        %v530 = vld [vmem:[#allocation9 + $0x38] sm:$0xff]
        %v531 = vld [vmem:[#allocation9 + $0x40] sm:$0xff]
        %v532 = vld [vmem:[#allocation9 + $0x48] sm:$0xff]
        %v533 = vld [vmem:[#allocation9 + $0x50] sm:$0xff]
        %v534 = vld [vmem:[#allocation9 + $0x58] sm:$0xff]
        %v535 = vld [vmem:[#allocation9 + $0x60] sm:$0xff]
        %v536 = vld [vmem:[#allocation9 + $0x68] sm:$0xff]
        %v537 = vld [vmem:[#allocation9 + $0x70] sm:$0xff]
        %v538 = vld [vmem:[#allocation9 + $0x78] sm:$0xff]
        %v539 = vld [vmem:[#allocation9 + $0x80] sm:$0xff]
        %v540 = vld [vmem:[#allocation9 + $0x88] sm:$0xff]
        %v541 = vld [vmem:[#allocation9 + $0x90] sm:$0xff]
        %v542 = vld [vmem:[#allocation9 + $0x98] sm:$0xff]
        %v543 = vld [vmem:[#allocation9 + $0xa0] sm:$0xff]
        %v544 = vld [vmem:[#allocation9 + $0xa8] sm:$0xff]
        %v545 = vld [vmem:[#allocation9 + $0xb0] sm:$0xff]
        %v546 = vld [vmem:[#allocation9 + $0xb8] sm:$0xff]
        %v547 = vld [vmem:[#allocation9 + $0xc0] sm:$0xff]
        %v548 = vld [vmem:[#allocation9 + $0xc8] sm:$0xff]
        %v549 = vld [vmem:[#allocation9 + $0xd0] sm:$0xff]
        %v550 = vld [vmem:[#allocation9 + $0xd8] sm:$0xff]
        %v551 = vld [vmem:[#allocation9 + $0xe0] sm:$0xff]
        %v552 = vld [vmem:[#allocation9 + $0xe8] sm:$0xff]
        %v553 = vld [vmem:[#allocation9 + $0xf0] sm:$0xff]
        %v554 = vld [vmem:[#allocation9 + $0xf8] sm:$0xff]
        %v555 = vld [vmem:[%s5] sm:$0xf]
        %v557 = vlaneseq
        %v558 = vshrl.u32 %v557, 7
        %v559 = vsub.s32 0, %v558
        %v560 = vrot.slane %v555, %v559
        %v561 = vlaneseq
        %v562 = vshrl.u32 %v561, 7
        %v563 = vsub.s32 1, %v562
        %v564 = vrot.slane %v555, %v563
        %v565 = vlaneseq
        %v566 = vshrl.u32 %v565, 7
        %v567 = vsub.s32 2, %v566
        %v568 = vrot.slane %v555, %v567
        %v569 = vlaneseq
        %v570 = vshrl.u32 %v569, 7
        %v571 = vsub.s32 3, %v570
        %v572 = vrot.slane %v555, %v571
        %v581 = vunpack.c.l.b16 %v519
        %v582 = vunpack.c.l.b16 %v520
        %v583 = vunpack.c.l.b16 %v521
        %v584 = vunpack.c.l.b16 %v522
        %v585 = vpack.c.b16 %v582, %v581
        %v586 = vpack.c.b16 %v584, %v583
        %v621 = vunpack.c.l.b16 %v523
        %v622 = vunpack.c.h.b16 %v523
        %v623 = vunpack.c.l.b16 %v524
        %v624 = vunpack.c.h.b16 %v524
        %v625 = vunpack.c.l.b16 %v525
        %v626 = vunpack.c.h.b16 %v525
        %v627 = vunpack.c.l.b16 %v526
        %v628 = vunpack.c.h.b16 %v526
        %v629 = vunpack.c.l.b16 %v527
        %v630 = vunpack.c.h.b16 %v527
        %v631 = vunpack.c.l.b16 %v528
        %v632 = vunpack.c.h.b16 %v528
        %v633 = vunpack.c.l.b16 %v529
        %v634 = vunpack.c.h.b16 %v529
        %v635 = vunpack.c.l.b16 %v530
        %v636 = vunpack.c.h.b16 %v530
        %v637 = vunpack.c.l.b16 %v531
        %v638 = vunpack.c.h.b16 %v531
        %v639 = vunpack.c.l.b16 %v532
        %v640 = vunpack.c.h.b16 %v532
        %v641 = vunpack.c.l.b16 %v533
        %v642 = vunpack.c.h.b16 %v533
        %v643 = vunpack.c.l.b16 %v534
        %v644 = vunpack.c.h.b16 %v534
        %v645 = vunpack.c.l.b16 %v535
        %v646 = vunpack.c.h.b16 %v535
        %v647 = vunpack.c.l.b16 %v536
        %v648 = vunpack.c.h.b16 %v536
        %v649 = vunpack.c.l.b16 %v537
        %v650 = vunpack.c.h.b16 %v537
        %v651 = vunpack.c.l.b16 %v538
        %v652 = vunpack.c.h.b16 %v538
        %v653 = vunpack.c.l.b16 %v539
        %v654 = vunpack.c.h.b16 %v539
        %v655 = vunpack.c.l.b16 %v540
        %v656 = vunpack.c.h.b16 %v540
        %v657 = vunpack.c.l.b16 %v541
        %v658 = vunpack.c.h.b16 %v541
        %v659 = vunpack.c.l.b16 %v542
        %v660 = vunpack.c.h.b16 %v542
        %v661 = vunpack.c.l.b16 %v543
        %v662 = vunpack.c.h.b16 %v543
        %v663 = vunpack.c.l.b16 %v544
        %v664 = vunpack.c.h.b16 %v544
        %v665 = vunpack.c.l.b16 %v545
        %v666 = vunpack.c.h.b16 %v545
        %v667 = vunpack.c.l.b16 %v546
        %v668 = vunpack.c.h.b16 %v546
        %v669 = vunpack.c.l.b16 %v547
        %v670 = vunpack.c.h.b16 %v547
        %v671 = vunpack.c.l.b16 %v548
        %v672 = vunpack.c.h.b16 %v548
        %v673 = vunpack.c.l.b16 %v549
        %v674 = vunpack.c.h.b16 %v549
        %v675 = vunpack.c.l.b16 %v550
        %v676 = vunpack.c.h.b16 %v550
        %v677 = vunpack.c.l.b16 %v551
        %v678 = vunpack.c.h.b16 %v551
        %v679 = vunpack.c.l.b16 %v552
        %v680 = vunpack.c.h.b16 %v552
        %v681 = vunpack.c.l.b16 %v553
        %v682 = vunpack.c.h.b16 %v553
        %v683 = vunpack.c.l.b16 %v554
        %v684 = vunpack.c.h.b16 %v554
        %v685 = vpack.c.b16 %v625, %v621
        %v686 = vpack.c.b16 %v626, %v622
        %v687 = vpack.c.b16 %v627, %v623
        %v688 = vpack.c.b16 %v628, %v624
        %v689 = vpack.c.b16 %v633, %v629
        %v690 = vpack.c.b16 %v634, %v630
        %v691 = vpack.c.b16 %v635, %v631
        %v692 = vpack.c.b16 %v636, %v632
        %v693 = vpack.c.b16 %v641, %v637
        %v694 = vpack.c.b16 %v642, %v638
        %v695 = vpack.c.b16 %v643, %v639
        %v696 = vpack.c.b16 %v644, %v640
        %v697 = vpack.c.b16 %v649, %v645
        %v698 = vpack.c.b16 %v650, %v646
        %v699 = vpack.c.b16 %v651, %v647
        %v700 = vpack.c.b16 %v652, %v648
        %v701 = vpack.c.b16 %v657, %v653
        %v702 = vpack.c.b16 %v658, %v654
        %v703 = vpack.c.b16 %v659, %v655
        %v704 = vpack.c.b16 %v660, %v656
        %v705 = vpack.c.b16 %v665, %v661
        %v706 = vpack.c.b16 %v666, %v662
        %v707 = vpack.c.b16 %v667, %v663
        %v708 = vpack.c.b16 %v668, %v664
        %v709 = vpack.c.b16 %v673, %v669
        %v710 = vpack.c.b16 %v674, %v670
        %v711 = vpack.c.b16 %v675, %v671
        %v712 = vpack.c.b16 %v676, %v672
        %v713 = vpack.c.b16 %v681, %v677
        %v714 = vpack.c.b16 %v682, %v678
        %v715 = vpack.c.b16 %v683, %v679
        %v716 = vpack.c.b16 %v684, %v680
        %749 = vmatprep.subr.bf16.mxu0 %v686
        %750 = vmatpush1.bf16.msra.mxu0 %v685
        %751 = vmatprep.subr.bf16.mxu0 %v690
        %752 = vmatpush1.bf16.msra.mxu0 %v689
        %753 = vmatprep.subr.bf16.mxu0 %v694
        %754 = vmatpush1.bf16.msra.mxu0 %v693
        %755 = vmatprep.subr.bf16.mxu0 %v698
        %756 = vmatpush1.bf16.msra.mxu0 %v697
        %757 = vmatprep.subr.bf16.mxu0 %v702
        %758 = vmatpush1.bf16.msra.mxu0 %v701
        %759 = vmatprep.subr.bf16.mxu0 %v706
        %760 = vmatpush1.bf16.msra.mxu0 %v705
        %761 = vmatprep.subr.bf16.mxu0 %v710
        %762 = vmatpush1.bf16.msra.mxu0 %v709
        %763 = vmatprep.subr.bf16.mxu0 %v714
        %764 = vmatpush1.bf16.msra.mxu0 %v713
        %765 = vmatprep.subr.bf16.mxu0 0
        %766 = vmatpush1.bf16.msra.mxu0 0
        %767 = vmatprep.subr.bf16.mxu0 0
        %768 = vmatpush1.bf16.msra.mxu0 0
        %769 = vmatprep.subr.bf16.mxu0 0
        %770 = vmatpush1.bf16.msra.mxu0 0
        %771 = vmatprep.subr.bf16.mxu0 0
        %772 = vmatpush1.bf16.msra.mxu0 0
        %773 = vmatprep.subr.bf16.mxu0 0
        %774 = vmatpush1.bf16.msra.mxu0 0
        %775 = vmatprep.subr.bf16.mxu0 0
        %776 = vmatpush1.bf16.msra.mxu0 0
        %777 = vmatprep.subr.bf16.mxu0 0
        %778 = vmatpush1.bf16.msra.mxu0 0
        %779 = vmatprep.subr.bf16.mxu0 0
        %780 = vmatpush1.bf16.msra.mxu0 0
        %781 = vmatprep.mubr.bf16.mxu0 0
        %782 = vmatmul.mubr.bf16.gmra.mrb[0].mxu0 %v585
        %v783 = vpop.f32.mrb[0].mxu0
        %v784 = vadd.f32 %v560, %v783
        %v785 = vpop.f32.mrb[0].mxu0
        %v786 = vadd.f32 %v564, %v785
        %v787 = vpop.f32.mrb[0].mxu0
        %v788 = vadd.f32 %v560, %v787
        %v789 = vpop.f32.mrb[0].mxu0
        %v790 = vadd.f32 %v564, %v789
        %791 = vmatprep.mubr.bf16.mxu0 0
        %792 = vmatmul.mubr.bf16.gmra.mrb[0].mxu0 %v586
        %v793 = vpop.f32.mrb[0].mxu0
        %v794 = vadd.f32 %v560, %v793
        %v795 = vpop.f32.mrb[0].mxu0
        %v796 = vadd.f32 %v564, %v795
        %v797 = vpop.f32.mrb[0].mxu0
        %v798 = vadd.f32 %v560, %v797
        %v799 = vpop.f32.mrb[0].mxu0
        %v800 = vadd.f32 %v564, %v799
        %801 = vdwg.mxu0
        %802 = vmatprep.subr.bf16.mxu0 %v688
        %803 = vmatpush1.bf16.msra.mxu0 %v687
        %804 = vmatprep.subr.bf16.mxu0 %v692
        %805 = vmatpush1.bf16.msra.mxu0 %v691
        %806 = vmatprep.subr.bf16.mxu0 %v696
        %807 = vmatpush1.bf16.msra.mxu0 %v695
        %808 = vmatprep.subr.bf16.mxu0 %v700
        %809 = vmatpush1.bf16.msra.mxu0 %v699
        %810 = vmatprep.subr.bf16.mxu0 %v704
        %811 = vmatpush1.bf16.msra.mxu0 %v703
        %812 = vmatprep.subr.bf16.mxu0 %v708
        %813 = vmatpush1.bf16.msra.mxu0 %v707
        %814 = vmatprep.subr.bf16.mxu0 %v712
        %815 = vmatpush1.bf16.msra.mxu0 %v711
        %816 = vmatprep.subr.bf16.mxu0 %v716
        %817 = vmatpush1.bf16.msra.mxu0 %v715
        %818 = vmatprep.subr.bf16.mxu0 0
        %819 = vmatpush1.bf16.msra.mxu0 0
        %820 = vmatprep.subr.bf16.mxu0 0
        %821 = vmatpush1.bf16.msra.mxu0 0
        %822 = vmatprep.subr.bf16.mxu0 0
        %823 = vmatpush1.bf16.msra.mxu0 0
        %824 = vmatprep.subr.bf16.mxu0 0
        %825 = vmatpush1.bf16.msra.mxu0 0
        %826 = vmatprep.subr.bf16.mxu0 0
        %827 = vmatpush1.bf16.msra.mxu0 0
        %828 = vmatprep.subr.bf16.mxu0 0
        %829 = vmatpush1.bf16.msra.mxu0 0
        %830 = vmatprep.subr.bf16.mxu0 0
        %831 = vmatpush1.bf16.msra.mxu0 0
        %832 = vmatprep.subr.bf16.mxu0 0
        %833 = vmatpush1.bf16.msra.mxu0 0
        %834 = vmatprep.mubr.bf16.mxu0 0
        %835 = vmatmul.mubr.bf16.gmra.mrb[0].mxu0 %v585
        %v836 = vpop.f32.mrb[0].mxu0
        %v837 = vadd.f32 %v568, %v836
        %v838 = vpop.f32.mrb[0].mxu0
        %v839 = vadd.f32 %v572, %v838
        %v840 = vpop.f32.mrb[0].mxu0
        %v841 = vadd.f32 %v568, %v840
        %v842 = vpop.f32.mrb[0].mxu0
        %v843 = vadd.f32 %v572, %v842
        %844 = vmatprep.mubr.bf16.mxu0 0
        %845 = vmatmul.mubr.bf16.gmra.mrb[0].mxu0 %v586
        %v846 = vpop.f32.mrb[0].mxu0
        %v847 = vadd.f32 %v568, %v846
        %v848 = vpop.f32.mrb[0].mxu0
        %v849 = vadd.f32 %v572, %v848
        %v850 = vpop.f32.mrb[0].mxu0
        %v851 = vadd.f32 %v568, %v850
        %v852 = vpop.f32.mrb[0].mxu0
        %v853 = vadd.f32 %v572, %v852
        %854 = vdwg.mxu0
        %v855 = vld [vmem:[%s449] sm:$0xf]
        %v856 = vld [vmem:[%s449 + $0x4] sm:$0xf]
        %v857 = vld [vmem:[%s449 + $0x8] sm:$0xf]
        %v858 = vld [vmem:[%s449 + $0xc] sm:$0xf]
        %v859 = vld [vmem:[#allocation10] sm:$0xff]
        %v860 = vld [vmem:[#allocation10 + $0x8] sm:$0xff]
        %v861 = vld [vmem:[#allocation10 + $0x10] sm:$0xff]
        %v862 = vld [vmem:[#allocation10 + $0x18] sm:$0xff]
        %v863 = vld [vmem:[#allocation10 + $0x20] sm:$0xff]
        %v864 = vld [vmem:[#allocation10 + $0x28] sm:$0xff]
        %v865 = vld [vmem:[#allocation10 + $0x30] sm:$0xff]
        %v866 = vld [vmem:[#allocation10 + $0x38] sm:$0xff]
        %v867 = vld [vmem:[#allocation10 + $0x40] sm:$0xff]
        %v868 = vld [vmem:[#allocation10 + $0x48] sm:$0xff]
        %v869 = vld [vmem:[#allocation10 + $0x50] sm:$0xff]
        %v870 = vld [vmem:[#allocation10 + $0x58] sm:$0xff]
        %v871 = vld [vmem:[#allocation10 + $0x60] sm:$0xff]
        %v872 = vld [vmem:[#allocation10 + $0x68] sm:$0xff]
        %v873 = vld [vmem:[#allocation10 + $0x70] sm:$0xff]
        %v874 = vld [vmem:[#allocation10 + $0x78] sm:$0xff]
        %v875 = vld [vmem:[#allocation10 + $0x80] sm:$0xff]
        %v876 = vld [vmem:[#allocation10 + $0x88] sm:$0xff]
        %v877 = vld [vmem:[#allocation10 + $0x90] sm:$0xff]
        %v878 = vld [vmem:[#allocation10 + $0x98] sm:$0xff]
        %v879 = vld [vmem:[#allocation10 + $0xa0] sm:$0xff]
        %v880 = vld [vmem:[#allocation10 + $0xa8] sm:$0xff]
        %v881 = vld [vmem:[#allocation10 + $0xb0] sm:$0xff]
        %v882 = vld [vmem:[#allocation10 + $0xb8] sm:$0xff]
        %v883 = vld [vmem:[#allocation10 + $0xc0] sm:$0xff]
        %v884 = vld [vmem:[#allocation10 + $0xc8] sm:$0xff]
        %v885 = vld [vmem:[#allocation10 + $0xd0] sm:$0xff]
        %v886 = vld [vmem:[#allocation10 + $0xd8] sm:$0xff]
        %v887 = vld [vmem:[#allocation10 + $0xe0] sm:$0xff]
        %v888 = vld [vmem:[#allocation10 + $0xe8] sm:$0xff]
        %v889 = vld [vmem:[#allocation10 + $0xf0] sm:$0xff]
        %v890 = vld [vmem:[#allocation10 + $0xf8] sm:$0xff]
        %v891 = vld [vmem:[%s6] sm:$0xf]
        %v893 = vlaneseq
        %v894 = vshrl.u32 %v893, 7
        %v895 = vsub.s32 0, %v894
        %v896 = vrot.slane %v891, %v895
        %v897 = vlaneseq
        %v898 = vshrl.u32 %v897, 7
        %v899 = vsub.s32 1, %v898
        %v900 = vrot.slane %v891, %v899
        %v901 = vlaneseq
        %v902 = vshrl.u32 %v901, 7
        %v903 = vsub.s32 2, %v902
        %v904 = vrot.slane %v891, %v903
        %v905 = vlaneseq
        %v906 = vshrl.u32 %v905, 7
        %v907 = vsub.s32 3, %v906
        %v908 = vrot.slane %v891, %v907
        %v917 = vunpack.c.l.b16 %v855
        %v918 = vunpack.c.l.b16 %v856
        %v919 = vunpack.c.l.b16 %v857
        %v920 = vunpack.c.l.b16 %v858
        %v921 = vpack.c.b16 %v918, %v917
        %v922 = vpack.c.b16 %v920, %v919
        %v957 = vunpack.c.l.b16 %v859
        %v958 = vunpack.c.h.b16 %v859
        %v959 = vunpack.c.l.b16 %v860
        %v960 = vunpack.c.h.b16 %v860
        %v961 = vunpack.c.l.b16 %v861
        %v962 = vunpack.c.h.b16 %v861
        %v963 = vunpack.c.l.b16 %v862
        %v964 = vunpack.c.h.b16 %v862
        %v965 = vunpack.c.l.b16 %v863
        %v966 = vunpack.c.h.b16 %v863
        %v967 = vunpack.c.l.b16 %v864
        %v968 = vunpack.c.h.b16 %v864
        %v969 = vunpack.c.l.b16 %v865
        %v970 = vunpack.c.h.b16 %v865
        %v971 = vunpack.c.l.b16 %v866
        %v972 = vunpack.c.h.b16 %v866
        %v973 = vunpack.c.l.b16 %v867
        %v974 = vunpack.c.h.b16 %v867
        %v975 = vunpack.c.l.b16 %v868
        %v976 = vunpack.c.h.b16 %v868
        %v977 = vunpack.c.l.b16 %v869
        %v978 = vunpack.c.h.b16 %v869
        %v979 = vunpack.c.l.b16 %v870
        %v980 = vunpack.c.h.b16 %v870
        %v981 = vunpack.c.l.b16 %v871
        %v982 = vunpack.c.h.b16 %v871
        %v983 = vunpack.c.l.b16 %v872
        %v984 = vunpack.c.h.b16 %v872
        %v985 = vunpack.c.l.b16 %v873
        %v986 = vunpack.c.h.b16 %v873
        %v987 = vunpack.c.l.b16 %v874
        %v988 = vunpack.c.h.b16 %v874
        %v989 = vunpack.c.l.b16 %v875
        %v990 = vunpack.c.h.b16 %v875
        %v991 = vunpack.c.l.b16 %v876
        %v992 = vunpack.c.h.b16 %v876
        %v993 = vunpack.c.l.b16 %v877
        %v994 = vunpack.c.h.b16 %v877
        %v995 = vunpack.c.l.b16 %v878
        %v996 = vunpack.c.h.b16 %v878
        %v997 = vunpack.c.l.b16 %v879
        %v998 = vunpack.c.h.b16 %v879
        %v999 = vunpack.c.l.b16 %v880
        %v1000 = vunpack.c.h.b16 %v880
        %v1001 = vunpack.c.l.b16 %v881
        %v1002 = vunpack.c.h.b16 %v881
        %v1003 = vunpack.c.l.b16 %v882
        %v1004 = vunpack.c.h.b16 %v882
        %v1005 = vunpack.c.l.b16 %v883
        %v1006 = vunpack.c.h.b16 %v883
        %v1007 = vunpack.c.l.b16 %v884
        %v1008 = vunpack.c.h.b16 %v884
        %v1009 = vunpack.c.l.b16 %v885
        %v1010 = vunpack.c.h.b16 %v885
        %v1011 = vunpack.c.l.b16 %v886
        %v1012 = vunpack.c.h.b16 %v886
        %v1013 = vunpack.c.l.b16 %v887
        %v1014 = vunpack.c.h.b16 %v887
        %v1015 = vunpack.c.l.b16 %v888
        %v1016 = vunpack.c.h.b16 %v888
        %v1017 = vunpack.c.l.b16 %v889
        %v1018 = vunpack.c.h.b16 %v889
        %v1019 = vunpack.c.l.b16 %v890
        %v1020 = vunpack.c.h.b16 %v890
        %v1021 = vpack.c.b16 %v961, %v957
        %v1022 = vpack.c.b16 %v962, %v958
        %v1023 = vpack.c.b16 %v963, %v959
        %v1024 = vpack.c.b16 %v964, %v960
        %v1025 = vpack.c.b16 %v969, %v965
        %v1026 = vpack.c.b16 %v970, %v966
        %v1027 = vpack.c.b16 %v971, %v967
        %v1028 = vpack.c.b16 %v972, %v968
        %v1029 = vpack.c.b16 %v977, %v973
        %v1030 = vpack.c.b16 %v978, %v974
        %v1031 = vpack.c.b16 %v979, %v975
        %v1032 = vpack.c.b16 %v980, %v976
        %v1033 = vpack.c.b16 %v985, %v981
        %v1034 = vpack.c.b16 %v986, %v982
        %v1035 = vpack.c.b16 %v987, %v983
        %v1036 = vpack.c.b16 %v988, %v984
        %v1037 = vpack.c.b16 %v993, %v989
        %v1038 = vpack.c.b16 %v994, %v990
        %v1039 = vpack.c.b16 %v995, %v991
        %v1040 = vpack.c.b16 %v996, %v992
        %v1041 = vpack.c.b16 %v1001, %v997
        %v1042 = vpack.c.b16 %v1002, %v998
        %v1043 = vpack.c.b16 %v1003, %v999
        %v1044 = vpack.c.b16 %v1004, %v1000
        %v1045 = vpack.c.b16 %v1009, %v1005
        %v1046 = vpack.c.b16 %v1010, %v1006
        %v1047 = vpack.c.b16 %v1011, %v1007
        %v1048 = vpack.c.b16 %v1012, %v1008
        %v1049 = vpack.c.b16 %v1017, %v1013
        %v1050 = vpack.c.b16 %v1018, %v1014
        %v1051 = vpack.c.b16 %v1019, %v1015
        %v1052 = vpack.c.b16 %v1020, %v1016
        %1085 = vmatprep.subr.bf16.mxu0 %v1022
        %1086 = vmatpush1.bf16.msra.mxu0 %v1021
        %1087 = vmatprep.subr.bf16.mxu0 %v1026
        %1088 = vmatpush1.bf16.msra.mxu0 %v1025
        %1089 = vmatprep.subr.bf16.mxu0 %v1030
        %1090 = vmatpush1.bf16.msra.mxu0 %v1029
        %1091 = vmatprep.subr.bf16.mxu0 %v1034
        %1092 = vmatpush1.bf16.msra.mxu0 %v1033
        %1093 = vmatprep.subr.bf16.mxu0 %v1038
        %1094 = vmatpush1.bf16.msra.mxu0 %v1037
        %1095 = vmatprep.subr.bf16.mxu0 %v1042
        %1096 = vmatpush1.bf16.msra.mxu0 %v1041
        %1097 = vmatprep.subr.bf16.mxu0 %v1046
        %1098 = vmatpush1.bf16.msra.mxu0 %v1045
        %1099 = vmatprep.subr.bf16.mxu0 %v1050
        %1100 = vmatpush1.bf16.msra.mxu0 %v1049
        %1101 = vmatprep.subr.bf16.mxu0 0
        %1102 = vmatpush1.bf16.msra.mxu0 0
        %1103 = vmatprep.subr.bf16.mxu0 0
        %1104 = vmatpush1.bf16.msra.mxu0 0
        %1105 = vmatprep.subr.bf16.mxu0 0
        %1106 = vmatpush1.bf16.msra.mxu0 0
        %1107 = vmatprep.subr.bf16.mxu0 0
        %1108 = vmatpush1.bf16.msra.mxu0 0
        %1109 = vmatprep.subr.bf16.mxu0 0
        %1110 = vmatpush1.bf16.msra.mxu0 0
        %1111 = vmatprep.subr.bf16.mxu0 0
        %1112 = vmatpush1.bf16.msra.mxu0 0
        %1113 = vmatprep.subr.bf16.mxu0 0
        %1114 = vmatpush1.bf16.msra.mxu0 0
        %1115 = vmatprep.subr.bf16.mxu0 0
        %1116 = vmatpush1.bf16.msra.mxu0 0
        %1117 = vmatprep.mubr.bf16.mxu0 0
        %1118 = vmatmul.mubr.bf16.gmra.mrb[0].mxu0 %v921
        %v1119 = vpop.f32.mrb[0].mxu0
        %v1120 = vadd.f32 %v896, %v1119
        %v1121 = vpop.f32.mrb[0].mxu0
        %v1122 = vadd.f32 %v900, %v1121
        %v1123 = vpop.f32.mrb[0].mxu0
        %v1124 = vadd.f32 %v896, %v1123
        %v1125 = vpop.f32.mrb[0].mxu0
        %v1126 = vadd.f32 %v900, %v1125
        %1127 = vmatprep.mubr.bf16.mxu0 0
        %1128 = vmatmul.mubr.bf16.gmra.mrb[0].mxu0 %v922
        %v1129 = vpop.f32.mrb[0].mxu0
        %v1130 = vadd.f32 %v896, %v1129
        %v1131 = vpop.f32.mrb[0].mxu0
        %v1132 = vadd.f32 %v900, %v1131
        %v1133 = vpop.f32.mrb[0].mxu0
        %v1134 = vadd.f32 %v896, %v1133
        %v1135 = vpop.f32.mrb[0].mxu0
        %v1136 = vadd.f32 %v900, %v1135
        %1137 = vdwg.mxu0
        %1138 = vmatprep.subr.bf16.mxu0 %v1024
        %1139 = vmatpush1.bf16.msra.mxu0 %v1023
        %1140 = vmatprep.subr.bf16.mxu0 %v1028
        %1141 = vmatpush1.bf16.msra.mxu0 %v1027
        %1142 = vmatprep.subr.bf16.mxu0 %v1032
        %1143 = vmatpush1.bf16.msra.mxu0 %v1031
        %1144 = vmatprep.subr.bf16.mxu0 %v1036
        %1145 = vmatpush1.bf16.msra.mxu0 %v1035
        %1146 = vmatprep.subr.bf16.mxu0 %v1040
        %1147 = vmatpush1.bf16.msra.mxu0 %v1039
        %1148 = vmatprep.subr.bf16.mxu0 %v1044
        %1149 = vmatpush1.bf16.msra.mxu0 %v1043
        %1150 = vmatprep.subr.bf16.mxu0 %v1048
        %1151 = vmatpush1.bf16.msra.mxu0 %v1047
        %1152 = vmatprep.subr.bf16.mxu0 %v1052
        %1153 = vmatpush1.bf16.msra.mxu0 %v1051
        %1154 = vmatprep.subr.bf16.mxu0 0
        %1155 = vmatpush1.bf16.msra.mxu0 0
        %1156 = vmatprep.subr.bf16.mxu0 0
        %1157 = vmatpush1.bf16.msra.mxu0 0
        %1158 = vmatprep.subr.bf16.mxu0 0
        %1159 = vmatpush1.bf16.msra.mxu0 0
        %1160 = vmatprep.subr.bf16.mxu0 0
        %1161 = vmatpush1.bf16.msra.mxu0 0
        %1162 = vmatprep.subr.bf16.mxu0 0
        %1163 = vmatpush1.bf16.msra.mxu0 0
        %1164 = vmatprep.subr.bf16.mxu0 0
        %1165 = vmatpush1.bf16.msra.mxu0 0
        %1166 = vmatprep.subr.bf16.mxu0 0
        %1167 = vmatpush1.bf16.msra.mxu0 0
        %1168 = vmatprep.subr.bf16.mxu0 0
        %1169 = vmatpush1.bf16.msra.mxu0 0
        %1170 = vmatprep.mubr.bf16.mxu0 0
        %1171 = vmatmul.mubr.bf16.gmra.mrb[0].mxu0 %v921
        %v1172 = vpop.f32.mrb[0].mxu0
        %v1173 = vadd.f32 %v904, %v1172
        %v1174 = vpop.f32.mrb[0].mxu0
        %v1175 = vadd.f32 %v908, %v1174
        %v1176 = vpop.f32.mrb[0].mxu0
        %v1177 = vadd.f32 %v904, %v1176
        %v1178 = vpop.f32.mrb[0].mxu0
        %v1179 = vadd.f32 %v908, %v1178
        %1180 = vmatprep.mubr.bf16.mxu0 0
        %1181 = vmatmul.mubr.bf16.gmra.mrb[0].mxu0 %v922
        %v1182 = vpop.f32.mrb[0].mxu0
        %v1183 = vadd.f32 %v904, %v1182
        %v1184 = vpop.f32.mrb[0].mxu0
        %v1185 = vadd.f32 %v908, %v1184
        %v1186 = vpop.f32.mrb[0].mxu0
        %v1187 = vadd.f32 %v904, %v1186
        %v1188 = vpop.f32.mrb[0].mxu0
        %v1189 = vadd.f32 %v908, %v1188
        %1190 = vdwg.mxu0
        %v1191 = vld [vmem:[#allocation12] sm:$0xff]
        %v1192 = vld [vmem:[#allocation12 + $0x8] sm:$0xff]
        %v1193 = vld [vmem:[#allocation12 + $0x10] sm:$0xff]
        %v1194 = vld [vmem:[#allocation12 + $0x18] sm:$0xff]
        %v1195 = vld [vmem:[#allocation12 + $0x20] sm:$0xff]
        %v1196 = vld [vmem:[#allocation12 + $0x28] sm:$0xff]
        %v1197 = vld [vmem:[#allocation12 + $0x30] sm:$0xff]
        %v1198 = vld [vmem:[#allocation12 + $0x38] sm:$0xff]
        %v1199 = vld [vmem:[#allocation12 + $0x40] sm:$0xff]
        %v1200 = vld [vmem:[#allocation12 + $0x48] sm:$0xff]
        %v1201 = vld [vmem:[#allocation12 + $0x50] sm:$0xff]
        %v1202 = vld [vmem:[#allocation12 + $0x58] sm:$0xff]
        %v1203 = vld [vmem:[#allocation12 + $0x60] sm:$0xff]
        %v1204 = vld [vmem:[#allocation12 + $0x68] sm:$0xff]
        %v1205 = vld [vmem:[#allocation12 + $0x70] sm:$0xff]
        %v1206 = vld [vmem:[#allocation12 + $0x78] sm:$0xff]
        %v1207 = vld [vmem:[#allocation12 + $0x80] sm:$0xff]
        %v1208 = vld [vmem:[#allocation12 + $0x88] sm:$0xff]
        %v1209 = vld [vmem:[#allocation12 + $0x90] sm:$0xff]
        %v1210 = vld [vmem:[#allocation12 + $0x98] sm:$0xff]
        %v1211 = vld [vmem:[#allocation12 + $0xa0] sm:$0xff]
        %v1212 = vld [vmem:[#allocation12 + $0xa8] sm:$0xff]
        %v1213 = vld [vmem:[#allocation12 + $0xb0] sm:$0xff]
        %v1214 = vld [vmem:[#allocation12 + $0xb8] sm:$0xff]
        %v1215 = vld [vmem:[#allocation12 + $0xc0] sm:$0xff]
        %v1216 = vld [vmem:[#allocation12 + $0xc8] sm:$0xff]
        %v1217 = vld [vmem:[#allocation12 + $0xd0] sm:$0xff]
        %v1218 = vld [vmem:[#allocation12 + $0xd8] sm:$0xff]
        %v1219 = vld [vmem:[#allocation12 + $0xe0] sm:$0xff]
        %v1220 = vld [vmem:[#allocation12 + $0xe8] sm:$0xff]
        %v1221 = vld [vmem:[#allocation12 + $0xf0] sm:$0xff]
        %v1222 = vld [vmem:[#allocation12 + $0xf8] sm:$0xff]
        %v1223 = vld [vmem:[#allocation12 + $0x100] sm:$0xff]
        %v1224 = vld [vmem:[#allocation12 + $0x108] sm:$0xff]
        %v1225 = vld [vmem:[#allocation12 + $0x110] sm:$0xff]
        %v1226 = vld [vmem:[#allocation12 + $0x118] sm:$0xff]
        %v1227 = vld [vmem:[#allocation12 + $0x120] sm:$0xff]
        %v1228 = vld [vmem:[#allocation12 + $0x128] sm:$0xff]
        %v1229 = vld [vmem:[#allocation12 + $0x130] sm:$0xff]
        %v1230 = vld [vmem:[#allocation12 + $0x138] sm:$0xff]
        %v1231 = vld [vmem:[#allocation12 + $0x140] sm:$0xff]
        %v1232 = vld [vmem:[#allocation12 + $0x148] sm:$0xff]
        %v1233 = vld [vmem:[#allocation12 + $0x150] sm:$0xff]
        %v1234 = vld [vmem:[#allocation12 + $0x158] sm:$0xff]
        %v1235 = vld [vmem:[#allocation12 + $0x160] sm:$0xff]
        %v1236 = vld [vmem:[#allocation12 + $0x168] sm:$0xff]
        %v1237 = vld [vmem:[#allocation12 + $0x170] sm:$0xff]
        %v1238 = vld [vmem:[#allocation12 + $0x178] sm:$0xff]
        %v1239 = vld [vmem:[#allocation12 + $0x180] sm:$0xff]
        %v1240 = vld [vmem:[#allocation12 + $0x188] sm:$0xff]
        %v1241 = vld [vmem:[#allocation12 + $0x190] sm:$0xff]
        %v1242 = vld [vmem:[#allocation12 + $0x198] sm:$0xff]
        %v1243 = vld [vmem:[#allocation12 + $0x1a0] sm:$0xff]
        %v1244 = vld [vmem:[#allocation12 + $0x1a8] sm:$0xff]
        %v1245 = vld [vmem:[#allocation12 + $0x1b0] sm:$0xff]
        %v1246 = vld [vmem:[#allocation12 + $0x1b8] sm:$0xff]
        %v1247 = vld [vmem:[#allocation12 + $0x1c0] sm:$0xff]
        %v1248 = vld [vmem:[#allocation12 + $0x1c8] sm:$0xff]
        %v1249 = vld [vmem:[#allocation12 + $0x1d0] sm:$0xff]
        %v1250 = vld [vmem:[#allocation12 + $0x1d8] sm:$0xff]
        %v1251 = vld [vmem:[#allocation12 + $0x1e0] sm:$0xff]
        %v1252 = vld [vmem:[#allocation12 + $0x1e8] sm:$0xff]
        %v1253 = vld [vmem:[#allocation12 + $0x1f0] sm:$0xff]
        %v1254 = vld [vmem:[#allocation12 + $0x1f8] sm:$0xff]
        %v1255 = vld [vmem:[#allocation12 + $0x200] sm:$0xff]
        %v1256 = vld [vmem:[#allocation12 + $0x208] sm:$0xff]
        %v1257 = vld [vmem:[#allocation12 + $0x210] sm:$0xff]
        %v1258 = vld [vmem:[#allocation12 + $0x218] sm:$0xff]
        %v1259 = vld [vmem:[#allocation12 + $0x220] sm:$0xff]
        %v1260 = vld [vmem:[#allocation12 + $0x228] sm:$0xff]
        %v1261 = vld [vmem:[#allocation12 + $0x230] sm:$0xff]
        %v1262 = vld [vmem:[#allocation12 + $0x238] sm:$0xff]
        %v1263 = vld [vmem:[#allocation12 + $0x240] sm:$0xff]
        %v1264 = vld [vmem:[#allocation12 + $0x248] sm:$0xff]
        %v1265 = vld [vmem:[#allocation12 + $0x250] sm:$0xff]
        %v1266 = vld [vmem:[#allocation12 + $0x258] sm:$0xff]
        %v1267 = vld [vmem:[#allocation12 + $0x260] sm:$0xff]
        %v1268 = vld [vmem:[#allocation12 + $0x268] sm:$0xff]
        %v1269 = vld [vmem:[#allocation12 + $0x270] sm:$0xff]
        %v1270 = vld [vmem:[#allocation12 + $0x278] sm:$0xff]
        %v1271 = vld [vmem:[#allocation12 + $0x280] sm:$0xff]
        %v1272 = vld [vmem:[#allocation12 + $0x288] sm:$0xff]
        %v1273 = vld [vmem:[#allocation12 + $0x290] sm:$0xff]
        %v1274 = vld [vmem:[#allocation12 + $0x298] sm:$0xff]
        %v1275 = vld [vmem:[#allocation12 + $0x2a0] sm:$0xff]
        %v1276 = vld [vmem:[#allocation12 + $0x2a8] sm:$0xff]
        %v1277 = vld [vmem:[#allocation12 + $0x2b0] sm:$0xff]
        %v1278 = vld [vmem:[#allocation12 + $0x2b8] sm:$0xff]
        %v1279 = vld [vmem:[#allocation12 + $0x2c0] sm:$0xff]
        %v1280 = vld [vmem:[#allocation12 + $0x2c8] sm:$0xff]
        %v1281 = vld [vmem:[#allocation12 + $0x2d0] sm:$0xff]
        %v1282 = vld [vmem:[#allocation12 + $0x2d8] sm:$0xff]
        %v1283 = vld [vmem:[#allocation12 + $0x2e0] sm:$0xff]
        %v1284 = vld [vmem:[#allocation12 + $0x2e8] sm:$0xff]
        %v1285 = vld [vmem:[#allocation12 + $0x2f0] sm:$0xff]
        %v1286 = vld [vmem:[#allocation12 + $0x2f8] sm:$0xff]
        %v1287 = vld [vmem:[#allocation12 + $0x300] sm:$0xff]
        %v1288 = vld [vmem:[#allocation12 + $0x308] sm:$0xff]
        %v1289 = vld [vmem:[#allocation12 + $0x310] sm:$0xff]
        %v1290 = vld [vmem:[#allocation12 + $0x318] sm:$0xff]
        %v1291 = vld [vmem:[#allocation12 + $0x320] sm:$0xff]
        %v1292 = vld [vmem:[#allocation12 + $0x328] sm:$0xff]
        %v1293 = vld [vmem:[#allocation12 + $0x330] sm:$0xff]
        %v1294 = vld [vmem:[#allocation12 + $0x338] sm:$0xff]
        %v1295 = vld [vmem:[#allocation12 + $0x340] sm:$0xff]
        %v1296 = vld [vmem:[#allocation12 + $0x348] sm:$0xff]
        %v1297 = vld [vmem:[#allocation12 + $0x350] sm:$0xff]
        %v1298 = vld [vmem:[#allocation12 + $0x358] sm:$0xff]
        %v1299 = vld [vmem:[#allocation12 + $0x360] sm:$0xff]
        %v1300 = vld [vmem:[#allocation12 + $0x368] sm:$0xff]
        %v1301 = vld [vmem:[#allocation12 + $0x370] sm:$0xff]
        %v1302 = vld [vmem:[#allocation12 + $0x378] sm:$0xff]
        %v1303 = vld [vmem:[#allocation12 + $0x380] sm:$0xff]
        %v1304 = vld [vmem:[#allocation12 + $0x388] sm:$0xff]
        %v1305 = vld [vmem:[#allocation12 + $0x390] sm:$0xff]
        %v1306 = vld [vmem:[#allocation12 + $0x398] sm:$0xff]
        %v1307 = vld [vmem:[#allocation12 + $0x3a0] sm:$0xff]
        %v1308 = vld [vmem:[#allocation12 + $0x3a8] sm:$0xff]
        %v1309 = vld [vmem:[#allocation12 + $0x3b0] sm:$0xff]
        %v1310 = vld [vmem:[#allocation12 + $0x3b8] sm:$0xff]
        %v1311 = vld [vmem:[#allocation12 + $0x3c0] sm:$0xff]
        %v1312 = vld [vmem:[#allocation12 + $0x3c8] sm:$0xff]
        %v1313 = vld [vmem:[#allocation12 + $0x3d0] sm:$0xff]
        %v1314 = vld [vmem:[#allocation12 + $0x3d8] sm:$0xff]
        %v1315 = vld [vmem:[#allocation12 + $0x3e0] sm:$0xff]
        %v1316 = vld [vmem:[#allocation12 + $0x3e8] sm:$0xff]
        %v1317 = vld [vmem:[#allocation12 + $0x3f0] sm:$0xff]
        %v1318 = vld [vmem:[#allocation12 + $0x3f8] sm:$0xff]
        %v1319 = vld [vmem:[#allocation2] sm:$0xff]
        %v1320 = vld [vmem:[#allocation3] sm:$0xff]
        %v1321 = vld [vmem:[#allocation3 + $0x8] sm:$0xff]
        %v1323 = vunpack.c.l.b16 %v1319
        %v1324 = vunpack.c.h.b16 %v1319
        %v1325 = vpack.c.b16 %v1323, %v1323
        %v1326 = vpack.c.b16 %v1324, %v1324
        %v1457 = vunpack.c.l.b16 %v1191
        %v1458 = vunpack.c.h.b16 %v1191
        %v1459 = vunpack.c.l.b16 %v1192
        %v1460 = vunpack.c.h.b16 %v1192
        %v1461 = vunpack.c.l.b16 %v1193
        %v1462 = vunpack.c.h.b16 %v1193
        %v1463 = vunpack.c.l.b16 %v1194
        %v1464 = vunpack.c.h.b16 %v1194
        %v1465 = vunpack.c.l.b16 %v1195
        %v1466 = vunpack.c.h.b16 %v1195
        %v1467 = vunpack.c.l.b16 %v1196
        %v1468 = vunpack.c.h.b16 %v1196
        %v1469 = vunpack.c.l.b16 %v1197
        %v1470 = vunpack.c.h.b16 %v1197
        %v1471 = vunpack.c.l.b16 %v1198
        %v1472 = vunpack.c.h.b16 %v1198
        %v1473 = vunpack.c.l.b16 %v1199
        %v1474 = vunpack.c.h.b16 %v1199
        %v1475 = vunpack.c.l.b16 %v1200
        %v1476 = vunpack.c.h.b16 %v1200
        %v1477 = vunpack.c.l.b16 %v1201
        %v1478 = vunpack.c.h.b16 %v1201
        %v1479 = vunpack.c.l.b16 %v1202
        %v1480 = vunpack.c.h.b16 %v1202
        %v1481 = vunpack.c.l.b16 %v1203
        %v1482 = vunpack.c.h.b16 %v1203
        %v1483 = vunpack.c.l.b16 %v1204
        %v1484 = vunpack.c.h.b16 %v1204
        %v1485 = vunpack.c.l.b16 %v1205
        %v1486 = vunpack.c.h.b16 %v1205
        %v1487 = vunpack.c.l.b16 %v1206
        %v1488 = vunpack.c.h.b16 %v1206
        %v1489 = vunpack.c.l.b16 %v1207
        %v1490 = vunpack.c.h.b16 %v1207
        %v1491 = vunpack.c.l.b16 %v1208
        %v1492 = vunpack.c.h.b16 %v1208
        %v1493 = vunpack.c.l.b16 %v1209
        %v1494 = vunpack.c.h.b16 %v1209
        %v1495 = vunpack.c.l.b16 %v1210
        %v1496 = vunpack.c.h.b16 %v1210
        %v1497 = vunpack.c.l.b16 %v1211
        %v1498 = vunpack.c.h.b16 %v1211
        %v1499 = vunpack.c.l.b16 %v1212
        %v1500 = vunpack.c.h.b16 %v1212
        %v1501 = vunpack.c.l.b16 %v1213
        %v1502 = vunpack.c.h.b16 %v1213
        %v1503 = vunpack.c.l.b16 %v1214
        %v1504 = vunpack.c.h.b16 %v1214
        %v1505 = vunpack.c.l.b16 %v1215
        %v1506 = vunpack.c.h.b16 %v1215
        %v1507 = vunpack.c.l.b16 %v1216
        %v1508 = vunpack.c.h.b16 %v1216
        %v1509 = vunpack.c.l.b16 %v1217
        %v1510 = vunpack.c.h.b16 %v1217
        %v1511 = vunpack.c.l.b16 %v1218
        %v1512 = vunpack.c.h.b16 %v1218
        %v1513 = vunpack.c.l.b16 %v1219
        %v1514 = vunpack.c.h.b16 %v1219
        %v1515 = vunpack.c.l.b16 %v1220
        %v1516 = vunpack.c.h.b16 %v1220
        %v1517 = vunpack.c.l.b16 %v1221
        %v1518 = vunpack.c.h.b16 %v1221
        %v1519 = vunpack.c.l.b16 %v1222
        %v1520 = vunpack.c.h.b16 %v1222
        %v1521 = vunpack.c.l.b16 %v1223
        %v1522 = vunpack.c.h.b16 %v1223
        %v1523 = vunpack.c.l.b16 %v1224
        %v1524 = vunpack.c.h.b16 %v1224
        %v1525 = vunpack.c.l.b16 %v1225
        %v1526 = vunpack.c.h.b16 %v1225
        %v1527 = vunpack.c.l.b16 %v1226
        %v1528 = vunpack.c.h.b16 %v1226
        %v1529 = vunpack.c.l.b16 %v1227
        %v1530 = vunpack.c.h.b16 %v1227
        %v1531 = vunpack.c.l.b16 %v1228
        %v1532 = vunpack.c.h.b16 %v1228
        %v1533 = vunpack.c.l.b16 %v1229
        %v1534 = vunpack.c.h.b16 %v1229
        %v1535 = vunpack.c.l.b16 %v1230
        %v1536 = vunpack.c.h.b16 %v1230
        %v1537 = vunpack.c.l.b16 %v1231
        %v1538 = vunpack.c.h.b16 %v1231
        %v1539 = vunpack.c.l.b16 %v1232
        %v1540 = vunpack.c.h.b16 %v1232
        %v1541 = vunpack.c.l.b16 %v1233
        %v1542 = vunpack.c.h.b16 %v1233
        %v1543 = vunpack.c.l.b16 %v1234
        %v1544 = vunpack.c.h.b16 %v1234
        %v1545 = vunpack.c.l.b16 %v1235
        %v1546 = vunpack.c.h.b16 %v1235
        %v1547 = vunpack.c.l.b16 %v1236
        %v1548 = vunpack.c.h.b16 %v1236
        %v1549 = vunpack.c.l.b16 %v1237
        %v1550 = vunpack.c.h.b16 %v1237
        %v1551 = vunpack.c.l.b16 %v1238
        %v1552 = vunpack.c.h.b16 %v1238
        %v1553 = vunpack.c.l.b16 %v1239
        %v1554 = vunpack.c.h.b16 %v1239
        %v1555 = vunpack.c.l.b16 %v1240
        %v1556 = vunpack.c.h.b16 %v1240
        %v1557 = vunpack.c.l.b16 %v1241
        %v1558 = vunpack.c.h.b16 %v1241
        %v1559 = vunpack.c.l.b16 %v1242
        %v1560 = vunpack.c.h.b16 %v1242
        %v1561 = vunpack.c.l.b16 %v1243
        %v1562 = vunpack.c.h.b16 %v1243
        %v1563 = vunpack.c.l.b16 %v1244
        %v1564 = vunpack.c.h.b16 %v1244
        %v1565 = vunpack.c.l.b16 %v1245
        %v1566 = vunpack.c.h.b16 %v1245
        %v1567 = vunpack.c.l.b16 %v1246
        %v1568 = vunpack.c.h.b16 %v1246
        %v1569 = vunpack.c.l.b16 %v1247
        %v1570 = vunpack.c.h.b16 %v1247
        %v1571 = vunpack.c.l.b16 %v1248
        %v1572 = vunpack.c.h.b16 %v1248
        %v1573 = vunpack.c.l.b16 %v1249
        %v1574 = vunpack.c.h.b16 %v1249
        %v1575 = vunpack.c.l.b16 %v1250
        %v1576 = vunpack.c.h.b16 %v1250
        %v1577 = vunpack.c.l.b16 %v1251
        %v1578 = vunpack.c.h.b16 %v1251
        %v1579 = vunpack.c.l.b16 %v1252
        %v1580 = vunpack.c.h.b16 %v1252
        %v1581 = vunpack.c.l.b16 %v1253
        %v1582 = vunpack.c.h.b16 %v1253
        %v1583 = vunpack.c.l.b16 %v1254
        %v1584 = vunpack.c.h.b16 %v1254
        %v1585 = vunpack.c.l.b16 %v1255
        %v1586 = vunpack.c.h.b16 %v1255
        %v1587 = vunpack.c.l.b16 %v1256
        %v1588 = vunpack.c.h.b16 %v1256
        %v1589 = vunpack.c.l.b16 %v1257
        %v1590 = vunpack.c.h.b16 %v1257
        %v1591 = vunpack.c.l.b16 %v1258
        %v1592 = vunpack.c.h.b16 %v1258
        %v1593 = vunpack.c.l.b16 %v1259
        %v1594 = vunpack.c.h.b16 %v1259
        %v1595 = vunpack.c.l.b16 %v1260
        %v1596 = vunpack.c.h.b16 %v1260
        %v1597 = vunpack.c.l.b16 %v1261
        %v1598 = vunpack.c.h.b16 %v1261
        %v1599 = vunpack.c.l.b16 %v1262
        %v1600 = vunpack.c.h.b16 %v1262
        %v1601 = vunpack.c.l.b16 %v1263
        %v1602 = vunpack.c.h.b16 %v1263
        %v1603 = vunpack.c.l.b16 %v1264
        %v1604 = vunpack.c.h.b16 %v1264
        %v1605 = vunpack.c.l.b16 %v1265
        %v1606 = vunpack.c.h.b16 %v1265
        %v1607 = vunpack.c.l.b16 %v1266
        %v1608 = vunpack.c.h.b16 %v1266
        %v1609 = vunpack.c.l.b16 %v1267
        %v1610 = vunpack.c.h.b16 %v1267
        %v1611 = vunpack.c.l.b16 %v1268
        %v1612 = vunpack.c.h.b16 %v1268
        %v1613 = vunpack.c.l.b16 %v1269
        %v1614 = vunpack.c.h.b16 %v1269
        %v1615 = vunpack.c.l.b16 %v1270
        %v1616 = vunpack.c.h.b16 %v1270
        %v1617 = vunpack.c.l.b16 %v1271
        %v1618 = vunpack.c.h.b16 %v1271
        %v1619 = vunpack.c.l.b16 %v1272
        %v1620 = vunpack.c.h.b16 %v1272
        %v1621 = vunpack.c.l.b16 %v1273
        %v1622 = vunpack.c.h.b16 %v1273
        %v1623 = vunpack.c.l.b16 %v1274
        %v1624 = vunpack.c.h.b16 %v1274
        %v1625 = vunpack.c.l.b16 %v1275
        %v1626 = vunpack.c.h.b16 %v1275
        %v1627 = vunpack.c.l.b16 %v1276
        %v1628 = vunpack.c.h.b16 %v1276
        %v1629 = vunpack.c.l.b16 %v1277
        %v1630 = vunpack.c.h.b16 %v1277
        %v1631 = vunpack.c.l.b16 %v1278
        %v1632 = vunpack.c.h.b16 %v1278
        %v1633 = vunpack.c.l.b16 %v1279
        %v1634 = vunpack.c.h.b16 %v1279
        %v1635 = vunpack.c.l.b16 %v1280
        %v1636 = vunpack.c.h.b16 %v1280
        %v1637 = vunpack.c.l.b16 %v1281
        %v1638 = vunpack.c.h.b16 %v1281
        %v1639 = vunpack.c.l.b16 %v1282
        %v1640 = vunpack.c.h.b16 %v1282
        %v1641 = vunpack.c.l.b16 %v1283
        %v1642 = vunpack.c.h.b16 %v1283
        %v1643 = vunpack.c.l.b16 %v1284
        %v1644 = vunpack.c.h.b16 %v1284
        %v1645 = vunpack.c.l.b16 %v1285
        %v1646 = vunpack.c.h.b16 %v1285
        %v1647 = vunpack.c.l.b16 %v1286
        %v1648 = vunpack.c.h.b16 %v1286
        %v1649 = vunpack.c.l.b16 %v1287
        %v1650 = vunpack.c.h.b16 %v1287
        %v1651 = vunpack.c.l.b16 %v1288
        %v1652 = vunpack.c.h.b16 %v1288
        %v1653 = vunpack.c.l.b16 %v1289
        %v1654 = vunpack.c.h.b16 %v1289
        %v1655 = vunpack.c.l.b16 %v1290
        %v1656 = vunpack.c.h.b16 %v1290
        %v1657 = vunpack.c.l.b16 %v1291
        %v1658 = vunpack.c.h.b16 %v1291
        %v1659 = vunpack.c.l.b16 %v1292
        %v1660 = vunpack.c.h.b16 %v1292
        %v1661 = vunpack.c.l.b16 %v1293
        %v1662 = vunpack.c.h.b16 %v1293
        %v1663 = vunpack.c.l.b16 %v1294
        %v1664 = vunpack.c.h.b16 %v1294
        %v1665 = vunpack.c.l.b16 %v1295
        %v1666 = vunpack.c.h.b16 %v1295
        %v1667 = vunpack.c.l.b16 %v1296
        %v1668 = vunpack.c.h.b16 %v1296
        %v1669 = vunpack.c.l.b16 %v1297
        %v1670 = vunpack.c.h.b16 %v1297
        %v1671 = vunpack.c.l.b16 %v1298
        %v1672 = vunpack.c.h.b16 %v1298
        %v1673 = vunpack.c.l.b16 %v1299
        %v1674 = vunpack.c.h.b16 %v1299
        %v1675 = vunpack.c.l.b16 %v1300
        %v1676 = vunpack.c.h.b16 %v1300
        %v1677 = vunpack.c.l.b16 %v1301
        %v1678 = vunpack.c.h.b16 %v1301
        %v1679 = vunpack.c.l.b16 %v1302
        %v1680 = vunpack.c.h.b16 %v1302
        %v1681 = vunpack.c.l.b16 %v1303
        %v1682 = vunpack.c.h.b16 %v1303
        %v1683 = vunpack.c.l.b16 %v1304
        %v1684 = vunpack.c.h.b16 %v1304
        %v1685 = vunpack.c.l.b16 %v1305
        %v1686 = vunpack.c.h.b16 %v1305
        %v1687 = vunpack.c.l.b16 %v1306
        %v1688 = vunpack.c.h.b16 %v1306
        %v1689 = vunpack.c.l.b16 %v1307
        %v1690 = vunpack.c.h.b16 %v1307
        %v1691 = vunpack.c.l.b16 %v1308
        %v1692 = vunpack.c.h.b16 %v1308
        %v1693 = vunpack.c.l.b16 %v1309
        %v1694 = vunpack.c.h.b16 %v1309
        %v1695 = vunpack.c.l.b16 %v1310
        %v1696 = vunpack.c.h.b16 %v1310
        %v1697 = vunpack.c.l.b16 %v1311
        %v1698 = vunpack.c.h.b16 %v1311
        %v1699 = vunpack.c.l.b16 %v1312
        %v1700 = vunpack.c.h.b16 %v1312
        %v1701 = vunpack.c.l.b16 %v1313
        %v1702 = vunpack.c.h.b16 %v1313
        %v1703 = vunpack.c.l.b16 %v1314
        %v1704 = vunpack.c.h.b16 %v1314
        %v1705 = vunpack.c.l.b16 %v1315
        %v1706 = vunpack.c.h.b16 %v1315
        %v1707 = vunpack.c.l.b16 %v1316
        %v1708 = vunpack.c.h.b16 %v1316
        %v1709 = vunpack.c.l.b16 %v1317
        %v1710 = vunpack.c.h.b16 %v1317
        %v1711 = vunpack.c.l.b16 %v1318
        %v1712 = vunpack.c.h.b16 %v1318
        %v1713 = vpack.c.b16 %v1465, %v1457
        %v1714 = vpack.c.b16 %v1466, %v1458
        %v1715 = vpack.c.b16 %v1467, %v1459
        %v1716 = vpack.c.b16 %v1468, %v1460
        %v1717 = vpack.c.b16 %v1469, %v1461
        %v1718 = vpack.c.b16 %v1470, %v1462
        %v1719 = vpack.c.b16 %v1471, %v1463
        %v1720 = vpack.c.b16 %v1472, %v1464
        %v1721 = vpack.c.b16 %v1481, %v1473
        %v1722 = vpack.c.b16 %v1482, %v1474
        %v1723 = vpack.c.b16 %v1483, %v1475
        %v1724 = vpack.c.b16 %v1484, %v1476
        %v1725 = vpack.c.b16 %v1485, %v1477
        %v1726 = vpack.c.b16 %v1486, %v1478
        %v1727 = vpack.c.b16 %v1487, %v1479
        %v1728 = vpack.c.b16 %v1488, %v1480
        %v1729 = vpack.c.b16 %v1497, %v1489
        %v1730 = vpack.c.b16 %v1498, %v1490
        %v1731 = vpack.c.b16 %v1499, %v1491
        %v1732 = vpack.c.b16 %v1500, %v1492
        %v1733 = vpack.c.b16 %v1501, %v1493
        %v1734 = vpack.c.b16 %v1502, %v1494
        %v1735 = vpack.c.b16 %v1503, %v1495
        %v1736 = vpack.c.b16 %v1504, %v1496
        %v1737 = vpack.c.b16 %v1513, %v1505
        %v1738 = vpack.c.b16 %v1514, %v1506
        %v1739 = vpack.c.b16 %v1515, %v1507
        %v1740 = vpack.c.b16 %v1516, %v1508
        %v1741 = vpack.c.b16 %v1517, %v1509
        %v1742 = vpack.c.b16 %v1518, %v1510
        %v1743 = vpack.c.b16 %v1519, %v1511
        %v1744 = vpack.c.b16 %v1520, %v1512
        %v1745 = vpack.c.b16 %v1529, %v1521
        %v1746 = vpack.c.b16 %v1530, %v1522
        %v1747 = vpack.c.b16 %v1531, %v1523
        %v1748 = vpack.c.b16 %v1532, %v1524
        %v1749 = vpack.c.b16 %v1533, %v1525
        %v1750 = vpack.c.b16 %v1534, %v1526
        %v1751 = vpack.c.b16 %v1535, %v1527
        %v1752 = vpack.c.b16 %v1536, %v1528
        %v1753 = vpack.c.b16 %v1545, %v1537
        %v1754 = vpack.c.b16 %v1546, %v1538
        %v1755 = vpack.c.b16 %v1547, %v1539
        %v1756 = vpack.c.b16 %v1548, %v1540
        %v1757 = vpack.c.b16 %v1549, %v1541
        %v1758 = vpack.c.b16 %v1550, %v1542
        %v1759 = vpack.c.b16 %v1551, %v1543
        %v1760 = vpack.c.b16 %v1552, %v1544
        %v1761 = vpack.c.b16 %v1561, %v1553
        %v1762 = vpack.c.b16 %v1562, %v1554
        %v1763 = vpack.c.b16 %v1563, %v1555
        %v1764 = vpack.c.b16 %v1564, %v1556
        %v1765 = vpack.c.b16 %v1565, %v1557
        %v1766 = vpack.c.b16 %v1566, %v1558
        %v1767 = vpack.c.b16 %v1567, %v1559
        %v1768 = vpack.c.b16 %v1568, %v1560
        %v1769 = vpack.c.b16 %v1577, %v1569
        %v1770 = vpack.c.b16 %v1578, %v1570
        %v1771 = vpack.c.b16 %v1579, %v1571
        %v1772 = vpack.c.b16 %v1580, %v1572
        %v1773 = vpack.c.b16 %v1581, %v1573
        %v1774 = vpack.c.b16 %v1582, %v1574
        %v1775 = vpack.c.b16 %v1583, %v1575
        %v1776 = vpack.c.b16 %v1584, %v1576
        %v1777 = vpack.c.b16 %v1593, %v1585
        %v1778 = vpack.c.b16 %v1594, %v1586
        %v1779 = vpack.c.b16 %v1595, %v1587
        %v1780 = vpack.c.b16 %v1596, %v1588
        %v1781 = vpack.c.b16 %v1597, %v1589
        %v1782 = vpack.c.b16 %v1598, %v1590
        %v1783 = vpack.c.b16 %v1599, %v1591
        %v1784 = vpack.c.b16 %v1600, %v1592
        %v1785 = vpack.c.b16 %v1609, %v1601
        %v1786 = vpack.c.b16 %v1610, %v1602
        %v1787 = vpack.c.b16 %v1611, %v1603
        %v1788 = vpack.c.b16 %v1612, %v1604
        %v1789 = vpack.c.b16 %v1613, %v1605
        %v1790 = vpack.c.b16 %v1614, %v1606
        %v1791 = vpack.c.b16 %v1615, %v1607
        %v1792 = vpack.c.b16 %v1616, %v1608
        %v1793 = vpack.c.b16 %v1625, %v1617
        %v1794 = vpack.c.b16 %v1626, %v1618
        %v1795 = vpack.c.b16 %v1627, %v1619
        %v1796 = vpack.c.b16 %v1628, %v1620
        %v1797 = vpack.c.b16 %v1629, %v1621
        %v1798 = vpack.c.b16 %v1630, %v1622
        %v1799 = vpack.c.b16 %v1631, %v1623
        %v1800 = vpack.c.b16 %v1632, %v1624
        %v1801 = vpack.c.b16 %v1641, %v1633
        %v1802 = vpack.c.b16 %v1642, %v1634
        %v1803 = vpack.c.b16 %v1643, %v1635
        %v1804 = vpack.c.b16 %v1644, %v1636
        %v1805 = vpack.c.b16 %v1645, %v1637
        %v1806 = vpack.c.b16 %v1646, %v1638
        %v1807 = vpack.c.b16 %v1647, %v1639
        %v1808 = vpack.c.b16 %v1648, %v1640
        %v1809 = vpack.c.b16 %v1657, %v1649
        %v1810 = vpack.c.b16 %v1658, %v1650
        %v1811 = vpack.c.b16 %v1659, %v1651
        %v1812 = vpack.c.b16 %v1660, %v1652
        %v1813 = vpack.c.b16 %v1661, %v1653
        %v1814 = vpack.c.b16 %v1662, %v1654
        %v1815 = vpack.c.b16 %v1663, %v1655
        %v1816 = vpack.c.b16 %v1664, %v1656
        %v1817 = vpack.c.b16 %v1673, %v1665
        %v1818 = vpack.c.b16 %v1674, %v1666
        %v1819 = vpack.c.b16 %v1675, %v1667
        %v1820 = vpack.c.b16 %v1676, %v1668
        %v1821 = vpack.c.b16 %v1677, %v1669
        %v1822 = vpack.c.b16 %v1678, %v1670
        %v1823 = vpack.c.b16 %v1679, %v1671
        %v1824 = vpack.c.b16 %v1680, %v1672
        %v1825 = vpack.c.b16 %v1689, %v1681
        %v1826 = vpack.c.b16 %v1690, %v1682
        %v1827 = vpack.c.b16 %v1691, %v1683
        %v1828 = vpack.c.b16 %v1692, %v1684
        %v1829 = vpack.c.b16 %v1693, %v1685
        %v1830 = vpack.c.b16 %v1694, %v1686
        %v1831 = vpack.c.b16 %v1695, %v1687
        %v1832 = vpack.c.b16 %v1696, %v1688
        %v1833 = vpack.c.b16 %v1705, %v1697
        %v1834 = vpack.c.b16 %v1706, %v1698
        %v1835 = vpack.c.b16 %v1707, %v1699
        %v1836 = vpack.c.b16 %v1708, %v1700
        %v1837 = vpack.c.b16 %v1709, %v1701
        %v1838 = vpack.c.b16 %v1710, %v1702
        %v1839 = vpack.c.b16 %v1711, %v1703
        %v1840 = vpack.c.b16 %v1712, %v1704
        %1969 = vmatprep.subr.bf16.mxu0 %v1714
        %1970 = vmatpush1.bf16.msra.mxu0 %v1713
        %1971 = vmatprep.subr.bf16.mxu0 %v1722
        %1972 = vmatpush1.bf16.msra.mxu0 %v1721
        %1973 = vmatprep.subr.bf16.mxu0 %v1730
        %1974 = vmatpush1.bf16.msra.mxu0 %v1729
        %1975 = vmatprep.subr.bf16.mxu0 %v1738
        %1976 = vmatpush1.bf16.msra.mxu0 %v1737
        %1977 = vmatprep.subr.bf16.mxu0 %v1746
        %1978 = vmatpush1.bf16.msra.mxu0 %v1745
        %1979 = vmatprep.subr.bf16.mxu0 %v1754
        %1980 = vmatpush1.bf16.msra.mxu0 %v1753
        %1981 = vmatprep.subr.bf16.mxu0 %v1762
        %1982 = vmatpush1.bf16.msra.mxu0 %v1761
        %1983 = vmatprep.subr.bf16.mxu0 %v1770
        %1984 = vmatpush1.bf16.msra.mxu0 %v1769
        %1985 = vmatprep.subr.bf16.mxu0 %v1778
        %1986 = vmatpush1.bf16.msra.mxu0 %v1777
        %1987 = vmatprep.subr.bf16.mxu0 %v1786
        %1988 = vmatpush1.bf16.msra.mxu0 %v1785
        %1989 = vmatprep.subr.bf16.mxu0 %v1794
        %1990 = vmatpush1.bf16.msra.mxu0 %v1793
        %1991 = vmatprep.subr.bf16.mxu0 %v1802
        %1992 = vmatpush1.bf16.msra.mxu0 %v1801
        %1993 = vmatprep.subr.bf16.mxu0 %v1810
        %1994 = vmatpush1.bf16.msra.mxu0 %v1809
        %1995 = vmatprep.subr.bf16.mxu0 %v1818
        %1996 = vmatpush1.bf16.msra.mxu0 %v1817
        %1997 = vmatprep.subr.bf16.mxu0 %v1826
        %1998 = vmatpush1.bf16.msra.mxu0 %v1825
        %1999 = vmatprep.subr.bf16.mxu0 %v1834
        %2000 = vmatpush1.bf16.msra.mxu0 %v1833
        %2001 = vmatprep.mubr.bf16.mxu0 %v1326
        %2002 = vmatmul.mubr.bf16.gmra.mrb[0].mxu0 %v1325
        %v2003 = vpop.f32.mrb[0].mxu0
        %v2004 = vadd.f32 0.0, %v2003
        %v2005 = vpop.f32.mrb[0].mxu0
        %v2006 = vadd.f32 0.0, %v2005
        %v2007 = vpop.f32.mrb[0].mxu0
        %v2008 = vpop.f32.mrb[0].mxu0
        %2009 = vdwg.mxu0
        %2010 = vmatprep.subr.bf16.mxu0 %v1716
        %2011 = vmatpush1.bf16.msra.mxu0 %v1715
        %2012 = vmatprep.subr.bf16.mxu0 %v1724
        %2013 = vmatpush1.bf16.msra.mxu0 %v1723
        %2014 = vmatprep.subr.bf16.mxu0 %v1732
        %2015 = vmatpush1.bf16.msra.mxu0 %v1731
        %2016 = vmatprep.subr.bf16.mxu0 %v1740
        %2017 = vmatpush1.bf16.msra.mxu0 %v1739
        %2018 = vmatprep.subr.bf16.mxu0 %v1748
        %2019 = vmatpush1.bf16.msra.mxu0 %v1747
        %2020 = vmatprep.subr.bf16.mxu0 %v1756
        %2021 = vmatpush1.bf16.msra.mxu0 %v1755
        %2022 = vmatprep.subr.bf16.mxu0 %v1764
        %2023 = vmatpush1.bf16.msra.mxu0 %v1763
        %2024 = vmatprep.subr.bf16.mxu0 %v1772
        %2025 = vmatpush1.bf16.msra.mxu0 %v1771
        %2026 = vmatprep.subr.bf16.mxu0 %v1780
        %2027 = vmatpush1.bf16.msra.mxu0 %v1779
        %2028 = vmatprep.subr.bf16.mxu0 %v1788
        %2029 = vmatpush1.bf16.msra.mxu0 %v1787
        %2030 = vmatprep.subr.bf16.mxu0 %v1796
        %2031 = vmatpush1.bf16.msra.mxu0 %v1795
        %2032 = vmatprep.subr.bf16.mxu0 %v1804
        %2033 = vmatpush1.bf16.msra.mxu0 %v1803
        %2034 = vmatprep.subr.bf16.mxu0 %v1812
        %2035 = vmatpush1.bf16.msra.mxu0 %v1811
        %2036 = vmatprep.subr.bf16.mxu0 %v1820
        %2037 = vmatpush1.bf16.msra.mxu0 %v1819
        %2038 = vmatprep.subr.bf16.mxu0 %v1828
        %2039 = vmatpush1.bf16.msra.mxu0 %v1827
        %2040 = vmatprep.subr.bf16.mxu0 %v1836
        %2041 = vmatpush1.bf16.msra.mxu0 %v1835
        %2042 = vmatprep.mubr.bf16.mxu0 %v1326
        %2043 = vmatmul.mubr.bf16.gmra.mrb[0].mxu0 %v1325
        %v2044 = vpop.f32.mrb[0].mxu0
        %v2045 = vadd.f32 0.0, %v2044
        %v2046 = vpop.f32.mrb[0].mxu0
        %v2047 = vadd.f32 0.0, %v2046
        %v2048 = vpop.f32.mrb[0].mxu0
        %v2049 = vpop.f32.mrb[0].mxu0
        %2050 = vdwg.mxu0
        %2051 = vmatprep.subr.bf16.mxu0 %v1718
        %2052 = vmatpush1.bf16.msra.mxu0 %v1717
        %2053 = vmatprep.subr.bf16.mxu0 %v1726
        %2054 = vmatpush1.bf16.msra.mxu0 %v1725
        %2055 = vmatprep.subr.bf16.mxu0 %v1734
        %2056 = vmatpush1.bf16.msra.mxu0 %v1733
        %2057 = vmatprep.subr.bf16.mxu0 %v1742
        %2058 = vmatpush1.bf16.msra.mxu0 %v1741
        %2059 = vmatprep.subr.bf16.mxu0 %v1750
        %2060 = vmatpush1.bf16.msra.mxu0 %v1749
        %2061 = vmatprep.subr.bf16.mxu0 %v1758
        %2062 = vmatpush1.bf16.msra.mxu0 %v1757
        %2063 = vmatprep.subr.bf16.mxu0 %v1766
        %2064 = vmatpush1.bf16.msra.mxu0 %v1765
        %2065 = vmatprep.subr.bf16.mxu0 %v1774
        %2066 = vmatpush1.bf16.msra.mxu0 %v1773
        %2067 = vmatprep.subr.bf16.mxu0 %v1782
        %2068 = vmatpush1.bf16.msra.mxu0 %v1781
        %2069 = vmatprep.subr.bf16.mxu0 %v1790
        %2070 = vmatpush1.bf16.msra.mxu0 %v1789
        %2071 = vmatprep.subr.bf16.mxu0 %v1798
        %2072 = vmatpush1.bf16.msra.mxu0 %v1797
        %2073 = vmatprep.subr.bf16.mxu0 %v1806
        %2074 = vmatpush1.bf16.msra.mxu0 %v1805
        %2075 = vmatprep.subr.bf16.mxu0 %v1814
        %2076 = vmatpush1.bf16.msra.mxu0 %v1813
        %2077 = vmatprep.subr.bf16.mxu0 %v1822
        %2078 = vmatpush1.bf16.msra.mxu0 %v1821
        %2079 = vmatprep.subr.bf16.mxu0 %v1830
        %2080 = vmatpush1.bf16.msra.mxu0 %v1829
        %2081 = vmatprep.subr.bf16.mxu0 %v1838
        %2082 = vmatpush1.bf16.msra.mxu0 %v1837
        %2083 = vmatprep.mubr.bf16.mxu0 %v1326
        %2084 = vmatmul.mubr.bf16.gmra.mrb[0].mxu0 %v1325
        %v2085 = vpop.f32.mrb[0].mxu0
        %v2086 = vadd.f32 0.0, %v2085
        %v2087 = vpop.f32.mrb[0].mxu0
        %v2088 = vadd.f32 0.0, %v2087
        %v2089 = vpop.f32.mrb[0].mxu0
        %v2090 = vpop.f32.mrb[0].mxu0
        %2091 = vdwg.mxu0
        %2092 = vmatprep.subr.bf16.mxu0 %v1720
        %2093 = vmatpush1.bf16.msra.mxu0 %v1719
        %2094 = vmatprep.subr.bf16.mxu0 %v1728
        %2095 = vmatpush1.bf16.msra.mxu0 %v1727
        %2096 = vmatprep.subr.bf16.mxu0 %v1736
        %2097 = vmatpush1.bf16.msra.mxu0 %v1735
        %2098 = vmatprep.subr.bf16.mxu0 %v1744
        %2099 = vmatpush1.bf16.msra.mxu0 %v1743
        %2100 = vmatprep.subr.bf16.mxu0 %v1752
        %2101 = vmatpush1.bf16.msra.mxu0 %v1751
        %2102 = vmatprep.subr.bf16.mxu0 %v1760
        %2103 = vmatpush1.bf16.msra.mxu0 %v1759
        %2104 = vmatprep.subr.bf16.mxu0 %v1768
        %2105 = vmatpush1.bf16.msra.mxu0 %v1767
        %2106 = vmatprep.subr.bf16.mxu0 %v1776
        %2107 = vmatpush1.bf16.msra.mxu0 %v1775
        %2108 = vmatprep.subr.bf16.mxu0 %v1784
        %2109 = vmatpush1.bf16.msra.mxu0 %v1783
        %2110 = vmatprep.subr.bf16.mxu0 %v1792
        %2111 = vmatpush1.bf16.msra.mxu0 %v1791
        %2112 = vmatprep.subr.bf16.mxu0 %v1800
        %2113 = vmatpush1.bf16.msra.mxu0 %v1799
        %2114 = vmatprep.subr.bf16.mxu0 %v1808
        %2115 = vmatpush1.bf16.msra.mxu0 %v1807
        %2116 = vmatprep.subr.bf16.mxu0 %v1816
        %2117 = vmatpush1.bf16.msra.mxu0 %v1815
        %2118 = vmatprep.subr.bf16.mxu0 %v1824
        %2119 = vmatpush1.bf16.msra.mxu0 %v1823
        %2120 = vmatprep.subr.bf16.mxu0 %v1832
        %2121 = vmatpush1.bf16.msra.mxu0 %v1831
        %2122 = vmatprep.subr.bf16.mxu0 %v1840
        %2123 = vmatpush1.bf16.msra.mxu0 %v1839
        %2124 = vmatprep.mubr.bf16.mxu0 %v1326
        %2125 = vmatmul.mubr.bf16.gmra.mrb[0].mxu0 %v1325
        %v2126 = vpop.f32.mrb[0].mxu0
        %v2127 = vadd.f32 0.0, %v2126
        %v2128 = vpop.f32.mrb[0].mxu0
        %v2129 = vadd.f32 0.0, %v2128
        %v2130 = vpop.f32.mrb[0].mxu0
        %v2131 = vpop.f32.mrb[0].mxu0
        %2132 = vdwg.mxu0
        %v2133 = vadd.f32 %v2004, %v784
        %v2134 = vadd.f32 %v2006, %v786
        %v2135 = vadd.f32 %v2045, %v837
        %v2136 = vadd.f32 %v2047, %v839
        %v2137 = vadd.f32 %v2086, %v1134
        %v2138 = vadd.f32 %v2088, %v1136
        %v2139 = vadd.f32 %v2127, %v1187
        %v2140 = vadd.f32 %v2129, %v1189
        %v2141 = vxor.u32 %v2133, 2147483648
        %v2142 = vxor.u32 %v2134, 2147483648
        %v2143 = vmul.f32 %v2141, 1.442695
        %v2144 = vpow.pop %v2143
        %v2145 = vmul.f32 %v2142, 1.442695
        %v2146 = vpow.pop %v2145
        %v2147 = vadd.f32 %v2144, 1.0
        %v2148 = vadd.f32 %v2146, 1.0
        %v2149 = vrcp.pop %v2147
        %v2150 = vmul.f32 1.0, %v2149
        %v2151 = vrcp.pop %v2148
        %v2152 = vmul.f32 1.0, %v2151
        %v2153 = vtanh.pop %v2135
        %v2154 = vxor.u32 %v2136, 2147483648
        %v2155 = vmul.f32 %v2154, 1.442695
        %v2156 = vpow.pop %v2155
        %v2157 = vadd.f32 %v2156, 1.0
        %v2158 = vrcp.pop %v2157
        %v2159 = vmul.f32 1.0, %v2158
        %v2160 = vxor.u32 %v2137, 2147483648
        %v2161 = vxor.u32 %v2138, 2147483648
        %v2162 = vmul.f32 %v2160, 1.442695
        %v2163 = vpow.pop %v2162
        %v2164 = vmul.f32 %v2161, 1.442695
        %v2165 = vpow.pop %v2164
        %v2166 = vadd.f32 %v2163, 1.0
        %v2167 = vadd.f32 %v2165, 1.0
        %v2168 = vrcp.pop %v2166
        %v2169 = vmul.f32 1.0, %v2168
        %v2170 = vrcp.pop %v2167
        %v2171 = vmul.f32 1.0, %v2170
        %v2172 = vtanh.pop %v2139
        %v2173 = vxor.u32 %v2140, 2147483648
        %v2174 = vmul.f32 %v2173, 1.442695
        %v2175 = vpow.pop %v2174
        %v2176 = vadd.f32 %v2175, 1.0
        %v2177 = vrcp.pop %v2176
        %v2178 = vmul.f32 1.0, %v2177
        %v2179 = vmul.f32 %v2152, %v1320
        %v2180 = vmul.f32 %v2150, %v2153
        %v2181 = vadd.f32 %v2179, %v2180
        %v2182 = vmul.f32 %v2171, %v1321
        %v2183 = vmul.f32 %v2169, %v2172
        %v2184 = vadd.f32 %v2182, %v2183
        %v2185 = vtanh.pop %v2181
        %v2186 = vmul.f32 %v2159, %v2185
        %v2187 = vtanh.pop %v2184
        %v2188 = vmul.f32 %v2178, %v2187
        %v2189 = vpack.c.bf16 %v2186, %v2186
        %v2190 = vpack.c.bf16 %v2188, %v2188
        %2191 = vmatprep.subr.bf16.mxu0 %v1714
        %2192 = vmatpush1.bf16.msra.mxu0 %v1713
        %2193 = vmatprep.subr.bf16.mxu0 %v1722
        %2194 = vmatpush1.bf16.msra.mxu0 %v1721
        %2195 = vmatprep.subr.bf16.mxu0 %v1730
        %2196 = vmatpush1.bf16.msra.mxu0 %v1729
        %2197 = vmatprep.subr.bf16.mxu0 %v1738
        %2198 = vmatpush1.bf16.msra.mxu0 %v1737
        %2199 = vmatprep.subr.bf16.mxu0 %v1746
        %2200 = vmatpush1.bf16.msra.mxu0 %v1745
        %2201 = vmatprep.subr.bf16.mxu0 %v1754
        %2202 = vmatpush1.bf16.msra.mxu0 %v1753
        %2203 = vmatprep.subr.bf16.mxu0 %v1762
        %2204 = vmatpush1.bf16.msra.mxu0 %v1761
        %2205 = vmatprep.subr.bf16.mxu0 %v1770
        %2206 = vmatpush1.bf16.msra.mxu0 %v1769
        %2207 = vmatprep.subr.bf16.mxu0 %v1778
        %2208 = vmatpush1.bf16.msra.mxu0 %v1777
        %2209 = vmatprep.subr.bf16.mxu0 %v1786
        %2210 = vmatpush1.bf16.msra.mxu0 %v1785
        %2211 = vmatprep.subr.bf16.mxu0 %v1794
        %2212 = vmatpush1.bf16.msra.mxu0 %v1793
        %2213 = vmatprep.subr.bf16.mxu0 %v1802
        %2214 = vmatpush1.bf16.msra.mxu0 %v1801
        %2215 = vmatprep.subr.bf16.mxu0 %v1810
        %2216 = vmatpush1.bf16.msra.mxu0 %v1809
        %2217 = vmatprep.subr.bf16.mxu0 %v1818
        %2218 = vmatpush1.bf16.msra.mxu0 %v1817
        %2219 = vmatprep.subr.bf16.mxu0 %v1826
        %2220 = vmatpush1.bf16.msra.mxu0 %v1825
        %2221 = vmatprep.subr.bf16.mxu0 %v1834
        %2222 = vmatpush1.bf16.msra.mxu0 %v1833
        %2223 = vmatprep.mubr.bf16.mxu0 %v2190
        %2224 = vmatmul.mubr.bf16.gmra.mrb[0].mxu0 %v2189
        %v2225 = vpop.f32.mrb[0].mxu0
        %v2226 = vadd.f32 0.0, %v2225
        %v2227 = vpop.f32.mrb[0].mxu0
        %v2228 = vadd.f32 0.0, %v2227
        %v2229 = vpop.f32.mrb[0].mxu0
        %v2230 = vpop.f32.mrb[0].mxu0
        %2231 = vdwg.mxu0
        %2232 = vmatprep.subr.bf16.mxu0 %v1716
        %2233 = vmatpush1.bf16.msra.mxu0 %v1715
        %2234 = vmatprep.subr.bf16.mxu0 %v1724
        %2235 = vmatpush1.bf16.msra.mxu0 %v1723
        %2236 = vmatprep.subr.bf16.mxu0 %v1732
        %2237 = vmatpush1.bf16.msra.mxu0 %v1731
        %2238 = vmatprep.subr.bf16.mxu0 %v1740
        %2239 = vmatpush1.bf16.msra.mxu0 %v1739
        %2240 = vmatprep.subr.bf16.mxu0 %v1748
        %2241 = vmatpush1.bf16.msra.mxu0 %v1747
        %2242 = vmatprep.subr.bf16.mxu0 %v1756
        %2243 = vmatpush1.bf16.msra.mxu0 %v1755
        %2244 = vmatprep.subr.bf16.mxu0 %v1764
        %2245 = vmatpush1.bf16.msra.mxu0 %v1763
        %2246 = vmatprep.subr.bf16.mxu0 %v1772
        %2247 = vmatpush1.bf16.msra.mxu0 %v1771
        %2248 = vmatprep.subr.bf16.mxu0 %v1780
        %2249 = vmatpush1.bf16.msra.mxu0 %v1779
        %2250 = vmatprep.subr.bf16.mxu0 %v1788
        %2251 = vmatpush1.bf16.msra.mxu0 %v1787
        %2252 = vmatprep.subr.bf16.mxu0 %v1796
        %2253 = vmatpush1.bf16.msra.mxu0 %v1795
        %2254 = vmatprep.subr.bf16.mxu0 %v1804
        %2255 = vmatpush1.bf16.msra.mxu0 %v1803
        %2256 = vmatprep.subr.bf16.mxu0 %v1812
        %2257 = vmatpush1.bf16.msra.mxu0 %v1811
        %2258 = vmatprep.subr.bf16.mxu0 %v1820
        %2259 = vmatpush1.bf16.msra.mxu0 %v1819
        %2260 = vmatprep.subr.bf16.mxu0 %v1828
        %2261 = vmatpush1.bf16.msra.mxu0 %v1827
        %2262 = vmatprep.subr.bf16.mxu0 %v1836
        %2263 = vmatpush1.bf16.msra.mxu0 %v1835
        %2264 = vmatprep.mubr.bf16.mxu0 %v2190
        %2265 = vmatmul.mubr.bf16.gmra.mrb[0].mxu0 %v2189
        %v2266 = vpop.f32.mrb[0].mxu0
        %v2267 = vadd.f32 0.0, %v2266
        %v2268 = vpop.f32.mrb[0].mxu0
        %v2269 = vadd.f32 0.0, %v2268
        %v2270 = vpop.f32.mrb[0].mxu0
        %v2271 = vpop.f32.mrb[0].mxu0
        %2272 = vdwg.mxu0
        %2273 = vmatprep.subr.bf16.mxu0 %v1718
        %2274 = vmatpush1.bf16.msra.mxu0 %v1717
        %2275 = vmatprep.subr.bf16.mxu0 %v1726
        %2276 = vmatpush1.bf16.msra.mxu0 %v1725
        %2277 = vmatprep.subr.bf16.mxu0 %v1734
        %2278 = vmatpush1.bf16.msra.mxu0 %v1733
        %2279 = vmatprep.subr.bf16.mxu0 %v1742
        %2280 = vmatpush1.bf16.msra.mxu0 %v1741
        %2281 = vmatprep.subr.bf16.mxu0 %v1750
        %2282 = vmatpush1.bf16.msra.mxu0 %v1749
        %2283 = vmatprep.subr.bf16.mxu0 %v1758
        %2284 = vmatpush1.bf16.msra.mxu0 %v1757
        %2285 = vmatprep.subr.bf16.mxu0 %v1766
        %2286 = vmatpush1.bf16.msra.mxu0 %v1765
        %2287 = vmatprep.subr.bf16.mxu0 %v1774
        %2288 = vmatpush1.bf16.msra.mxu0 %v1773
        %2289 = vmatprep.subr.bf16.mxu0 %v1782
        %2290 = vmatpush1.bf16.msra.mxu0 %v1781
        %2291 = vmatprep.subr.bf16.mxu0 %v1790
        %2292 = vmatpush1.bf16.msra.mxu0 %v1789
        %2293 = vmatprep.subr.bf16.mxu0 %v1798
        %2294 = vmatpush1.bf16.msra.mxu0 %v1797
        %2295 = vmatprep.subr.bf16.mxu0 %v1806
        %2296 = vmatpush1.bf16.msra.mxu0 %v1805
        %2297 = vmatprep.subr.bf16.mxu0 %v1814
        %2298 = vmatpush1.bf16.msra.mxu0 %v1813
        %2299 = vmatprep.subr.bf16.mxu0 %v1822
        %2300 = vmatpush1.bf16.msra.mxu0 %v1821
        %2301 = vmatprep.subr.bf16.mxu0 %v1830
        %2302 = vmatpush1.bf16.msra.mxu0 %v1829
        %2303 = vmatprep.subr.bf16.mxu0 %v1838
        %2304 = vmatpush1.bf16.msra.mxu0 %v1837
        %2305 = vmatprep.mubr.bf16.mxu0 %v2190
        %2306 = vmatmul.mubr.bf16.gmra.mrb[0].mxu0 %v2189
        %v2307 = vpop.f32.mrb[0].mxu0
        %v2308 = vadd.f32 0.0, %v2307
        %v2309 = vpop.f32.mrb[0].mxu0
        %v2310 = vadd.f32 0.0, %v2309
        %v2311 = vpop.f32.mrb[0].mxu0
        %v2312 = vpop.f32.mrb[0].mxu0
        %2313 = vdwg.mxu0
        %2314 = vmatprep.subr.bf16.mxu0 %v1720
        %2315 = vmatpush1.bf16.msra.mxu0 %v1719
        %2316 = vmatprep.subr.bf16.mxu0 %v1728
        %2317 = vmatpush1.bf16.msra.mxu0 %v1727
        %2318 = vmatprep.subr.bf16.mxu0 %v1736
        %2319 = vmatpush1.bf16.msra.mxu0 %v1735
        %2320 = vmatprep.subr.bf16.mxu0 %v1744
        %2321 = vmatpush1.bf16.msra.mxu0 %v1743
        %2322 = vmatprep.subr.bf16.mxu0 %v1752
        %2323 = vmatpush1.bf16.msra.mxu0 %v1751
        %2324 = vmatprep.subr.bf16.mxu0 %v1760
        %2325 = vmatpush1.bf16.msra.mxu0 %v1759
        %2326 = vmatprep.subr.bf16.mxu0 %v1768
        %2327 = vmatpush1.bf16.msra.mxu0 %v1767
        %2328 = vmatprep.subr.bf16.mxu0 %v1776
        %2329 = vmatpush1.bf16.msra.mxu0 %v1775
        %2330 = vmatprep.subr.bf16.mxu0 %v1784
        %2331 = vmatpush1.bf16.msra.mxu0 %v1783
        %2332 = vmatprep.subr.bf16.mxu0 %v1792
        %2333 = vmatpush1.bf16.msra.mxu0 %v1791
        %2334 = vmatprep.subr.bf16.mxu0 %v1800
        %2335 = vmatpush1.bf16.msra.mxu0 %v1799
        %2336 = vmatprep.subr.bf16.mxu0 %v1808
        %2337 = vmatpush1.bf16.msra.mxu0 %v1807
        %2338 = vmatprep.subr.bf16.mxu0 %v1816
        %2339 = vmatpush1.bf16.msra.mxu0 %v1815
        %2340 = vmatprep.subr.bf16.mxu0 %v1824
        %2341 = vmatpush1.bf16.msra.mxu0 %v1823
        %2342 = vmatprep.subr.bf16.mxu0 %v1832
        %2343 = vmatpush1.bf16.msra.mxu0 %v1831
        %2344 = vmatprep.subr.bf16.mxu0 %v1840
        %2345 = vmatpush1.bf16.msra.mxu0 %v1839
        %2346 = vmatprep.mubr.bf16.mxu0 %v2190
        %2347 = vmatmul.mubr.bf16.gmra.mrb[0].mxu0 %v2189
        %v2348 = vpop.f32.mrb[0].mxu0
        %v2349 = vadd.f32 0.0, %v2348
        %v2350 = vpop.f32.mrb[0].mxu0
        %v2351 = vadd.f32 0.0, %v2350
        %v2352 = vpop.f32.mrb[0].mxu0
        %v2353 = vpop.f32.mrb[0].mxu0
        %2354 = vdwg.mxu0
        %v2355 = vadd.f32 %v2226, %v788
        %v2356 = vadd.f32 %v2228, %v790
        %v2357 = vadd.f32 %v2267, %v841
        %v2358 = vadd.f32 %v2269, %v843
        %v2359 = vadd.f32 %v2308, %v1130
        %v2360 = vadd.f32 %v2310, %v1132
        %v2361 = vadd.f32 %v2349, %v1183
        %v2362 = vadd.f32 %v2351, %v1185
        %v2363 = vxor.u32 %v2355, 2147483648
        %v2364 = vxor.u32 %v2356, 2147483648
        %v2365 = vmul.f32 %v2363, 1.442695
        %v2366 = vpow.pop %v2365
        %v2367 = vmul.f32 %v2364, 1.442695
        %v2368 = vpow.pop %v2367
        %v2369 = vadd.f32 %v2366, 1.0
        %v2370 = vadd.f32 %v2368, 1.0
        %v2371 = vrcp.pop %v2369
        %v2372 = vmul.f32 1.0, %v2371
        %v2373 = vrcp.pop %v2370
        %v2374 = vmul.f32 1.0, %v2373
        %v2375 = vtanh.pop %v2357
        %v2376 = vxor.u32 %v2358, 2147483648
        %v2377 = vmul.f32 %v2376, 1.442695
        %v2378 = vpow.pop %v2377
        %v2379 = vadd.f32 %v2378, 1.0
        %v2380 = vrcp.pop %v2379
        %v2381 = vmul.f32 1.0, %v2380
        %v2382 = vxor.u32 %v2359, 2147483648
        %v2383 = vxor.u32 %v2360, 2147483648
        %v2384 = vmul.f32 %v2382, 1.442695
        %v2385 = vpow.pop %v2384
        %v2386 = vmul.f32 %v2383, 1.442695
        %v2387 = vpow.pop %v2386
        %v2388 = vadd.f32 %v2385, 1.0
        %v2389 = vadd.f32 %v2387, 1.0
        %v2390 = vrcp.pop %v2388
        %v2391 = vmul.f32 1.0, %v2390
        %v2392 = vrcp.pop %v2389
        %v2393 = vmul.f32 1.0, %v2392
        %v2394 = vtanh.pop %v2361
        %v2395 = vxor.u32 %v2362, 2147483648
        %v2396 = vmul.f32 %v2395, 1.442695
        %v2397 = vpow.pop %v2396
        %v2398 = vadd.f32 %v2397, 1.0
        %v2399 = vrcp.pop %v2398
        %v2400 = vmul.f32 1.0, %v2399
        %v2401 = vmul.f32 %v2374, %v2181
        %v2402 = vmul.f32 %v2372, %v2375
        %v2403 = vadd.f32 %v2401, %v2402
        %v2404 = vmul.f32 %v2393, %v2184
        %v2405 = vmul.f32 %v2391, %v2394
        %v2406 = vadd.f32 %v2404, %v2405
        %v2407 = vtanh.pop %v2403
        %v2408 = vmul.f32 %v2381, %v2407
        %v2409 = vtanh.pop %v2406
        %v2410 = vmul.f32 %v2400, %v2409
        %v2411 = vpack.c.bf16 %v2408, %v2408
        %v2412 = vpack.c.bf16 %v2410, %v2410
        %2413 = vmatprep.subr.bf16.mxu0 %v1714
        %2414 = vmatpush1.bf16.msra.mxu0 %v1713
        %2415 = vmatprep.subr.bf16.mxu0 %v1722
        %2416 = vmatpush1.bf16.msra.mxu0 %v1721
        %2417 = vmatprep.subr.bf16.mxu0 %v1730
        %2418 = vmatpush1.bf16.msra.mxu0 %v1729
        %2419 = vmatprep.subr.bf16.mxu0 %v1738
        %2420 = vmatpush1.bf16.msra.mxu0 %v1737
        %2421 = vmatprep.subr.bf16.mxu0 %v1746
        %2422 = vmatpush1.bf16.msra.mxu0 %v1745
        %2423 = vmatprep.subr.bf16.mxu0 %v1754
        %2424 = vmatpush1.bf16.msra.mxu0 %v1753
        %2425 = vmatprep.subr.bf16.mxu0 %v1762
        %2426 = vmatpush1.bf16.msra.mxu0 %v1761
        %2427 = vmatprep.subr.bf16.mxu0 %v1770
        %2428 = vmatpush1.bf16.msra.mxu0 %v1769
        %2429 = vmatprep.subr.bf16.mxu0 %v1778
        %2430 = vmatpush1.bf16.msra.mxu0 %v1777
        %2431 = vmatprep.subr.bf16.mxu0 %v1786
        %2432 = vmatpush1.bf16.msra.mxu0 %v1785
        %2433 = vmatprep.subr.bf16.mxu0 %v1794
        %2434 = vmatpush1.bf16.msra.mxu0 %v1793
        %2435 = vmatprep.subr.bf16.mxu0 %v1802
        %2436 = vmatpush1.bf16.msra.mxu0 %v1801
        %2437 = vmatprep.subr.bf16.mxu0 %v1810
        %2438 = vmatpush1.bf16.msra.mxu0 %v1809
        %2439 = vmatprep.subr.bf16.mxu0 %v1818
        %2440 = vmatpush1.bf16.msra.mxu0 %v1817
        %2441 = vmatprep.subr.bf16.mxu0 %v1826
        %2442 = vmatpush1.bf16.msra.mxu0 %v1825
        %2443 = vmatprep.subr.bf16.mxu0 %v1834
        %2444 = vmatpush1.bf16.msra.mxu0 %v1833
        %2445 = vmatprep.mubr.bf16.mxu0 %v2412
        %2446 = vmatmul.mubr.bf16.gmra.mrb[0].mxu0 %v2411
        %v2447 = vpop.f32.mrb[0].mxu0
        %v2448 = vadd.f32 0.0, %v2447
        %v2449 = vpop.f32.mrb[0].mxu0
        %v2450 = vadd.f32 0.0, %v2449
        %v2451 = vpop.f32.mrb[0].mxu0
        %v2452 = vpop.f32.mrb[0].mxu0
        %2453 = vdwg.mxu0
        %2454 = vmatprep.subr.bf16.mxu0 %v1716
        %2455 = vmatpush1.bf16.msra.mxu0 %v1715
        %2456 = vmatprep.subr.bf16.mxu0 %v1724
        %2457 = vmatpush1.bf16.msra.mxu0 %v1723
        %2458 = vmatprep.subr.bf16.mxu0 %v1732
        %2459 = vmatpush1.bf16.msra.mxu0 %v1731
        %2460 = vmatprep.subr.bf16.mxu0 %v1740
        %2461 = vmatpush1.bf16.msra.mxu0 %v1739
        %2462 = vmatprep.subr.bf16.mxu0 %v1748
        %2463 = vmatpush1.bf16.msra.mxu0 %v1747
        %2464 = vmatprep.subr.bf16.mxu0 %v1756
        %2465 = vmatpush1.bf16.msra.mxu0 %v1755
        %2466 = vmatprep.subr.bf16.mxu0 %v1764
        %2467 = vmatpush1.bf16.msra.mxu0 %v1763
        %2468 = vmatprep.subr.bf16.mxu0 %v1772
        %2469 = vmatpush1.bf16.msra.mxu0 %v1771
        %2470 = vmatprep.subr.bf16.mxu0 %v1780
        %2471 = vmatpush1.bf16.msra.mxu0 %v1779
        %2472 = vmatprep.subr.bf16.mxu0 %v1788
        %2473 = vmatpush1.bf16.msra.mxu0 %v1787
        %2474 = vmatprep.subr.bf16.mxu0 %v1796
        %2475 = vmatpush1.bf16.msra.mxu0 %v1795
        %2476 = vmatprep.subr.bf16.mxu0 %v1804
        %2477 = vmatpush1.bf16.msra.mxu0 %v1803
        %2478 = vmatprep.subr.bf16.mxu0 %v1812
        %2479 = vmatpush1.bf16.msra.mxu0 %v1811
        %2480 = vmatprep.subr.bf16.mxu0 %v1820
        %2481 = vmatpush1.bf16.msra.mxu0 %v1819
        %2482 = vmatprep.subr.bf16.mxu0 %v1828
        %2483 = vmatpush1.bf16.msra.mxu0 %v1827
        %2484 = vmatprep.subr.bf16.mxu0 %v1836
        %2485 = vmatpush1.bf16.msra.mxu0 %v1835
        %2486 = vmatprep.mubr.bf16.mxu0 %v2412
        %2487 = vmatmul.mubr.bf16.gmra.mrb[0].mxu0 %v2411
        %v2488 = vpop.f32.mrb[0].mxu0
        %v2489 = vadd.f32 0.0, %v2488
        %v2490 = vpop.f32.mrb[0].mxu0
        %v2491 = vadd.f32 0.0, %v2490
        %v2492 = vpop.f32.mrb[0].mxu0
        %v2493 = vpop.f32.mrb[0].mxu0
        %2494 = vdwg.mxu0
        %2495 = vmatprep.subr.bf16.mxu0 %v1718
        %2496 = vmatpush1.bf16.msra.mxu0 %v1717
        %2497 = vmatprep.subr.bf16.mxu0 %v1726
        %2498 = vmatpush1.bf16.msra.mxu0 %v1725
        %2499 = vmatprep.subr.bf16.mxu0 %v1734
        %2500 = vmatpush1.bf16.msra.mxu0 %v1733
        %2501 = vmatprep.subr.bf16.mxu0 %v1742
        %2502 = vmatpush1.bf16.msra.mxu0 %v1741
        %2503 = vmatprep.subr.bf16.mxu0 %v1750
        %2504 = vmatpush1.bf16.msra.mxu0 %v1749
        %2505 = vmatprep.subr.bf16.mxu0 %v1758
        %2506 = vmatpush1.bf16.msra.mxu0 %v1757
        %2507 = vmatprep.subr.bf16.mxu0 %v1766
        %2508 = vmatpush1.bf16.msra.mxu0 %v1765
        %2509 = vmatprep.subr.bf16.mxu0 %v1774
        %2510 = vmatpush1.bf16.msra.mxu0 %v1773
        %2511 = vmatprep.subr.bf16.mxu0 %v1782
        %2512 = vmatpush1.bf16.msra.mxu0 %v1781
        %2513 = vmatprep.subr.bf16.mxu0 %v1790
        %2514 = vmatpush1.bf16.msra.mxu0 %v1789
        %2515 = vmatprep.subr.bf16.mxu0 %v1798
        %2516 = vmatpush1.bf16.msra.mxu0 %v1797
        %2517 = vmatprep.subr.bf16.mxu0 %v1806
        %2518 = vmatpush1.bf16.msra.mxu0 %v1805
        %2519 = vmatprep.subr.bf16.mxu0 %v1814
        %2520 = vmatpush1.bf16.msra.mxu0 %v1813
        %2521 = vmatprep.subr.bf16.mxu0 %v1822
        %2522 = vmatpush1.bf16.msra.mxu0 %v1821
        %2523 = vmatprep.subr.bf16.mxu0 %v1830
        %2524 = vmatpush1.bf16.msra.mxu0 %v1829
        %2525 = vmatprep.subr.bf16.mxu0 %v1838
        %2526 = vmatpush1.bf16.msra.mxu0 %v1837
        %2527 = vmatprep.mubr.bf16.mxu0 %v2412
        %2528 = vmatmul.mubr.bf16.gmra.mrb[0].mxu0 %v2411
        %v2529 = vpop.f32.mrb[0].mxu0
        %v2530 = vadd.f32 0.0, %v2529
        %v2531 = vpop.f32.mrb[0].mxu0
        %v2532 = vadd.f32 0.0, %v2531
        %v2533 = vpop.f32.mrb[0].mxu0
        %v2534 = vpop.f32.mrb[0].mxu0
        %2535 = vdwg.mxu0
        %2536 = vmatprep.subr.bf16.mxu0 %v1720
        %2537 = vmatpush1.bf16.msra.mxu0 %v1719
        %2538 = vmatprep.subr.bf16.mxu0 %v1728
        %2539 = vmatpush1.bf16.msra.mxu0 %v1727
        %2540 = vmatprep.subr.bf16.mxu0 %v1736
        %2541 = vmatpush1.bf16.msra.mxu0 %v1735
        %2542 = vmatprep.subr.bf16.mxu0 %v1744
        %2543 = vmatpush1.bf16.msra.mxu0 %v1743
        %2544 = vmatprep.subr.bf16.mxu0 %v1752
        %2545 = vmatpush1.bf16.msra.mxu0 %v1751
        %2546 = vmatprep.subr.bf16.mxu0 %v1760
        %2547 = vmatpush1.bf16.msra.mxu0 %v1759
        %2548 = vmatprep.subr.bf16.mxu0 %v1768
        %2549 = vmatpush1.bf16.msra.mxu0 %v1767
        %2550 = vmatprep.subr.bf16.mxu0 %v1776
        %2551 = vmatpush1.bf16.msra.mxu0 %v1775
        %2552 = vmatprep.subr.bf16.mxu0 %v1784
        %2553 = vmatpush1.bf16.msra.mxu0 %v1783
        %2554 = vmatprep.subr.bf16.mxu0 %v1792
        %2555 = vmatpush1.bf16.msra.mxu0 %v1791
        %2556 = vmatprep.subr.bf16.mxu0 %v1800
        %2557 = vmatpush1.bf16.msra.mxu0 %v1799
        %2558 = vmatprep.subr.bf16.mxu0 %v1808
        %2559 = vmatpush1.bf16.msra.mxu0 %v1807
        %2560 = vmatprep.subr.bf16.mxu0 %v1816
        %2561 = vmatpush1.bf16.msra.mxu0 %v1815
        %2562 = vmatprep.subr.bf16.mxu0 %v1824
        %2563 = vmatpush1.bf16.msra.mxu0 %v1823
        %2564 = vmatprep.subr.bf16.mxu0 %v1832
        %2565 = vmatpush1.bf16.msra.mxu0 %v1831
        %2566 = vmatprep.subr.bf16.mxu0 %v1840
        %2567 = vmatpush1.bf16.msra.mxu0 %v1839
        %2568 = vmatprep.mubr.bf16.mxu0 %v2412
        %2569 = vmatmul.mubr.bf16.gmra.mrb[0].mxu0 %v2411
        %v2570 = vpop.f32.mrb[0].mxu0
        %v2571 = vadd.f32 0.0, %v2570
        %v2572 = vpop.f32.mrb[0].mxu0
        %v2573 = vadd.f32 0.0, %v2572
        %v2574 = vpop.f32.mrb[0].mxu0
        %v2575 = vpop.f32.mrb[0].mxu0
        %2576 = vdwg.mxu0
        %v2577 = vadd.f32 %v2448, %v794
        %v2578 = vadd.f32 %v2450, %v796
        %v2579 = vadd.f32 %v2489, %v847
        %v2580 = vadd.f32 %v2491, %v849
        %v2581 = vadd.f32 %v2530, %v1124
        %v2582 = vadd.f32 %v2532, %v1126
        %v2583 = vadd.f32 %v2571, %v1177
        %v2584 = vadd.f32 %v2573, %v1179
        %v2585 = vxor.u32 %v2577, 2147483648
        %v2586 = vxor.u32 %v2578, 2147483648
        %v2587 = vmul.f32 %v2585, 1.442695
        %v2588 = vpow.pop %v2587
        %v2589 = vmul.f32 %v2586, 1.442695
        %v2590 = vpow.pop %v2589
        %v2591 = vadd.f32 %v2588, 1.0
        %v2592 = vadd.f32 %v2590, 1.0
        %v2593 = vrcp.pop %v2591
        %v2594 = vmul.f32 1.0, %v2593
        %v2595 = vrcp.pop %v2592
        %v2596 = vmul.f32 1.0, %v2595
        %v2597 = vtanh.pop %v2579
        %v2598 = vxor.u32 %v2580, 2147483648
        %v2599 = vmul.f32 %v2598, 1.442695
        %v2600 = vpow.pop %v2599
        %v2601 = vadd.f32 %v2600, 1.0
        %v2602 = vrcp.pop %v2601
        %v2603 = vmul.f32 1.0, %v2602
        %v2604 = vxor.u32 %v2581, 2147483648
        %v2605 = vxor.u32 %v2582, 2147483648
        %v2606 = vmul.f32 %v2604, 1.442695
        %v2607 = vpow.pop %v2606
        %v2608 = vmul.f32 %v2605, 1.442695
        %v2609 = vpow.pop %v2608
        %v2610 = vadd.f32 %v2607, 1.0
        %v2611 = vadd.f32 %v2609, 1.0
        %v2612 = vrcp.pop %v2610
        %v2613 = vmul.f32 1.0, %v2612
        %v2614 = vrcp.pop %v2611
        %v2615 = vmul.f32 1.0, %v2614
        %v2616 = vtanh.pop %v2583
        %v2617 = vxor.u32 %v2584, 2147483648
        %v2618 = vmul.f32 %v2617, 1.442695
        %v2619 = vpow.pop %v2618
        %v2620 = vadd.f32 %v2619, 1.0
        %v2621 = vrcp.pop %v2620
        %v2622 = vmul.f32 1.0, %v2621
        %v2623 = vmul.f32 %v2596, %v2403
        %v2624 = vmul.f32 %v2594, %v2597
        %v2625 = vadd.f32 %v2623, %v2624
        %v2626 = vmul.f32 %v2615, %v2406
        %v2627 = vmul.f32 %v2613, %v2616
        %v2628 = vadd.f32 %v2626, %v2627
        %v2629 = vtanh.pop %v2625
        %v2630 = vmul.f32 %v2603, %v2629
        %v2631 = vtanh.pop %v2628
        %v2632 = vmul.f32 %v2622, %v2631
        %v2633 = vpack.c.bf16 %v2630, %v2630
        %v2634 = vpack.c.bf16 %v2632, %v2632
        %2635 = vmatprep.subr.bf16.mxu0 %v1714
        %2636 = vmatpush1.bf16.msra.mxu0 %v1713
        %2637 = vmatprep.subr.bf16.mxu0 %v1722
        %2638 = vmatpush1.bf16.msra.mxu0 %v1721
        %2639 = vmatprep.subr.bf16.mxu0 %v1730
        %2640 = vmatpush1.bf16.msra.mxu0 %v1729
        %2641 = vmatprep.subr.bf16.mxu0 %v1738
        %2642 = vmatpush1.bf16.msra.mxu0 %v1737
        %2643 = vmatprep.subr.bf16.mxu0 %v1746
        %2644 = vmatpush1.bf16.msra.mxu0 %v1745
        %2645 = vmatprep.subr.bf16.mxu0 %v1754
        %2646 = vmatpush1.bf16.msra.mxu0 %v1753
        %2647 = vmatprep.subr.bf16.mxu0 %v1762
        %2648 = vmatpush1.bf16.msra.mxu0 %v1761
        %2649 = vmatprep.subr.bf16.mxu0 %v1770
        %2650 = vmatpush1.bf16.msra.mxu0 %v1769
        %2651 = vmatprep.subr.bf16.mxu0 %v1778
        %2652 = vmatpush1.bf16.msra.mxu0 %v1777
        %2653 = vmatprep.subr.bf16.mxu0 %v1786
        %2654 = vmatpush1.bf16.msra.mxu0 %v1785
        %2655 = vmatprep.subr.bf16.mxu0 %v1794
        %2656 = vmatpush1.bf16.msra.mxu0 %v1793
        %2657 = vmatprep.subr.bf16.mxu0 %v1802
        %2658 = vmatpush1.bf16.msra.mxu0 %v1801
        %2659 = vmatprep.subr.bf16.mxu0 %v1810
        %2660 = vmatpush1.bf16.msra.mxu0 %v1809
        %2661 = vmatprep.subr.bf16.mxu0 %v1818
        %2662 = vmatpush1.bf16.msra.mxu0 %v1817
        %2663 = vmatprep.subr.bf16.mxu0 %v1826
        %2664 = vmatpush1.bf16.msra.mxu0 %v1825
        %2665 = vmatprep.subr.bf16.mxu0 %v1834
        %2666 = vmatpush1.bf16.msra.mxu0 %v1833
        %2667 = vmatprep.mubr.bf16.mxu0 %v2634
        %2668 = vmatmul.mubr.bf16.gmra.mrb[0].mxu0 %v2633
        %v2669 = vpop.f32.mrb[0].mxu0
        %v2670 = vadd.f32 0.0, %v2669
        %v2671 = vpop.f32.mrb[0].mxu0
        %v2672 = vadd.f32 0.0, %v2671
        %v2673 = vpop.f32.mrb[0].mxu0
        %v2674 = vpop.f32.mrb[0].mxu0
        %2675 = vdwg.mxu0
        %2676 = vmatprep.subr.bf16.mxu0 %v1716
        %2677 = vmatpush1.bf16.msra.mxu0 %v1715
        %2678 = vmatprep.subr.bf16.mxu0 %v1724
        %2679 = vmatpush1.bf16.msra.mxu0 %v1723
        %2680 = vmatprep.subr.bf16.mxu0 %v1732
        %2681 = vmatpush1.bf16.msra.mxu0 %v1731
        %2682 = vmatprep.subr.bf16.mxu0 %v1740
        %2683 = vmatpush1.bf16.msra.mxu0 %v1739
        %2684 = vmatprep.subr.bf16.mxu0 %v1748
        %2685 = vmatpush1.bf16.msra.mxu0 %v1747
        %2686 = vmatprep.subr.bf16.mxu0 %v1756
        %2687 = vmatpush1.bf16.msra.mxu0 %v1755
        %2688 = vmatprep.subr.bf16.mxu0 %v1764
        %2689 = vmatpush1.bf16.msra.mxu0 %v1763
        %2690 = vmatprep.subr.bf16.mxu0 %v1772
        %2691 = vmatpush1.bf16.msra.mxu0 %v1771
        %2692 = vmatprep.subr.bf16.mxu0 %v1780
        %2693 = vmatpush1.bf16.msra.mxu0 %v1779
        %2694 = vmatprep.subr.bf16.mxu0 %v1788
        %2695 = vmatpush1.bf16.msra.mxu0 %v1787
        %2696 = vmatprep.subr.bf16.mxu0 %v1796
        %2697 = vmatpush1.bf16.msra.mxu0 %v1795
        %2698 = vmatprep.subr.bf16.mxu0 %v1804
        %2699 = vmatpush1.bf16.msra.mxu0 %v1803
        %2700 = vmatprep.subr.bf16.mxu0 %v1812
        %2701 = vmatpush1.bf16.msra.mxu0 %v1811
        %2702 = vmatprep.subr.bf16.mxu0 %v1820
        %2703 = vmatpush1.bf16.msra.mxu0 %v1819
        %2704 = vmatprep.subr.bf16.mxu0 %v1828
        %2705 = vmatpush1.bf16.msra.mxu0 %v1827
        %2706 = vmatprep.subr.bf16.mxu0 %v1836
        %2707 = vmatpush1.bf16.msra.mxu0 %v1835
        %2708 = vmatprep.mubr.bf16.mxu0 %v2634
        %2709 = vmatmul.mubr.bf16.gmra.mrb[0].mxu0 %v2633
        %v2710 = vpop.f32.mrb[0].mxu0
        %v2711 = vadd.f32 0.0, %v2710
        %v2712 = vpop.f32.mrb[0].mxu0
        %v2713 = vadd.f32 0.0, %v2712
        %v2714 = vpop.f32.mrb[0].mxu0
        %v2715 = vpop.f32.mrb[0].mxu0
        %2716 = vdwg.mxu0
        %2717 = vmatprep.subr.bf16.mxu0 %v1718
        %2718 = vmatpush1.bf16.msra.mxu0 %v1717
        %2719 = vmatprep.subr.bf16.mxu0 %v1726
        %2720 = vmatpush1.bf16.msra.mxu0 %v1725
        %2721 = vmatprep.subr.bf16.mxu0 %v1734
        %2722 = vmatpush1.bf16.msra.mxu0 %v1733
        %2723 = vmatprep.subr.bf16.mxu0 %v1742
        %2724 = vmatpush1.bf16.msra.mxu0 %v1741
        %2725 = vmatprep.subr.bf16.mxu0 %v1750
        %2726 = vmatpush1.bf16.msra.mxu0 %v1749
        %2727 = vmatprep.subr.bf16.mxu0 %v1758
        %2728 = vmatpush1.bf16.msra.mxu0 %v1757
        %2729 = vmatprep.subr.bf16.mxu0 %v1766
        %2730 = vmatpush1.bf16.msra.mxu0 %v1765
        %2731 = vmatprep.subr.bf16.mxu0 %v1774
        %2732 = vmatpush1.bf16.msra.mxu0 %v1773
        %2733 = vmatprep.subr.bf16.mxu0 %v1782
        %2734 = vmatpush1.bf16.msra.mxu0 %v1781
        %2735 = vmatprep.subr.bf16.mxu0 %v1790
        %2736 = vmatpush1.bf16.msra.mxu0 %v1789
        %2737 = vmatprep.subr.bf16.mxu0 %v1798
        %2738 = vmatpush1.bf16.msra.mxu0 %v1797
        %2739 = vmatprep.subr.bf16.mxu0 %v1806
        %2740 = vmatpush1.bf16.msra.mxu0 %v1805
        %2741 = vmatprep.subr.bf16.mxu0 %v1814
        %2742 = vmatpush1.bf16.msra.mxu0 %v1813
        %2743 = vmatprep.subr.bf16.mxu0 %v1822
        %2744 = vmatpush1.bf16.msra.mxu0 %v1821
        %2745 = vmatprep.subr.bf16.mxu0 %v1830
        %2746 = vmatpush1.bf16.msra.mxu0 %v1829
        %2747 = vmatprep.subr.bf16.mxu0 %v1838
        %2748 = vmatpush1.bf16.msra.mxu0 %v1837
        %2749 = vmatprep.mubr.bf16.mxu0 %v2634
        %2750 = vmatmul.mubr.bf16.gmra.mrb[0].mxu0 %v2633
        %v2751 = vpop.f32.mrb[0].mxu0
        %v2752 = vadd.f32 0.0, %v2751
        %v2753 = vpop.f32.mrb[0].mxu0
        %v2754 = vadd.f32 0.0, %v2753
        %v2755 = vpop.f32.mrb[0].mxu0
        %v2756 = vpop.f32.mrb[0].mxu0
        %2757 = vdwg.mxu0
        %2758 = vmatprep.subr.bf16.mxu0 %v1720
        %2759 = vmatpush1.bf16.msra.mxu0 %v1719
        %2760 = vmatprep.subr.bf16.mxu0 %v1728
        %2761 = vmatpush1.bf16.msra.mxu0 %v1727
        %2762 = vmatprep.subr.bf16.mxu0 %v1736
        %2763 = vmatpush1.bf16.msra.mxu0 %v1735
        %2764 = vmatprep.subr.bf16.mxu0 %v1744
        %2765 = vmatpush1.bf16.msra.mxu0 %v1743
        %2766 = vmatprep.subr.bf16.mxu0 %v1752
        %2767 = vmatpush1.bf16.msra.mxu0 %v1751
        %2768 = vmatprep.subr.bf16.mxu0 %v1760
        %2769 = vmatpush1.bf16.msra.mxu0 %v1759
        %2770 = vmatprep.subr.bf16.mxu0 %v1768
        %2771 = vmatpush1.bf16.msra.mxu0 %v1767
        %2772 = vmatprep.subr.bf16.mxu0 %v1776
        %2773 = vmatpush1.bf16.msra.mxu0 %v1775
        %2774 = vmatprep.subr.bf16.mxu0 %v1784
        %2775 = vmatpush1.bf16.msra.mxu0 %v1783
        %2776 = vmatprep.subr.bf16.mxu0 %v1792
        %2777 = vmatpush1.bf16.msra.mxu0 %v1791
        %2778 = vmatprep.subr.bf16.mxu0 %v1800
        %2779 = vmatpush1.bf16.msra.mxu0 %v1799
        %2780 = vmatprep.subr.bf16.mxu0 %v1808
        %2781 = vmatpush1.bf16.msra.mxu0 %v1807
        %2782 = vmatprep.subr.bf16.mxu0 %v1816
        %2783 = vmatpush1.bf16.msra.mxu0 %v1815
        %2784 = vmatprep.subr.bf16.mxu0 %v1824
        %2785 = vmatpush1.bf16.msra.mxu0 %v1823
        %2786 = vmatprep.subr.bf16.mxu0 %v1832
        %2787 = vmatpush1.bf16.msra.mxu0 %v1831
        %2788 = vmatprep.subr.bf16.mxu0 %v1840
        %2789 = vmatpush1.bf16.msra.mxu0 %v1839
        %2790 = vmatprep.mubr.bf16.mxu0 %v2634
        %2791 = vmatmul.mubr.bf16.gmra.mrb[0].mxu0 %v2633
        %v2792 = vpop.f32.mrb[0].mxu0
        %v2793 = vadd.f32 0.0, %v2792
        %v2794 = vpop.f32.mrb[0].mxu0
        %v2795 = vadd.f32 0.0, %v2794
        %v2796 = vpop.f32.mrb[0].mxu0
        %v2797 = vpop.f32.mrb[0].mxu0
        %2798 = vdwg.mxu0
        %v2799 = vadd.f32 %v2670, %v798
        %v2800 = vadd.f32 %v2672, %v800
        %v2801 = vadd.f32 %v2711, %v851
        %v2802 = vadd.f32 %v2713, %v853
        %v2803 = vadd.f32 %v2752, %v1120
        %v2804 = vadd.f32 %v2754, %v1122
        %v2805 = vadd.f32 %v2793, %v1173
        %v2806 = vadd.f32 %v2795, %v1175
        %v2807 = vxor.u32 %v2799, 2147483648
        %v2808 = vxor.u32 %v2800, 2147483648
        %v2809 = vmul.f32 %v2807, 1.442695
        %v2810 = vpow.pop %v2809
        %v2811 = vmul.f32 %v2808, 1.442695
        %v2812 = vpow.pop %v2811
        %v2813 = vadd.f32 %v2810, 1.0
        %v2814 = vadd.f32 %v2812, 1.0
        %v2815 = vrcp.pop %v2813
        %v2816 = vmul.f32 1.0, %v2815
        %v2817 = vrcp.pop %v2814
        %v2818 = vmul.f32 1.0, %v2817
        %v2819 = vtanh.pop %v2801
        %v2820 = vxor.u32 %v2802, 2147483648
        %v2821 = vmul.f32 %v2820, 1.442695
        %v2822 = vpow.pop %v2821
        %v2823 = vadd.f32 %v2822, 1.0
        %v2824 = vrcp.pop %v2823
        %v2825 = vmul.f32 1.0, %v2824
        %v2826 = vxor.u32 %v2803, 2147483648
        %v2827 = vxor.u32 %v2804, 2147483648
        %v2828 = vmul.f32 %v2826, 1.442695
        %v2829 = vpow.pop %v2828
        %v2830 = vmul.f32 %v2827, 1.442695
        %v2831 = vpow.pop %v2830
        %v2832 = vadd.f32 %v2829, 1.0
        %v2833 = vadd.f32 %v2831, 1.0
        %v2834 = vrcp.pop %v2832
        %v2835 = vmul.f32 1.0, %v2834
        %v2836 = vrcp.pop %v2833
        %v2837 = vmul.f32 1.0, %v2836
        %v2838 = vtanh.pop %v2805
        %v2839 = vxor.u32 %v2806, 2147483648
        %v2840 = vmul.f32 %v2839, 1.442695
        %v2841 = vpow.pop %v2840
        %v2842 = vadd.f32 %v2841, 1.0
        %v2843 = vrcp.pop %v2842
        %v2844 = vmul.f32 1.0, %v2843
        %v2845 = vmul.f32 %v2818, %v2625
        %v2846 = vmul.f32 %v2816, %v2819
        %v2847 = vadd.f32 %v2845, %v2846
        %v2848 = vmul.f32 %v2837, %v2628
        %v2849 = vmul.f32 %v2835, %v2838
        %v2850 = vadd.f32 %v2848, %v2849
        %v2851 = vtanh.pop %v2847
        %v2852 = vmul.f32 %v2825, %v2851
        %v2853 = vtanh.pop %v2850
        %v2854 = vmul.f32 %v2844, %v2853
        %v2855 = vpack.c.bf16 %v2852, %v2852
        %v2856 = vpack.c.bf16 %v2854, %v2854
        %v2859 = vunpack.c.l.b16 %v2855
        %v2860 = vunpack.c.l.b16 %v2856
        %v2861 = vpack.c.b16 %v2860, %v2859
        %2863 = vst [vmem:[#allocation2] sm:$0xff] %v2861
        %2864 = vst [vmem:[#allocation3] sm:$0xff] %v2847
        %2865 = vst [vmem:[#allocation3 + $0x8] sm:$0xff] %v2850
        %p2866 = scmp.eq.s32.totalorder %s31, 1
        // Predicated region
        $region97: #{tpu_custom_call.1} parent=63 // pred_check
          %p2867 = pneg %p2866
        $region98: #{tpu_custom_call.1} parent=63 // pred_check_branch
          %2869 = sbr.rel (%p2867) target = $region100
        $region99: #{tpu_custom_call.1} parent=63 // pred_region
          %v2870 = vld [vmem:[#allocation13] sm:$0xf]
          %v2871 = vld [vmem:[#allocation13 + $0x4] sm:$0xf]
          %v2872 = vld [vmem:[#allocation13 + $0x8] sm:$0xf]
          %v2873 = vld [vmem:[#allocation13 + $0xc] sm:$0xf]
          %v2874 = vld [vmem:[#allocation13 + $0x10] sm:$0xf]
          %v2875 = vld [vmem:[#allocation13 + $0x14] sm:$0xf]
          %v2876 = vld [vmem:[#allocation13 + $0x18] sm:$0xf]
          %v2877 = vld [vmem:[#allocation13 + $0x1c] sm:$0xf]
          %v2878 = vld [vmem:[#allocation13 + $0x20] sm:$0xf]
          %v2879 = vld [vmem:[#allocation13 + $0x24] sm:$0xf]
          %v2880 = vld [vmem:[#allocation13 + $0x28] sm:$0xf]
          %v2881 = vld [vmem:[#allocation13 + $0x2c] sm:$0xf]
          %v2882 = vld [vmem:[#allocation13 + $0x30] sm:$0xf]
          %v2883 = vld [vmem:[#allocation13 + $0x34] sm:$0xf]
          %v2884 = vld [vmem:[#allocation13 + $0x38] sm:$0xf]
          %v2885 = vld [vmem:[#allocation13 + $0x3c] sm:$0xf]
          %v2886 = vld [vmem:[#allocation13 + $0x40] sm:$0xf]
          %v2887 = vld [vmem:[#allocation13 + $0x44] sm:$0xf]
          %v2888 = vld [vmem:[#allocation13 + $0x48] sm:$0xf]
          %v2889 = vld [vmem:[#allocation13 + $0x4c] sm:$0xf]
          %v2890 = vld [vmem:[#allocation13 + $0x50] sm:$0xf]
          %v2891 = vld [vmem:[#allocation13 + $0x54] sm:$0xf]
          %v2892 = vld [vmem:[#allocation13 + $0x58] sm:$0xf]
          %v2893 = vld [vmem:[#allocation13 + $0x5c] sm:$0xf]
          %v2894 = vld [vmem:[#allocation13 + $0x60] sm:$0xf]
          %v2895 = vld [vmem:[#allocation13 + $0x64] sm:$0xf]
          %v2896 = vld [vmem:[#allocation13 + $0x68] sm:$0xf]
          %v2897 = vld [vmem:[#allocation13 + $0x6c] sm:$0xf]
          %v2898 = vld [vmem:[#allocation13 + $0x70] sm:$0xf]
          %v2899 = vld [vmem:[#allocation13 + $0x74] sm:$0xf]
          %v2900 = vld [vmem:[#allocation13 + $0x78] sm:$0xf]
          %v2901 = vld [vmem:[#allocation13 + $0x7c] sm:$0xf]
          %v2902 = vld [vmem:[%s8] sm:$0x1]
          %v2904 = vlaneseq
          %v2905 = vshrl.u32 %v2904, 7
          %v2906 = vsub.s32 0, %v2905
          %v2907 = vrot.slane %v2902, %v2906
          %v2941 = vunpack.c.l.b16 %v2870
          %v2942 = vunpack.c.l.b16 %v2871
          %v2943 = vunpack.c.l.b16 %v2872
          %v2944 = vunpack.c.l.b16 %v2873
          %v2945 = vunpack.c.l.b16 %v2874
          %v2946 = vunpack.c.l.b16 %v2875
          %v2947 = vunpack.c.l.b16 %v2876
          %v2948 = vunpack.c.l.b16 %v2877
          %v2949 = vunpack.c.l.b16 %v2878
          %v2950 = vunpack.c.l.b16 %v2879
          %v2951 = vunpack.c.l.b16 %v2880
          %v2952 = vunpack.c.l.b16 %v2881
          %v2953 = vunpack.c.l.b16 %v2882
          %v2954 = vunpack.c.l.b16 %v2883
          %v2955 = vunpack.c.l.b16 %v2884
          %v2956 = vunpack.c.l.b16 %v2885
          %v2957 = vunpack.c.l.b16 %v2886
          %v2958 = vunpack.c.l.b16 %v2887
          %v2959 = vunpack.c.l.b16 %v2888
          %v2960 = vunpack.c.l.b16 %v2889
          %v2961 = vunpack.c.l.b16 %v2890
          %v2962 = vunpack.c.l.b16 %v2891
          %v2963 = vunpack.c.l.b16 %v2892
          %v2964 = vunpack.c.l.b16 %v2893
          %v2965 = vunpack.c.l.b16 %v2894
          %v2966 = vunpack.c.l.b16 %v2895
          %v2967 = vunpack.c.l.b16 %v2896
          %v2968 = vunpack.c.l.b16 %v2897
          %v2969 = vunpack.c.l.b16 %v2898
          %v2970 = vunpack.c.l.b16 %v2899
          %v2971 = vunpack.c.l.b16 %v2900
          %v2972 = vunpack.c.l.b16 %v2901
          %v2973 = vpack.c.b16 %v2942, %v2941
          %v2974 = vpack.c.b16 %v2944, %v2943
          %v2975 = vpack.c.b16 %v2946, %v2945
          %v2976 = vpack.c.b16 %v2948, %v2947
          %v2977 = vpack.c.b16 %v2950, %v2949
          %v2978 = vpack.c.b16 %v2952, %v2951
          %v2979 = vpack.c.b16 %v2954, %v2953
          %v2980 = vpack.c.b16 %v2956, %v2955
          %v2981 = vpack.c.b16 %v2958, %v2957
          %v2982 = vpack.c.b16 %v2960, %v2959
          %v2983 = vpack.c.b16 %v2962, %v2961
          %v2984 = vpack.c.b16 %v2964, %v2963
          %v2985 = vpack.c.b16 %v2966, %v2965
          %v2986 = vpack.c.b16 %v2968, %v2967
          %v2987 = vpack.c.b16 %v2970, %v2969
          %v2988 = vpack.c.b16 %v2972, %v2971
          %3005 = vmatprep.subr.bf16.mxu0 0
          %3006 = vmatpush1.bf16.msra.mxu0 %v2973
          %3007 = vmatprep.subr.bf16.mxu0 0
          %3008 = vmatpush1.bf16.msra.mxu0 %v2974
          %3009 = vmatprep.subr.bf16.mxu0 0
          %3010 = vmatpush1.bf16.msra.mxu0 %v2975
          %3011 = vmatprep.subr.bf16.mxu0 0
          %3012 = vmatpush1.bf16.msra.mxu0 %v2976
          %3013 = vmatprep.subr.bf16.mxu0 0
          %3014 = vmatpush1.bf16.msra.mxu0 %v2977
          %3015 = vmatprep.subr.bf16.mxu0 0
          %3016 = vmatpush1.bf16.msra.mxu0 %v2978
          %3017 = vmatprep.subr.bf16.mxu0 0
          %3018 = vmatpush1.bf16.msra.mxu0 %v2979
          %3019 = vmatprep.subr.bf16.mxu0 0
          %3020 = vmatpush1.bf16.msra.mxu0 %v2980
          %3021 = vmatprep.subr.bf16.mxu0 0
          %3022 = vmatpush1.bf16.msra.mxu0 %v2981
          %3023 = vmatprep.subr.bf16.mxu0 0
          %3024 = vmatpush1.bf16.msra.mxu0 %v2982
          %3025 = vmatprep.subr.bf16.mxu0 0
          %3026 = vmatpush1.bf16.msra.mxu0 %v2983
          %3027 = vmatprep.subr.bf16.mxu0 0
          %3028 = vmatpush1.bf16.msra.mxu0 %v2984
          %3029 = vmatprep.subr.bf16.mxu0 0
          %3030 = vmatpush1.bf16.msra.mxu0 %v2985
          %3031 = vmatprep.subr.bf16.mxu0 0
          %3032 = vmatpush1.bf16.msra.mxu0 %v2986
          %3033 = vmatprep.subr.bf16.mxu0 0
          %3034 = vmatpush1.bf16.msra.mxu0 %v2987
          %3035 = vmatprep.subr.bf16.mxu0 0
          %3036 = vmatpush1.bf16.msra.mxu0 %v2988
          %3037 = vmatprep.mubr.bf16.mxu0 %v2856
          %3038 = vmatmul.mubr.bf16.gmra.mrb[0].mxu0 %v2855
          %v3039 = vpop.f32.mrb[0].mxu0
          %v3040 = vadd.f32 %v2907, %v3039
          %v3041 = vpop.f32.mrb[0].mxu0
          %v3042 = vpop.f32.mrb[0].mxu0
          %v3043 = vpop.f32.mrb[0].mxu0
          %3044 = vdwg.mxu0
          %v3045 = vmax.f32 %v3040, 0.0
          %v3046 = vpack.c.bf16 %v3045, %v3045
          %v3047 = vld [vmem:[#allocation15] sm:$0xf]
          %v3048 = vld [vmem:[#allocation15 + $0x4] sm:$0xf]
          %v3049 = vld [vmem:[#allocation15 + $0x8] sm:$0xf]
          %v3050 = vld [vmem:[#allocation15 + $0xc] sm:$0xf]
          %v3051 = vld [vmem:[#allocation15 + $0x10] sm:$0xf]
          %v3052 = vld [vmem:[#allocation15 + $0x14] sm:$0xf]
          %v3053 = vld [vmem:[#allocation15 + $0x18] sm:$0xf]
          %v3054 = vld [vmem:[#allocation15 + $0x1c] sm:$0xf]
          %v3055 = vld [vmem:[#allocation15 + $0x20] sm:$0xf]
          %v3056 = vld [vmem:[#allocation15 + $0x24] sm:$0xf]
          %v3057 = vld [vmem:[#allocation15 + $0x28] sm:$0xf]
          %v3058 = vld [vmem:[#allocation15 + $0x2c] sm:$0xf]
          %v3059 = vld [vmem:[#allocation15 + $0x30] sm:$0xf]
          %v3060 = vld [vmem:[#allocation15 + $0x34] sm:$0xf]
          %v3061 = vld [vmem:[#allocation15 + $0x38] sm:$0xf]
          %v3062 = vld [vmem:[#allocation15 + $0x3c] sm:$0xf]
          %v3063 = vld [vmem:[%s10] sm:$0x1]
          %v3065 = vlaneseq
          %v3066 = vshrl.u32 %v3065, 7
          %v3067 = vsub.s32 0, %v3066
          %v3068 = vrot.slane %v3063, %v3067
          %v3086 = vunpack.c.l.b16 %v3047
          %v3087 = vunpack.c.l.b16 %v3048
          %v3088 = vunpack.c.l.b16 %v3049
          %v3089 = vunpack.c.l.b16 %v3050
          %v3090 = vunpack.c.l.b16 %v3051
          %v3091 = vunpack.c.l.b16 %v3052
          %v3092 = vunpack.c.l.b16 %v3053
          %v3093 = vunpack.c.l.b16 %v3054
          %v3094 = vunpack.c.l.b16 %v3055
          %v3095 = vunpack.c.l.b16 %v3056
          %v3096 = vunpack.c.l.b16 %v3057
          %v3097 = vunpack.c.l.b16 %v3058
          %v3098 = vunpack.c.l.b16 %v3059
          %v3099 = vunpack.c.l.b16 %v3060
          %v3100 = vunpack.c.l.b16 %v3061
          %v3101 = vunpack.c.l.b16 %v3062
          %v3102 = vpack.c.b16 %v3087, %v3086
          %v3103 = vpack.c.b16 %v3089, %v3088
          %v3104 = vpack.c.b16 %v3091, %v3090
          %v3105 = vpack.c.b16 %v3093, %v3092
          %v3106 = vpack.c.b16 %v3095, %v3094
          %v3107 = vpack.c.b16 %v3097, %v3096
          %v3108 = vpack.c.b16 %v3099, %v3098
          %v3109 = vpack.c.b16 %v3101, %v3100
          %3118 = vmatprep.subr.bf16.mxu0 0
          %3119 = vmatpush1.bf16.msra.mxu0 %v3102
          %3120 = vmatprep.subr.bf16.mxu0 0
          %3121 = vmatpush1.bf16.msra.mxu0 %v3103
          %3122 = vmatprep.subr.bf16.mxu0 0
          %3123 = vmatpush1.bf16.msra.mxu0 %v3104
          %3124 = vmatprep.subr.bf16.mxu0 0
          %3125 = vmatpush1.bf16.msra.mxu0 %v3105
          %3126 = vmatprep.subr.bf16.mxu0 0
          %3127 = vmatpush1.bf16.msra.mxu0 %v3106
          %3128 = vmatprep.subr.bf16.mxu0 0
          %3129 = vmatpush1.bf16.msra.mxu0 %v3107
          %3130 = vmatprep.subr.bf16.mxu0 0
          %3131 = vmatpush1.bf16.msra.mxu0 %v3108
          %3132 = vmatprep.subr.bf16.mxu0 0
          %3133 = vmatpush1.bf16.msra.mxu0 %v3109
          %3134 = vmatprep.subr.bf16.mxu0 0
          %3135 = vmatpush1.bf16.msra.mxu0 0
          %3136 = vmatprep.subr.bf16.mxu0 0
          %3137 = vmatpush1.bf16.msra.mxu0 0
          %3138 = vmatprep.subr.bf16.mxu0 0
          %3139 = vmatpush1.bf16.msra.mxu0 0
          %3140 = vmatprep.subr.bf16.mxu0 0
          %3141 = vmatpush1.bf16.msra.mxu0 0
          %3142 = vmatprep.subr.bf16.mxu0 0
          %3143 = vmatpush1.bf16.msra.mxu0 0
          %3144 = vmatprep.subr.bf16.mxu0 0
          %3145 = vmatpush1.bf16.msra.mxu0 0
          %3146 = vmatprep.subr.bf16.mxu0 0
          %3147 = vmatpush1.bf16.msra.mxu0 0
          %3148 = vmatprep.subr.bf16.mxu0 0
          %3149 = vmatpush1.bf16.msra.mxu0 0
          %3150 = vmatprep.mubr.bf16.mxu0 0
          %3151 = vmatmul.mubr.bf16.gmra.mrb[0].mxu0 %v3046
          %v3152 = vpop.f32.mrb[0].mxu0
          %v3153 = vadd.f32 %v3068, %v3152
          %v3154 = vpop.f32.mrb[0].mxu0
          %v3155 = vpop.f32.mrb[0].mxu0
          %v3156 = vpop.f32.mrb[0].mxu0
          %3157 = vdwg.mxu0
          %3158 = vst [vmem:[#allocation16] sm:$0xff] %v3153
        $region100: #{tpu_custom_call.1} parent=63 // pred_fallthru
          _
        // Predicated region
        $region101: #{tpu_custom_call.1} parent=63 // pred_check
          %p3159 = pneg %p287
        $region102: #{tpu_custom_call.1} parent=63 // pred_check_branch
          %3161 = sbr.rel (%p3159) target = $region104
        $region103: #{tpu_custom_call.1} parent=63 // pred_region
          %s3163 = ssub.s32 128, 128
          %3164 = vsyncadd [#allocation6], %s3163
          %s3166 = sshll.u32 [#allocation16], 4
          %s3167 = int_to_ptr.vmem [resolvable:$true] %s3166
          %3169 = dma.vmem_to_hbm [thread:$0]  %s3167, 128, %s11, [#allocation6]
        $region104: #{tpu_custom_call.1} parent=63 // pred_fallthru
          _
        // Predicated region
        $region105: #{tpu_custom_call.1} parent=63 // pred_check
          %p3170 = pneg %p287
        $region106: #{tpu_custom_call.1} parent=63 // pred_check_branch
          %3172 = sbr.rel (%p3170) target = $region108
        $region107: #{tpu_custom_call.1} parent=63 // pred_region
          %3173 = dma.done [#allocation6], 128
        $region108: #{tpu_custom_call.1} parent=63 // pred_fallthru
          _
      $region64: #{tpu_custom_call.1} parent=5 // pred_fallthru
        _
      %p3174 = scmp.le.s32.totalorder 2, %s26
      // Predicated region
      $region109: #{tpu_custom_call.1} parent=5 // pred_check
        %p3175 = pneg %p3174
      $region110: #{tpu_custom_call.1} parent=5 // pred_check_branch
        %3177 = sbr.rel (%p3175) target = $region112
      $region111: #{tpu_custom_call.1} parent=5 // pred_region
        %s3178 = ssub.s32 %s26, 2
      $region112: #{tpu_custom_call.1} parent=5 // pred_fallthru
        _
    $region6: #{tpu_custom_call.1} parent=1 // loop_footer
      %s30 = sadd.s32 1, %s26
    $region7: #{tpu_custom_call.1} parent=1 // loop_footer_branch
      %25 = sbr.rel target = $region3
    $region8: #{tpu_custom_call.1} parent=1 // loop_exit
      _
    %3179 = vsyncpa [#allocation5], 1
    %s3180 = scalar_lea.sflag [#allocation5], 1
    %3181 = vsyncpa %s3180, 1
    %3182 = vsyncpa [#allocation8], 1
    %s3183 = scalar_lea.sflag [#allocation8], 1
    %3184 = vsyncpa %s3183, 1
    %3185 = vsyncpa [#allocation11], 1
    %3186 = vsyncpa [#allocation14], 1
    %3187 = vsyncpa [#allocation6], 1
    %s3188 = scalar_lea.sflag [#allocation6], 1
    %3189 = vsyncpa %s3188, 1

</llo_original>
